<compile_context>
chip_gen: v6e
topology: v6e:2x2x1
jax: 0.10.0
libtpu: 0.0.40
codegen_flags: <defaults>
</compile_context>

<pallas_src>
import functools

import jax
import jax.numpy as jnp
from jax.experimental import pallas as pl
from jax.experimental.pallas import tpu as pltpu

EPS = 1e-5


def _bn_scale_shift(x, gamma, beta):
    """Train-mode BatchNorm1d over the batch axis, folded to y = x*scale + shift.

    Single-pass stats (var = E[x^2] - E[x]^2), clamped at zero against
    catastrophic cancellation.  gamma / beta are (1, N) rows.
    """
    mu = jnp.mean(x, axis=0, keepdims=True)
    ex2 = jnp.mean(x * x, axis=0, keepdims=True)
    var = jnp.maximum(ex2 - mu * mu, 0.0)
    scale = gamma * jax.lax.rsqrt(var + EPS)
    shift = beta - mu * scale
    return x * scale + shift


def _stage(x, t_ref, nb, inter, w1_vmem, w2_vmem, bn1_ref, bn2_ref, st, wait_w2):
    """One AF_3 stage: sum_j sigmoid(AFM_j(x)) * t[j].

    x:        (B, dim) f32
    w1_vmem:  (dim, nb*inter) bf16 VMEM scratch; branch j = columns [j*inter:(j+1)*inter]
    w2_vmem:  (nb, inter, dim) bf16 VMEM scratch (per-branch second-conv weights)
    bn1_ref:  (4, nb*inter) f32 — rows [g1_a, be1_a, g1_b, be1_b]
    bn2_ref:  (4*nb, dim)   f32 — rows [g2_a(0..nb-1), be2_a(..), g2_b(..), be2_b(..)]
    st:       stage index (0 or 1), Python int
    wait_w2:  callable blocking until w2_vmem is resident (called after GEMM1+BN+ReLU)
    """
    # Conv1d biases intentionally absent: exact no-op under train-mode BN.
    h = jnp.dot(x.astype(jnp.bfloat16), w1_vmem[...],
                preferred_element_type=jnp.float32)                  # (B, nb*inter)
    h = _bn_scale_shift(h,
                        bn1_ref[2 * st:2 * st + 1, :],
                        bn1_ref[2 * st + 1:2 * st + 2, :])
    h = jnp.maximum(h, 0.0).astype(jnp.bfloat16)                     # ReLU, bf16 for MXU

    # Second-conv weights are first needed here: their DMA was hidden behind
    # the fused GEMM1 + BN + ReLU above.
    wait_w2()

    g2_base = 2 * st * nb
    b2_base = (2 * st + 1) * nb
    acc = jnp.zeros_like(x)
    for j in range(nb):
        hj = h[:, j * inter:(j + 1) * inter]                         # lane-aligned slice
        y = jnp.dot(hj, w2_vmem[j], preferred_element_type=jnp.float32)   # (B, dim)
        y = _bn_scale_shift(y,
                            bn2_ref[g2_base + j:g2_base + j + 1, :],
                            bn2_ref[b2_base + j:b2_base + j + 1, :])
        acc = acc + jax.nn.sigmoid(y) * t_ref[j]
    return acc


def af3_kernel(t_ref, bn1_ref, bn2_ref,
               w1a_hbm, w2a_hbm, w1b_hbm, w2b_hbm,
               out_ref,
               w1a_vmem, w2a_vmem, w1b_vmem, w2b_vmem, dma_sem,
               *, nb, inter):
    # Kick off all big-weight DMAs (HBM -> VMEM scratch) immediately so everything
    # downstream overlaps whatever compute is already possible.
    cp_w1a = pltpu.make_async_copy(w1a_hbm, w1a_vmem, dma_sem.at[0])
    cp_w2a = pltpu.make_async_copy(w2a_hbm, w2a_vmem, dma_sem.at[1])
    cp_w1b = pltpu.make_async_copy(w1b_hbm, w1b_vmem, dma_sem.at[2])
    cp_w2b = pltpu.make_async_copy(w2b_hbm, w2b_vmem, dma_sem.at[3])
    cp_w1a.start()
    cp_w2a.start()
    cp_w1b.start()
    cp_w2b.start()

    # s = t.transpose(1,2).sum(-1): with t laid out (nb, B, dim) this is plain VPU
    # adds and needs only t, so it runs while the weight DMAs are in flight.
    s = t_ref[0]
    for j in range(1, nb):
        s = s + t_ref[j]

    # Stage 1: m = sum_j sigmoid(AFM_j(s)) * t[j]
    cp_w1a.wait()
    m = _stage(s, t_ref, nb, inter, w1a_vmem, w2a_vmem,
               bn1_ref, bn2_ref, st=0, wait_w2=cp_w2a.wait)

    # Stage 2: r = sum_i sigmoid(AFM2_i(m)) * t[i]
    cp_w1b.wait()
    r = _stage(m, t_ref, nb, inter, w1b_vmem, w2b_vmem,
               bn1_ref, bn2_ref, st=1, wait_w2=cp_w2b.wait)

    out_ref[...] = r


def _fuse_w1(w1t, nb, dim, inter):
    # (nb, dim, inter) -> (dim, nb*inter); columns [j*inter:(j+1)*inter] = branch j.
    return jnp.transpose(w1t, (1, 0, 2)).reshape(dim, nb * inter)


def af3_forward(t, pml, pml2):
    """t: (B, nb, dim) float32. pml / pml2: stacked params of self.ml / self.ml2."""
    B, nb, dim = t.shape
    inter = pml["w1t"].shape[-1]
    # Lane-alignment guard: mis-aligned inter/dim would make the per-branch
    # h-slices and w2 tiles cross (8,128) boundaries and force hidden VMEM copies.
    assert dim % 128 == 0, f"dim={dim} must be a multiple of 128"
    assert inter % 128 == 0, f"inter={inter} (= dim // r) must be a multiple of 128"

    # Big bf16 weights: fused column-wise W1 per stage + stacked per-branch W2.
    w1a = _fuse_w1(pml["w1t"], nb, dim, inter)
    w1b = _fuse_w1(pml2["w1t"], nb, dim, inter)
    w2a = pml["w2t"]    # (nb, inter, dim) bf16
    w2b = pml2["w2t"]   # (nb, inter, dim) bf16

    # All small BN affine params packed into two contiguous f32 slabs
    # (two prologue DMAs instead of ~10).  Conv biases are exact no-ops under
    # train-mode BN and are not shipped at all.
    bn1 = jnp.concatenate([pml["g1"].reshape(1, nb * inter),
                           pml["be1"].reshape(1, nb * inter),
                           pml2["g1"].reshape(1, nb * inter),
                           pml2["be1"].reshape(1, nb * inter)], axis=0)   # (4, nb*inter)
    bn2 = jnp.concatenate([pml["g2"], pml["be2"],
                           pml2["g2"], pml2["be2"]], axis=0)              # (4*nb, dim)

    # (nb, B, dim): channel on the leading axis -> free per-channel views in-kernel.
    t_p = jnp.transpose(t, (1, 0, 2))

    vmem = pl.BlockSpec(memory_space=pltpu.MemorySpace.VMEM)
    hbm = pl.BlockSpec(memory_space=pl.ANY)   # big weights: manual DMA in the kernel

    return pl.pallas_call(
        functools.partial(af3_kernel, nb=nb, inter=inter),
        out_shape=jax.ShapeDtypeStruct((B, dim), jnp.float32),
        in_specs=[vmem, vmem, vmem, hbm, hbm, hbm, hbm],
        out_specs=vmem,
        scratch_shapes=[
            pltpu.VMEM((dim, nb * inter), jnp.bfloat16),   # stage-1 fused W1
            pltpu.VMEM((nb, inter, dim), jnp.bfloat16),    # stage-1 per-branch W2
            pltpu.VMEM((dim, nb * inter), jnp.bfloat16),   # stage-2 fused W1
            pltpu.VMEM((nb, inter, dim), jnp.bfloat16),    # stage-2 per-branch W2
            pltpu.SemaphoreType.DMA((4,)),
        ],
    )(t_p, bn1, bn2, w1a, w2a, w1b, w2b)


def init_afm_stack(key, nb, dim, inter):
    """Deterministic init of `nb` AFM(channel=1) branches (PyTorch-style bounds).

    Conv1d(k=1) weights are stored in bf16 (streamed to the kernel as-is).
    Conv biases are generated for reference-fidelity only — they are exact
    no-ops under train-mode BatchNorm and are NOT consumed by the kernel.
    """
    k1, k2, k3, k4 = jax.random.split(key, 4)
    bnd1 = 1.0 / (dim ** 0.5)
    bnd2 = 1.0 / (inter ** 0.5)
    w1 = jax.random.uniform(k1, (nb, inter, dim), jnp.float32, -bnd1, bnd1)   # Conv1d(dim->inter)
    b1 = jax.random.uniform(k2, (nb, inter), jnp.float32, -bnd1, bnd1)
    w2 = jax.random.uniform(k3, (nb, dim, inter), jnp.float32, -bnd2, bnd2)   # Conv1d(inter->dim)
    b2 = jax.random.uniform(k4, (nb, dim), jnp.float32, -bnd2, bnd2)
    return {
        "w1t": jnp.transpose(w1, (0, 2, 1)).astype(jnp.bfloat16),   # (nb, dim, inter)
        "b1": b1,                                                   # reference-only
        "w2t": jnp.transpose(w2, (0, 2, 1)).astype(jnp.bfloat16),   # (nb, inter, dim)
        "b2": b2,                                                   # reference-only
        "g1": jnp.ones((nb, inter), jnp.float32),
        "be1": jnp.zeros((nb, inter), jnp.float32),
        "g2": jnp.ones((nb, dim), jnp.float32),
        "be2": jnp.zeros((nb, dim), jnp.float32),
    }


def _bn_ref(x, gamma, beta):
    mu = jnp.mean(x, axis=0, keepdims=True)
    var = jnp.maximum(jnp.mean(x * x, axis=0, keepdims=True) - mu * mu, 0.0)
    return gamma * (x - mu) * jax.lax.rsqrt(var + EPS) + beta


def af3_reference(t, pml, pml2):
    """Pure-JAX reference.  Keeps the conv biases (the kernel drops them as exact
    no-ops under train-mode BN) and the same bf16-weight / f32-accumulate dots,
    so the allclose check also validates the bias-elimination claim."""
    B, nb, dim = t.shape

    def branch(x, p, j):
        h = jnp.dot(x.astype(jnp.bfloat16), p["w1t"][j],
                    preferred_element_type=jnp.float32) + p["b1"][j][None, :]
        h = _bn_ref(h, p["g1"][j][None, :], p["be1"][j][None, :])
        h = jnp.maximum(h, 0.0)
        y = jnp.dot(h.astype(jnp.bfloat16), p["w2t"][j],
                    preferred_element_type=jnp.float32) + p["b2"][j][None, :]
        y = _bn_ref(y, p["g2"][j][None, :], p["be2"][j][None, :])
        return jax.nn.sigmoid(y)

    s = t.sum(axis=1)
    m = sum(branch(s, pml, j) * t[:, j, :] for j in range(nb))
    r = sum(branch(m, pml2, i) * t[:, i, :] for i in range(nb))
    return r


if __name__ == "__main__":
    B, NB, DIM, R = 4, 3, 512, 4          # module defaults: dim=512, r=4 -> inter=128
    INTER = DIM // R

    key = jax.random.PRNGKey(0)
    kt, kml, kml2 = jax.random.split(key, 3)
    t = jax.random.normal(kt, (B, NB, DIM), jnp.float32)   # PyTorch layout (batch, channel, dim)
    pml = init_afm_stack(kml, NB, DIM, INTER)
    pml2 = init_afm_stack(kml2, NB, DIM, INTER)

    out = af3_forward(t, pml, pml2)
    out = jax.block_until_ready(out)

    ref = af3_reference(t, pml, pml2)
    assert out.shape == (B, DIM)
    assert jnp.allclose(out, ref, atol=1e-2, rtol=1e-2), "Pallas kernel mismatch vs JAX reference"

    print("KERNEL_OK")
</pallas_src>

<mosaic_0001>
module attributes {stable_mosaic.version = 11 : i64} {
  func.func @af3_kernel(%arg0: memref<3x4x512xf32, #tpu.memory_space<vmem>>, %arg1: memref<4x384xf32, #tpu.memory_space<vmem>>, %arg2: memref<12x512xf32, #tpu.memory_space<vmem>>, %arg3: memref<512x384xbf16, #tpu.memory_space<any>>, %arg4: memref<3x128x512xbf16, #tpu.memory_space<any>>, %arg5: memref<512x384xbf16, #tpu.memory_space<any>>, %arg6: memref<3x128x512xbf16, #tpu.memory_space<any>>, %arg7: memref<4x512xf32, #tpu.memory_space<vmem>>, %arg8: memref<512x384xbf16, #tpu.memory_space<vmem>>, %arg9: memref<3x128x512xbf16, #tpu.memory_space<vmem>>, %arg10: memref<512x384xbf16, #tpu.memory_space<vmem>>, %arg11: memref<3x128x512xbf16, #tpu.memory_space<vmem>>, %arg12: memref<4x!tpu.dma_semaphore, #tpu.memory_space<semaphore_mem>>) attributes {dimension_semantics = [], scalar_prefetch = 0 : i64, scratch_operands = 5 : i64, tpu.core_type = #tpu.core_type<tc>} {
    %c0_i32 = arith.constant 0 : i32
    %0 = tpu.memref_slice %arg12[%c0_i32] : memref<4x!tpu.dma_semaphore, #tpu.memory_space<semaphore_mem>> -> memref<1x!tpu.dma_semaphore, #tpu.memory_space<semaphore_mem>>
    %1 = tpu.memref_squeeze %0 : memref<1x!tpu.dma_semaphore, #tpu.memory_space<semaphore_mem>> -> memref<!tpu.dma_semaphore, #tpu.memory_space<semaphore_mem>>
    tpu.enqueue_dma source(%arg3 : memref<512x384xbf16, #tpu.memory_space<any>>) target(%arg8 : memref<512x384xbf16, #tpu.memory_space<vmem>>) target_semaphore(%1 : memref<!tpu.dma_semaphore, #tpu.memory_space<semaphore_mem>>)
    %c1_i32 = arith.constant 1 : i32
    %2 = tpu.memref_slice %arg12[%c1_i32] : memref<4x!tpu.dma_semaphore, #tpu.memory_space<semaphore_mem>> -> memref<1x!tpu.dma_semaphore, #tpu.memory_space<semaphore_mem>>
    %3 = tpu.memref_squeeze %2 : memref<1x!tpu.dma_semaphore, #tpu.memory_space<semaphore_mem>> -> memref<!tpu.dma_semaphore, #tpu.memory_space<semaphore_mem>>
    tpu.enqueue_dma source(%arg4 : memref<3x128x512xbf16, #tpu.memory_space<any>>) target(%arg9 : memref<3x128x512xbf16, #tpu.memory_space<vmem>>) target_semaphore(%3 : memref<!tpu.dma_semaphore, #tpu.memory_space<semaphore_mem>>)
    %c2_i32 = arith.constant 2 : i32
    %4 = tpu.memref_slice %arg12[%c2_i32] : memref<4x!tpu.dma_semaphore, #tpu.memory_space<semaphore_mem>> -> memref<1x!tpu.dma_semaphore, #tpu.memory_space<semaphore_mem>>
    %5 = tpu.memref_squeeze %4 : memref<1x!tpu.dma_semaphore, #tpu.memory_space<semaphore_mem>> -> memref<!tpu.dma_semaphore, #tpu.memory_space<semaphore_mem>>
    tpu.enqueue_dma source(%arg5 : memref<512x384xbf16, #tpu.memory_space<any>>) target(%arg10 : memref<512x384xbf16, #tpu.memory_space<vmem>>) target_semaphore(%5 : memref<!tpu.dma_semaphore, #tpu.memory_space<semaphore_mem>>)
    %c3_i32 = arith.constant 3 : i32
    %6 = tpu.memref_slice %arg12[%c3_i32] : memref<4x!tpu.dma_semaphore, #tpu.memory_space<semaphore_mem>> -> memref<1x!tpu.dma_semaphore, #tpu.memory_space<semaphore_mem>>
    %7 = tpu.memref_squeeze %6 : memref<1x!tpu.dma_semaphore, #tpu.memory_space<semaphore_mem>> -> memref<!tpu.dma_semaphore, #tpu.memory_space<semaphore_mem>>
    tpu.enqueue_dma source(%arg6 : memref<3x128x512xbf16, #tpu.memory_space<any>>) target(%arg11 : memref<3x128x512xbf16, #tpu.memory_space<vmem>>) target_semaphore(%7 : memref<!tpu.dma_semaphore, #tpu.memory_space<semaphore_mem>>)
    %c0 = arith.constant 0 : index
    %c0_0 = arith.constant 0 : index
    %c0_1 = arith.constant 0 : index
    %8 = vector.load %arg0[%c0, %c0_0, %c0_1] : memref<3x4x512xf32, #tpu.memory_space<vmem>>, vector<1x4x512xf32>
    %9 = vector.shape_cast %8 : vector<1x4x512xf32> to vector<4x512xf32>
    %c1 = arith.constant 1 : index
    %c0_2 = arith.constant 0 : index
    %c0_3 = arith.constant 0 : index
    %10 = vector.load %arg0[%c1, %c0_2, %c0_3] : memref<3x4x512xf32, #tpu.memory_space<vmem>>, vector<1x4x512xf32>
    %11 = vector.shape_cast %10 : vector<1x4x512xf32> to vector<4x512xf32>
    %12 = arith.addf %9, %11 : vector<4x512xf32>
    %c2 = arith.constant 2 : index
    %c0_4 = arith.constant 0 : index
    %c0_5 = arith.constant 0 : index
    %13 = vector.load %arg0[%c2, %c0_4, %c0_5] : memref<3x4x512xf32, #tpu.memory_space<vmem>>, vector<1x4x512xf32>
    %14 = vector.shape_cast %13 : vector<1x4x512xf32> to vector<4x512xf32>
    %15 = arith.addf %12, %14 : vector<4x512xf32>
    %c0_i32_6 = arith.constant 0 : i32
    %16 = tpu.memref_slice %arg12[%c0_i32_6] : memref<4x!tpu.dma_semaphore, #tpu.memory_space<semaphore_mem>> -> memref<1x!tpu.dma_semaphore, #tpu.memory_space<semaphore_mem>>
    %17 = tpu.memref_squeeze %16 : memref<1x!tpu.dma_semaphore, #tpu.memory_space<semaphore_mem>> -> memref<!tpu.dma_semaphore, #tpu.memory_space<semaphore_mem>>
    tpu.wait_dma2 semaphore(%17 : memref<!tpu.dma_semaphore, #tpu.memory_space<semaphore_mem>>) src(%arg3 : memref<512x384xbf16, #tpu.memory_space<any>>) dst(%arg8 : memref<512x384xbf16, #tpu.memory_space<vmem>>)
    %18 = arith.truncf %15 : vector<4x512xf32> to vector<4x512xbf16>
    %c0_7 = arith.constant 0 : index
    %c0_8 = arith.constant 0 : index
    %19 = vector.load %arg8[%c0_7, %c0_8] : memref<512x384xbf16, #tpu.memory_space<vmem>>, vector<512x384xbf16>
    %cst = arith.constant dense<0.000000e+00> : vector<4x384xf32>
    %20 = tpu.matmul %18, %19, %cst {dimension_numbers = #tpu.dot_dimension_numbers<[1], [0], [0], [1], [0, 0, 1, 1], [], []>} : vector<4x512xbf16>, vector<512x384xbf16>, vector<4x384xf32> -> vector<4x384xf32>
    %c0_9 = arith.constant 0 : index
    %c0_10 = arith.constant 0 : index
    %21 = vector.load %arg1[%c0_9, %c0_10] : memref<4x384xf32, #tpu.memory_space<vmem>>, vector<1x384xf32>
    %c1_11 = arith.constant 1 : index
    %c0_12 = arith.constant 0 : index
    %22 = vector.load %arg1[%c1_11, %c0_12] : memref<4x384xf32, #tpu.memory_space<vmem>>, vector<1x384xf32>
    %cst_13 = arith.constant dense<0.000000e+00> : vector<384xf32>
    %23 = vector.multi_reduction <add>, %20, %cst_13 [0] : vector<4x384xf32> to vector<384xf32>
    %24 = vector.shape_cast %23 : vector<384xf32> to vector<1x384xf32>
    %cst_14 = arith.constant 4.000000e+00 : f32
    %25 = vector.broadcast %cst_14 : f32 to vector<1x384xf32>
    %26 = arith.divf %24, %25 : vector<1x384xf32>
    %27 = arith.mulf %20, %20 : vector<4x384xf32>
    %cst_15 = arith.constant dense<0.000000e+00> : vector<384xf32>
    %28 = vector.multi_reduction <add>, %27, %cst_15 [0] : vector<4x384xf32> to vector<384xf32>
    %29 = vector.shape_cast %28 : vector<384xf32> to vector<1x384xf32>
    %cst_16 = arith.constant 4.000000e+00 : f32
    %30 = vector.broadcast %cst_16 : f32 to vector<1x384xf32>
    %31 = arith.divf %29, %30 : vector<1x384xf32>
    %32 = arith.mulf %26, %26 : vector<1x384xf32>
    %33 = arith.subf %31, %32 : vector<1x384xf32>
    %cst_17 = arith.constant 0.000000e+00 : f32
    %34 = vector.broadcast %cst_17 : f32 to vector<1x384xf32>
    %35 = arith.maximumf %33, %34 : vector<1x384xf32>
    %cst_18 = arith.constant 9.99999974E-6 : f32
    %36 = vector.broadcast %cst_18 : f32 to vector<1x384xf32>
    %37 = arith.addf %35, %36 : vector<1x384xf32>
    %38 = math.rsqrt %37 : vector<1x384xf32>
    %39 = arith.mulf %21, %38 : vector<1x384xf32>
    %40 = arith.mulf %26, %39 : vector<1x384xf32>
    %41 = arith.subf %22, %40 : vector<1x384xf32>
    %42 = vector.broadcast %39 : vector<1x384xf32> to vector<4x384xf32>
    %43 = arith.mulf %20, %42 : vector<4x384xf32>
    %44 = vector.broadcast %41 : vector<1x384xf32> to vector<4x384xf32>
    %45 = arith.addf %43, %44 : vector<4x384xf32>
    %cst_19 = arith.constant 0.000000e+00 : f32
    %46 = vector.broadcast %cst_19 : f32 to vector<4x384xf32>
    %47 = arith.maximumf %45, %46 : vector<4x384xf32>
    %48 = arith.truncf %47 : vector<4x384xf32> to vector<4x384xbf16>
    %c1_i32_20 = arith.constant 1 : i32
    %49 = tpu.memref_slice %arg12[%c1_i32_20] : memref<4x!tpu.dma_semaphore, #tpu.memory_space<semaphore_mem>> -> memref<1x!tpu.dma_semaphore, #tpu.memory_space<semaphore_mem>>
    %50 = tpu.memref_squeeze %49 : memref<1x!tpu.dma_semaphore, #tpu.memory_space<semaphore_mem>> -> memref<!tpu.dma_semaphore, #tpu.memory_space<semaphore_mem>>
    tpu.wait_dma2 semaphore(%50 : memref<!tpu.dma_semaphore, #tpu.memory_space<semaphore_mem>>) src(%arg4 : memref<3x128x512xbf16, #tpu.memory_space<any>>) dst(%arg9 : memref<3x128x512xbf16, #tpu.memory_space<vmem>>)
    %cst_21 = arith.constant 0.000000e+00 : f32
    %51 = vector.broadcast %cst_21 : f32 to vector<4x512xf32>
    %52 = vector.extract_strided_slice %48 {offsets = [0, 0], sizes = [4, 128], strides = [1, 1]} : vector<4x384xbf16> to vector<4x128xbf16>
    %c0_22 = arith.constant 0 : index
    %c0_23 = arith.constant 0 : index
    %c0_24 = arith.constant 0 : index
    %53 = vector.load %arg9[%c0_22, %c0_23, %c0_24] : memref<3x128x512xbf16, #tpu.memory_space<vmem>>, vector<1x128x512xbf16>
    %54 = vector.shape_cast %53 : vector<1x128x512xbf16> to vector<128x512xbf16>
    %cst_25 = arith.constant dense<0.000000e+00> : vector<4x512xf32>
    %55 = tpu.matmul %52, %54, %cst_25 {dimension_numbers = #tpu.dot_dimension_numbers<[1], [0], [0], [1], [0, 0, 1, 1], [], []>} : vector<4x128xbf16>, vector<128x512xbf16>, vector<4x512xf32> -> vector<4x512xf32>
    %c0_26 = arith.constant 0 : index
    %c0_27 = arith.constant 0 : index
    %56 = vector.load %arg2[%c0_26, %c0_27] : memref<12x512xf32, #tpu.memory_space<vmem>>, vector<1x512xf32>
    %c3 = arith.constant 3 : index
    %c0_28 = arith.constant 0 : index
    %57 = vector.load %arg2[%c3, %c0_28] : memref<12x512xf32, #tpu.memory_space<vmem>>, vector<1x512xf32>
    %cst_29 = arith.constant dense<0.000000e+00> : vector<512xf32>
    %58 = vector.multi_reduction <add>, %55, %cst_29 [0] : vector<4x512xf32> to vector<512xf32>
    %59 = vector.shape_cast %58 : vector<512xf32> to vector<1x512xf32>
    %cst_30 = arith.constant 4.000000e+00 : f32
    %60 = vector.broadcast %cst_30 : f32 to vector<1x512xf32>
    %61 = arith.divf %59, %60 : vector<1x512xf32>
    %62 = arith.mulf %55, %55 : vector<4x512xf32>
    %cst_31 = arith.constant dense<0.000000e+00> : vector<512xf32>
    %63 = vector.multi_reduction <add>, %62, %cst_31 [0] : vector<4x512xf32> to vector<512xf32>
    %64 = vector.shape_cast %63 : vector<512xf32> to vector<1x512xf32>
    %cst_32 = arith.constant 4.000000e+00 : f32
    %65 = vector.broadcast %cst_32 : f32 to vector<1x512xf32>
    %66 = arith.divf %64, %65 : vector<1x512xf32>
    %67 = arith.mulf %61, %61 : vector<1x512xf32>
    %68 = arith.subf %66, %67 : vector<1x512xf32>
    %cst_33 = arith.constant 0.000000e+00 : f32
    %69 = vector.broadcast %cst_33 : f32 to vector<1x512xf32>
    %70 = arith.maximumf %68, %69 : vector<1x512xf32>
    %cst_34 = arith.constant 9.99999974E-6 : f32
    %71 = vector.broadcast %cst_34 : f32 to vector<1x512xf32>
    %72 = arith.addf %70, %71 : vector<1x512xf32>
    %73 = math.rsqrt %72 : vector<1x512xf32>
    %74 = arith.mulf %56, %73 : vector<1x512xf32>
    %75 = arith.mulf %61, %74 : vector<1x512xf32>
    %76 = arith.subf %57, %75 : vector<1x512xf32>
    %77 = vector.broadcast %74 : vector<1x512xf32> to vector<4x512xf32>
    %78 = arith.mulf %55, %77 : vector<4x512xf32>
    %79 = vector.broadcast %76 : vector<1x512xf32> to vector<4x512xf32>
    %80 = arith.addf %78, %79 : vector<4x512xf32>
    %81 = arith.negf %80 : vector<4x512xf32>
    %82 = math.exp %81 : vector<4x512xf32>
    %cst_35 = arith.constant 1.000000e+00 : f32
    %83 = vector.broadcast %cst_35 : f32 to vector<4x512xf32>
    %84 = arith.addf %83, %82 : vector<4x512xf32>
    %85 = arith.divf %83, %84 : vector<4x512xf32>
    %c0_36 = arith.constant 0 : index
    %c0_37 = arith.constant 0 : index
    %c0_38 = arith.constant 0 : index
    %86 = vector.load %arg0[%c0_36, %c0_37, %c0_38] : memref<3x4x512xf32, #tpu.memory_space<vmem>>, vector<1x4x512xf32>
    %87 = vector.shape_cast %86 : vector<1x4x512xf32> to vector<4x512xf32>
    %88 = arith.mulf %85, %87 : vector<4x512xf32>
    %89 = arith.addf %51, %88 : vector<4x512xf32>
    %90 = vector.extract_strided_slice %48 {offsets = [0, 128], sizes = [4, 128], strides = [1, 1]} : vector<4x384xbf16> to vector<4x128xbf16>
    %c1_39 = arith.constant 1 : index
    %c0_40 = arith.constant 0 : index
    %c0_41 = arith.constant 0 : index
    %91 = vector.load %arg9[%c1_39, %c0_40, %c0_41] : memref<3x128x512xbf16, #tpu.memory_space<vmem>>, vector<1x128x512xbf16>
    %92 = vector.shape_cast %91 : vector<1x128x512xbf16> to vector<128x512xbf16>
    %cst_42 = arith.constant dense<0.000000e+00> : vector<4x512xf32>
    %93 = tpu.matmul %90, %92, %cst_42 {dimension_numbers = #tpu.dot_dimension_numbers<[1], [0], [0], [1], [0, 0, 1, 1], [], []>} : vector<4x128xbf16>, vector<128x512xbf16>, vector<4x512xf32> -> vector<4x512xf32>
    %c1_43 = arith.constant 1 : index
    %c0_44 = arith.constant 0 : index
    %94 = vector.load %arg2[%c1_43, %c0_44] : memref<12x512xf32, #tpu.memory_space<vmem>>, vector<1x512xf32>
    %c4 = arith.constant 4 : index
    %c0_45 = arith.constant 0 : index
    %95 = vector.load %arg2[%c4, %c0_45] : memref<12x512xf32, #tpu.memory_space<vmem>>, vector<1x512xf32>
    %cst_46 = arith.constant dense<0.000000e+00> : vector<512xf32>
    %96 = vector.multi_reduction <add>, %93, %cst_46 [0] : vector<4x512xf32> to vector<512xf32>
    %97 = vector.shape_cast %96 : vector<512xf32> to vector<1x512xf32>
    %cst_47 = arith.constant 4.000000e+00 : f32
    %98 = vector.broadcast %cst_47 : f32 to vector<1x512xf32>
    %99 = arith.divf %97, %98 : vector<1x512xf32>
    %100 = arith.mulf %93, %93 : vector<4x512xf32>
    %cst_48 = arith.constant dense<0.000000e+00> : vector<512xf32>
    %101 = vector.multi_reduction <add>, %100, %cst_48 [0] : vector<4x512xf32> to vector<512xf32>
    %102 = vector.shape_cast %101 : vector<512xf32> to vector<1x512xf32>
    %cst_49 = arith.constant 4.000000e+00 : f32
    %103 = vector.broadcast %cst_49 : f32 to vector<1x512xf32>
    %104 = arith.divf %102, %103 : vector<1x512xf32>
    %105 = arith.mulf %99, %99 : vector<1x512xf32>
    %106 = arith.subf %104, %105 : vector<1x512xf32>
    %cst_50 = arith.constant 0.000000e+00 : f32
    %107 = vector.broadcast %cst_50 : f32 to vector<1x512xf32>
    %108 = arith.maximumf %106, %107 : vector<1x512xf32>
    %cst_51 = arith.constant 9.99999974E-6 : f32
    %109 = vector.broadcast %cst_51 : f32 to vector<1x512xf32>
    %110 = arith.addf %108, %109 : vector<1x512xf32>
    %111 = math.rsqrt %110 : vector<1x512xf32>
    %112 = arith.mulf %94, %111 : vector<1x512xf32>
    %113 = arith.mulf %99, %112 : vector<1x512xf32>
    %114 = arith.subf %95, %113 : vector<1x512xf32>
    %115 = vector.broadcast %112 : vector<1x512xf32> to vector<4x512xf32>
    %116 = arith.mulf %93, %115 : vector<4x512xf32>
    %117 = vector.broadcast %114 : vector<1x512xf32> to vector<4x512xf32>
    %118 = arith.addf %116, %117 : vector<4x512xf32>
    %119 = arith.negf %118 : vector<4x512xf32>
    %120 = math.exp %119 : vector<4x512xf32>
    %cst_52 = arith.constant 1.000000e+00 : f32
    %121 = vector.broadcast %cst_52 : f32 to vector<4x512xf32>
    %122 = arith.addf %121, %120 : vector<4x512xf32>
    %123 = arith.divf %121, %122 : vector<4x512xf32>
    %c1_53 = arith.constant 1 : index
    %c0_54 = arith.constant 0 : index
    %c0_55 = arith.constant 0 : index
    %124 = vector.load %arg0[%c1_53, %c0_54, %c0_55] : memref<3x4x512xf32, #tpu.memory_space<vmem>>, vector<1x4x512xf32>
    %125 = vector.shape_cast %124 : vector<1x4x512xf32> to vector<4x512xf32>
    %126 = arith.mulf %123, %125 : vector<4x512xf32>
    %127 = arith.addf %89, %126 : vector<4x512xf32>
    %128 = vector.extract_strided_slice %48 {offsets = [0, 256], sizes = [4, 128], strides = [1, 1]} : vector<4x384xbf16> to vector<4x128xbf16>
    %c2_56 = arith.constant 2 : index
    %c0_57 = arith.constant 0 : index
    %c0_58 = arith.constant 0 : index
    %129 = vector.load %arg9[%c2_56, %c0_57, %c0_58] : memref<3x128x512xbf16, #tpu.memory_space<vmem>>, vector<1x128x512xbf16>
    %130 = vector.shape_cast %129 : vector<1x128x512xbf16> to vector<128x512xbf16>
    %cst_59 = arith.constant dense<0.000000e+00> : vector<4x512xf32>
    %131 = tpu.matmul %128, %130, %cst_59 {dimension_numbers = #tpu.dot_dimension_numbers<[1], [0], [0], [1], [0, 0, 1, 1], [], []>} : vector<4x128xbf16>, vector<128x512xbf16>, vector<4x512xf32> -> vector<4x512xf32>
    %c2_60 = arith.constant 2 : index
    %c0_61 = arith.constant 0 : index
    %132 = vector.load %arg2[%c2_60, %c0_61] : memref<12x512xf32, #tpu.memory_space<vmem>>, vector<1x512xf32>
    %c5 = arith.constant 5 : index
    %c0_62 = arith.constant 0 : index
    %133 = vector.load %arg2[%c5, %c0_62] : memref<12x512xf32, #tpu.memory_space<vmem>>, vector<1x512xf32>
    %cst_63 = arith.constant dense<0.000000e+00> : vector<512xf32>
    %134 = vector.multi_reduction <add>, %131, %cst_63 [0] : vector<4x512xf32> to vector<512xf32>
    %135 = vector.shape_cast %134 : vector<512xf32> to vector<1x512xf32>
    %cst_64 = arith.constant 4.000000e+00 : f32
    %136 = vector.broadcast %cst_64 : f32 to vector<1x512xf32>
    %137 = arith.divf %135, %136 : vector<1x512xf32>
    %138 = arith.mulf %131, %131 : vector<4x512xf32>
    %cst_65 = arith.constant dense<0.000000e+00> : vector<512xf32>
    %139 = vector.multi_reduction <add>, %138, %cst_65 [0] : vector<4x512xf32> to vector<512xf32>
    %140 = vector.shape_cast %139 : vector<512xf32> to vector<1x512xf32>
    %cst_66 = arith.constant 4.000000e+00 : f32
    %141 = vector.broadcast %cst_66 : f32 to vector<1x512xf32>
    %142 = arith.divf %140, %141 : vector<1x512xf32>
    %143 = arith.mulf %137, %137 : vector<1x512xf32>
    %144 = arith.subf %142, %143 : vector<1x512xf32>
    %cst_67 = arith.constant 0.000000e+00 : f32
    %145 = vector.broadcast %cst_67 : f32 to vector<1x512xf32>
    %146 = arith.maximumf %144, %145 : vector<1x512xf32>
    %cst_68 = arith.constant 9.99999974E-6 : f32
    %147 = vector.broadcast %cst_68 : f32 to vector<1x512xf32>
    %148 = arith.addf %146, %147 : vector<1x512xf32>
    %149 = math.rsqrt %148 : vector<1x512xf32>
    %150 = arith.mulf %132, %149 : vector<1x512xf32>
    %151 = arith.mulf %137, %150 : vector<1x512xf32>
    %152 = arith.subf %133, %151 : vector<1x512xf32>
    %153 = vector.broadcast %150 : vector<1x512xf32> to vector<4x512xf32>
    %154 = arith.mulf %131, %153 : vector<4x512xf32>
    %155 = vector.broadcast %152 : vector<1x512xf32> to vector<4x512xf32>
    %156 = arith.addf %154, %155 : vector<4x512xf32>
    %157 = arith.negf %156 : vector<4x512xf32>
    %158 = math.exp %157 : vector<4x512xf32>
    %cst_69 = arith.constant 1.000000e+00 : f32
    %159 = vector.broadcast %cst_69 : f32 to vector<4x512xf32>
    %160 = arith.addf %159, %158 : vector<4x512xf32>
    %161 = arith.divf %159, %160 : vector<4x512xf32>
    %c2_70 = arith.constant 2 : index
    %c0_71 = arith.constant 0 : index
    %c0_72 = arith.constant 0 : index
    %162 = vector.load %arg0[%c2_70, %c0_71, %c0_72] : memref<3x4x512xf32, #tpu.memory_space<vmem>>, vector<1x4x512xf32>
    %163 = vector.shape_cast %162 : vector<1x4x512xf32> to vector<4x512xf32>
    %164 = arith.mulf %161, %163 : vector<4x512xf32>
    %165 = arith.addf %127, %164 : vector<4x512xf32>
    %c2_i32_73 = arith.constant 2 : i32
    %166 = tpu.memref_slice %arg12[%c2_i32_73] : memref<4x!tpu.dma_semaphore, #tpu.memory_space<semaphore_mem>> -> memref<1x!tpu.dma_semaphore, #tpu.memory_space<semaphore_mem>>
    %167 = tpu.memref_squeeze %166 : memref<1x!tpu.dma_semaphore, #tpu.memory_space<semaphore_mem>> -> memref<!tpu.dma_semaphore, #tpu.memory_space<semaphore_mem>>
    tpu.wait_dma2 semaphore(%167 : memref<!tpu.dma_semaphore, #tpu.memory_space<semaphore_mem>>) src(%arg5 : memref<512x384xbf16, #tpu.memory_space<any>>) dst(%arg10 : memref<512x384xbf16, #tpu.memory_space<vmem>>)
    %168 = arith.truncf %165 : vector<4x512xf32> to vector<4x512xbf16>
    %c0_74 = arith.constant 0 : index
    %c0_75 = arith.constant 0 : index
    %169 = vector.load %arg10[%c0_74, %c0_75] : memref<512x384xbf16, #tpu.memory_space<vmem>>, vector<512x384xbf16>
    %cst_76 = arith.constant dense<0.000000e+00> : vector<4x384xf32>
    %170 = tpu.matmul %168, %169, %cst_76 {dimension_numbers = #tpu.dot_dimension_numbers<[1], [0], [0], [1], [0, 0, 1, 1], [], []>} : vector<4x512xbf16>, vector<512x384xbf16>, vector<4x384xf32> -> vector<4x384xf32>
    %c2_77 = arith.constant 2 : index
    %c0_78 = arith.constant 0 : index
    %171 = vector.load %arg1[%c2_77, %c0_78] : memref<4x384xf32, #tpu.memory_space<vmem>>, vector<1x384xf32>
    %c3_79 = arith.constant 3 : index
    %c0_80 = arith.constant 0 : index
    %172 = vector.load %arg1[%c3_79, %c0_80] : memref<4x384xf32, #tpu.memory_space<vmem>>, vector<1x384xf32>
    %cst_81 = arith.constant dense<0.000000e+00> : vector<384xf32>
    %173 = vector.multi_reduction <add>, %170, %cst_81 [0] : vector<4x384xf32> to vector<384xf32>
    %174 = vector.shape_cast %173 : vector<384xf32> to vector<1x384xf32>
    %cst_82 = arith.constant 4.000000e+00 : f32
    %175 = vector.broadcast %cst_82 : f32 to vector<1x384xf32>
    %176 = arith.divf %174, %175 : vector<1x384xf32>
    %177 = arith.mulf %170, %170 : vector<4x384xf32>
    %cst_83 = arith.constant dense<0.000000e+00> : vector<384xf32>
    %178 = vector.multi_reduction <add>, %177, %cst_83 [0] : vector<4x384xf32> to vector<384xf32>
    %179 = vector.shape_cast %178 : vector<384xf32> to vector<1x384xf32>
    %cst_84 = arith.constant 4.000000e+00 : f32
    %180 = vector.broadcast %cst_84 : f32 to vector<1x384xf32>
    %181 = arith.divf %179, %180 : vector<1x384xf32>
    %182 = arith.mulf %176, %176 : vector<1x384xf32>
    %183 = arith.subf %181, %182 : vector<1x384xf32>
    %cst_85 = arith.constant 0.000000e+00 : f32
    %184 = vector.broadcast %cst_85 : f32 to vector<1x384xf32>
    %185 = arith.maximumf %183, %184 : vector<1x384xf32>
    %cst_86 = arith.constant 9.99999974E-6 : f32
    %186 = vector.broadcast %cst_86 : f32 to vector<1x384xf32>
    %187 = arith.addf %185, %186 : vector<1x384xf32>
    %188 = math.rsqrt %187 : vector<1x384xf32>
    %189 = arith.mulf %171, %188 : vector<1x384xf32>
    %190 = arith.mulf %176, %189 : vector<1x384xf32>
    %191 = arith.subf %172, %190 : vector<1x384xf32>
    %192 = vector.broadcast %189 : vector<1x384xf32> to vector<4x384xf32>
    %193 = arith.mulf %170, %192 : vector<4x384xf32>
    %194 = vector.broadcast %191 : vector<1x384xf32> to vector<4x384xf32>
    %195 = arith.addf %193, %194 : vector<4x384xf32>
    %cst_87 = arith.constant 0.000000e+00 : f32
    %196 = vector.broadcast %cst_87 : f32 to vector<4x384xf32>
    %197 = arith.maximumf %195, %196 : vector<4x384xf32>
    %198 = arith.truncf %197 : vector<4x384xf32> to vector<4x384xbf16>
    %c3_i32_88 = arith.constant 3 : i32
    %199 = tpu.memref_slice %arg12[%c3_i32_88] : memref<4x!tpu.dma_semaphore, #tpu.memory_space<semaphore_mem>> -> memref<1x!tpu.dma_semaphore, #tpu.memory_space<semaphore_mem>>
    %200 = tpu.memref_squeeze %199 : memref<1x!tpu.dma_semaphore, #tpu.memory_space<semaphore_mem>> -> memref<!tpu.dma_semaphore, #tpu.memory_space<semaphore_mem>>
    tpu.wait_dma2 semaphore(%200 : memref<!tpu.dma_semaphore, #tpu.memory_space<semaphore_mem>>) src(%arg6 : memref<3x128x512xbf16, #tpu.memory_space<any>>) dst(%arg11 : memref<3x128x512xbf16, #tpu.memory_space<vmem>>)
    %cst_89 = arith.constant 0.000000e+00 : f32
    %201 = vector.broadcast %cst_89 : f32 to vector<4x512xf32>
    %202 = vector.extract_strided_slice %198 {offsets = [0, 0], sizes = [4, 128], strides = [1, 1]} : vector<4x384xbf16> to vector<4x128xbf16>
    %c0_90 = arith.constant 0 : index
    %c0_91 = arith.constant 0 : index
    %c0_92 = arith.constant 0 : index
    %203 = vector.load %arg11[%c0_90, %c0_91, %c0_92] : memref<3x128x512xbf16, #tpu.memory_space<vmem>>, vector<1x128x512xbf16>
    %204 = vector.shape_cast %203 : vector<1x128x512xbf16> to vector<128x512xbf16>
    %cst_93 = arith.constant dense<0.000000e+00> : vector<4x512xf32>
    %205 = tpu.matmul %202, %204, %cst_93 {dimension_numbers = #tpu.dot_dimension_numbers<[1], [0], [0], [1], [0, 0, 1, 1], [], []>} : vector<4x128xbf16>, vector<128x512xbf16>, vector<4x512xf32> -> vector<4x512xf32>
    %c6 = arith.constant 6 : index
    %c0_94 = arith.constant 0 : index
    %206 = vector.load %arg2[%c6, %c0_94] : memref<12x512xf32, #tpu.memory_space<vmem>>, vector<1x512xf32>
    %c9 = arith.constant 9 : index
    %c0_95 = arith.constant 0 : index
    %207 = vector.load %arg2[%c9, %c0_95] : memref<12x512xf32, #tpu.memory_space<vmem>>, vector<1x512xf32>
    %cst_96 = arith.constant dense<0.000000e+00> : vector<512xf32>
    %208 = vector.multi_reduction <add>, %205, %cst_96 [0] : vector<4x512xf32> to vector<512xf32>
    %209 = vector.shape_cast %208 : vector<512xf32> to vector<1x512xf32>
    %cst_97 = arith.constant 4.000000e+00 : f32
    %210 = vector.broadcast %cst_97 : f32 to vector<1x512xf32>
    %211 = arith.divf %209, %210 : vector<1x512xf32>
    %212 = arith.mulf %205, %205 : vector<4x512xf32>
    %cst_98 = arith.constant dense<0.000000e+00> : vector<512xf32>
    %213 = vector.multi_reduction <add>, %212, %cst_98 [0] : vector<4x512xf32> to vector<512xf32>
    %214 = vector.shape_cast %213 : vector<512xf32> to vector<1x512xf32>
    %cst_99 = arith.constant 4.000000e+00 : f32
    %215 = vector.broadcast %cst_99 : f32 to vector<1x512xf32>
    %216 = arith.divf %214, %215 : vector<1x512xf32>
    %217 = arith.mulf %211, %211 : vector<1x512xf32>
    %218 = arith.subf %216, %217 : vector<1x512xf32>
    %cst_100 = arith.constant 0.000000e+00 : f32
    %219 = vector.broadcast %cst_100 : f32 to vector<1x512xf32>
    %220 = arith.maximumf %218, %219 : vector<1x512xf32>
    %cst_101 = arith.constant 9.99999974E-6 : f32
    %221 = vector.broadcast %cst_101 : f32 to vector<1x512xf32>
    %222 = arith.addf %220, %221 : vector<1x512xf32>
    %223 = math.rsqrt %222 : vector<1x512xf32>
    %224 = arith.mulf %206, %223 : vector<1x512xf32>
    %225 = arith.mulf %211, %224 : vector<1x512xf32>
    %226 = arith.subf %207, %225 : vector<1x512xf32>
    %227 = vector.broadcast %224 : vector<1x512xf32> to vector<4x512xf32>
    %228 = arith.mulf %205, %227 : vector<4x512xf32>
    %229 = vector.broadcast %226 : vector<1x512xf32> to vector<4x512xf32>
    %230 = arith.addf %228, %229 : vector<4x512xf32>
    %231 = arith.negf %230 : vector<4x512xf32>
    %232 = math.exp %231 : vector<4x512xf32>
    %cst_102 = arith.constant 1.000000e+00 : f32
    %233 = vector.broadcast %cst_102 : f32 to vector<4x512xf32>
    %234 = arith.addf %233, %232 : vector<4x512xf32>
    %235 = arith.divf %233, %234 : vector<4x512xf32>
    %c0_103 = arith.constant 0 : index
    %c0_104 = arith.constant 0 : index
    %c0_105 = arith.constant 0 : index
    %236 = vector.load %arg0[%c0_103, %c0_104, %c0_105] : memref<3x4x512xf32, #tpu.memory_space<vmem>>, vector<1x4x512xf32>
    %237 = vector.shape_cast %236 : vector<1x4x512xf32> to vector<4x512xf32>
    %238 = arith.mulf %235, %237 : vector<4x512xf32>
    %239 = arith.addf %201, %238 : vector<4x512xf32>
    %240 = vector.extract_strided_slice %198 {offsets = [0, 128], sizes = [4, 128], strides = [1, 1]} : vector<4x384xbf16> to vector<4x128xbf16>
    %c1_106 = arith.constant 1 : index
    %c0_107 = arith.constant 0 : index
    %c0_108 = arith.constant 0 : index
    %241 = vector.load %arg11[%c1_106, %c0_107, %c0_108] : memref<3x128x512xbf16, #tpu.memory_space<vmem>>, vector<1x128x512xbf16>
    %242 = vector.shape_cast %241 : vector<1x128x512xbf16> to vector<128x512xbf16>
    %cst_109 = arith.constant dense<0.000000e+00> : vector<4x512xf32>
    %243 = tpu.matmul %240, %242, %cst_109 {dimension_numbers = #tpu.dot_dimension_numbers<[1], [0], [0], [1], [0, 0, 1, 1], [], []>} : vector<4x128xbf16>, vector<128x512xbf16>, vector<4x512xf32> -> vector<4x512xf32>
    %c7 = arith.constant 7 : index
    %c0_110 = arith.constant 0 : index
    %244 = vector.load %arg2[%c7, %c0_110] : memref<12x512xf32, #tpu.memory_space<vmem>>, vector<1x512xf32>
    %c10 = arith.constant 10 : index
    %c0_111 = arith.constant 0 : index
    %245 = vector.load %arg2[%c10, %c0_111] : memref<12x512xf32, #tpu.memory_space<vmem>>, vector<1x512xf32>
    %cst_112 = arith.constant dense<0.000000e+00> : vector<512xf32>
    %246 = vector.multi_reduction <add>, %243, %cst_112 [0] : vector<4x512xf32> to vector<512xf32>
    %247 = vector.shape_cast %246 : vector<512xf32> to vector<1x512xf32>
    %cst_113 = arith.constant 4.000000e+00 : f32
    %248 = vector.broadcast %cst_113 : f32 to vector<1x512xf32>
    %249 = arith.divf %247, %248 : vector<1x512xf32>
    %250 = arith.mulf %243, %243 : vector<4x512xf32>
    %cst_114 = arith.constant dense<0.000000e+00> : vector<512xf32>
    %251 = vector.multi_reduction <add>, %250, %cst_114 [0] : vector<4x512xf32> to vector<512xf32>
    %252 = vector.shape_cast %251 : vector<512xf32> to vector<1x512xf32>
    %cst_115 = arith.constant 4.000000e+00 : f32
    %253 = vector.broadcast %cst_115 : f32 to vector<1x512xf32>
    %254 = arith.divf %252, %253 : vector<1x512xf32>
    %255 = arith.mulf %249, %249 : vector<1x512xf32>
    %256 = arith.subf %254, %255 : vector<1x512xf32>
    %cst_116 = arith.constant 0.000000e+00 : f32
    %257 = vector.broadcast %cst_116 : f32 to vector<1x512xf32>
    %258 = arith.maximumf %256, %257 : vector<1x512xf32>
    %cst_117 = arith.constant 9.99999974E-6 : f32
    %259 = vector.broadcast %cst_117 : f32 to vector<1x512xf32>
    %260 = arith.addf %258, %259 : vector<1x512xf32>
    %261 = math.rsqrt %260 : vector<1x512xf32>
    %262 = arith.mulf %244, %261 : vector<1x512xf32>
    %263 = arith.mulf %249, %262 : vector<1x512xf32>
    %264 = arith.subf %245, %263 : vector<1x512xf32>
    %265 = vector.broadcast %262 : vector<1x512xf32> to vector<4x512xf32>
    %266 = arith.mulf %243, %265 : vector<4x512xf32>
    %267 = vector.broadcast %264 : vector<1x512xf32> to vector<4x512xf32>
    %268 = arith.addf %266, %267 : vector<4x512xf32>
    %269 = arith.negf %268 : vector<4x512xf32>
    %270 = math.exp %269 : vector<4x512xf32>
    %cst_118 = arith.constant 1.000000e+00 : f32
    %271 = vector.broadcast %cst_118 : f32 to vector<4x512xf32>
    %272 = arith.addf %271, %270 : vector<4x512xf32>
    %273 = arith.divf %271, %272 : vector<4x512xf32>
    %c1_119 = arith.constant 1 : index
    %c0_120 = arith.constant 0 : index
    %c0_121 = arith.constant 0 : index
    %274 = vector.load %arg0[%c1_119, %c0_120, %c0_121] : memref<3x4x512xf32, #tpu.memory_space<vmem>>, vector<1x4x512xf32>
    %275 = vector.shape_cast %274 : vector<1x4x512xf32> to vector<4x512xf32>
    %276 = arith.mulf %273, %275 : vector<4x512xf32>
    %277 = arith.addf %239, %276 : vector<4x512xf32>
    %278 = vector.extract_strided_slice %198 {offsets = [0, 256], sizes = [4, 128], strides = [1, 1]} : vector<4x384xbf16> to vector<4x128xbf16>
    %c2_122 = arith.constant 2 : index
    %c0_123 = arith.constant 0 : index
    %c0_124 = arith.constant 0 : index
    %279 = vector.load %arg11[%c2_122, %c0_123, %c0_124] : memref<3x128x512xbf16, #tpu.memory_space<vmem>>, vector<1x128x512xbf16>
    %280 = vector.shape_cast %279 : vector<1x128x512xbf16> to vector<128x512xbf16>
    %cst_125 = arith.constant dense<0.000000e+00> : vector<4x512xf32>
    %281 = tpu.matmul %278, %280, %cst_125 {dimension_numbers = #tpu.dot_dimension_numbers<[1], [0], [0], [1], [0, 0, 1, 1], [], []>} : vector<4x128xbf16>, vector<128x512xbf16>, vector<4x512xf32> -> vector<4x512xf32>
    %c8 = arith.constant 8 : index
    %c0_126 = arith.constant 0 : index
    %282 = vector.load %arg2[%c8, %c0_126] : memref<12x512xf32, #tpu.memory_space<vmem>>, vector<1x512xf32>
    %c11 = arith.constant 11 : index
    %c0_127 = arith.constant 0 : index
    %283 = vector.load %arg2[%c11, %c0_127] : memref<12x512xf32, #tpu.memory_space<vmem>>, vector<1x512xf32>
    %cst_128 = arith.constant dense<0.000000e+00> : vector<512xf32>
    %284 = vector.multi_reduction <add>, %281, %cst_128 [0] : vector<4x512xf32> to vector<512xf32>
    %285 = vector.shape_cast %284 : vector<512xf32> to vector<1x512xf32>
    %cst_129 = arith.constant 4.000000e+00 : f32
    %286 = vector.broadcast %cst_129 : f32 to vector<1x512xf32>
    %287 = arith.divf %285, %286 : vector<1x512xf32>
    %288 = arith.mulf %281, %281 : vector<4x512xf32>
    %cst_130 = arith.constant dense<0.000000e+00> : vector<512xf32>
    %289 = vector.multi_reduction <add>, %288, %cst_130 [0] : vector<4x512xf32> to vector<512xf32>
    %290 = vector.shape_cast %289 : vector<512xf32> to vector<1x512xf32>
    %cst_131 = arith.constant 4.000000e+00 : f32
    %291 = vector.broadcast %cst_131 : f32 to vector<1x512xf32>
    %292 = arith.divf %290, %291 : vector<1x512xf32>
    %293 = arith.mulf %287, %287 : vector<1x512xf32>
    %294 = arith.subf %292, %293 : vector<1x512xf32>
    %cst_132 = arith.constant 0.000000e+00 : f32
    %295 = vector.broadcast %cst_132 : f32 to vector<1x512xf32>
    %296 = arith.maximumf %294, %295 : vector<1x512xf32>
    %cst_133 = arith.constant 9.99999974E-6 : f32
    %297 = vector.broadcast %cst_133 : f32 to vector<1x512xf32>
    %298 = arith.addf %296, %297 : vector<1x512xf32>
    %299 = math.rsqrt %298 : vector<1x512xf32>
    %300 = arith.mulf %282, %299 : vector<1x512xf32>
    %301 = arith.mulf %287, %300 : vector<1x512xf32>
    %302 = arith.subf %283, %301 : vector<1x512xf32>
    %303 = vector.broadcast %300 : vector<1x512xf32> to vector<4x512xf32>
    %304 = arith.mulf %281, %303 : vector<4x512xf32>
    %305 = vector.broadcast %302 : vector<1x512xf32> to vector<4x512xf32>
    %306 = arith.addf %304, %305 : vector<4x512xf32>
    %307 = arith.negf %306 : vector<4x512xf32>
    %308 = math.exp %307 : vector<4x512xf32>
    %cst_134 = arith.constant 1.000000e+00 : f32
    %309 = vector.broadcast %cst_134 : f32 to vector<4x512xf32>
    %310 = arith.addf %309, %308 : vector<4x512xf32>
    %311 = arith.divf %309, %310 : vector<4x512xf32>
    %c2_135 = arith.constant 2 : index
    %c0_136 = arith.constant 0 : index
    %c0_137 = arith.constant 0 : index
    %312 = vector.load %arg0[%c2_135, %c0_136, %c0_137] : memref<3x4x512xf32, #tpu.memory_space<vmem>>, vector<1x4x512xf32>
    %313 = vector.shape_cast %312 : vector<1x4x512xf32> to vector<4x512xf32>
    %314 = arith.mulf %311, %313 : vector<4x512xf32>
    %315 = arith.addf %277, %314 : vector<4x512xf32>
    %c0_138 = arith.constant 0 : index
    %c0_139 = arith.constant 0 : index
    %316 = vector.load %arg7[%c0_138, %c0_139] : memref<4x512xf32, #tpu.memory_space<vmem>>, vector<4x512xf32>
    tpu.vector_store %arg7[%c0_138, %c0_139], %315 {strides = array<i32>} : memref<4x512xf32, #tpu.memory_space<vmem>>, vector<4x512xf32>,
    return
  }
}

</mosaic_0001>

<llo_original>
// kernel: tpu_custom_call.1
$region0: #{tpu_custom_call.1}
  #allocation0 [shape = 'u32[]', space=smem, size = 0x4, offset = 0x4, fixed_abs, tag = 'smem constant byte address 0x4 - core index']
  #allocation1 [shape = 'u32[144,128]{1,0:T(1,128)}', space=vmem, size = 0x12000, scoped, tag = 'internal scratch']
  #allocation2 [shape = 'bf16[512,384]{1,0:T(8,128)(2,1)}', space=vmem, size = 0x60000, scoped, tag = 'scratch operand']
  #allocation3 [shape = 'bf16[3,128,512]{2,1,0:T(8,128)(2,1)}', space=vmem, size = 0x60000, scoped, tag = 'scratch operand']
  #allocation4 [shape = 'bf16[512,384]{1,0:T(8,128)(2,1)}', space=vmem, size = 0x60000, scoped, tag = 'scratch operand']
  #allocation5 [shape = 'bf16[3,128,512]{2,1,0:T(8,128)(2,1)}', space=vmem, size = 0x60000, scoped, tag = 'scratch operand']
  #allocation6 [shape = 's32[4]{0}', space=sflag, size = 0x10, scoped, tag = 'scratch operand']
  #allocation14 [shape = 's32[]', space=sflag, size = 0x4, offset = 0, fixed_abs, tag = 'sflag constant byte address 0x0 - dummy sync flag']
  #allocation15 [shape = 's32[]', space=sflag, size = 0x4, offset = 0, fixed_abs, tag = 'sflag constant byte address 0x0 - dummy sync flag']
  #allocation16 [shape = 'u32[]', space=smem, size = 0x4, offset = 0x44, fixed_abs, tag = 'smem constant byte address 0x44 - assertion arg 0']
  #allocation17 [shape = 'u32[]', space=smem, size = 0x4, offset = 0x48, fixed_abs, tag = 'smem constant byte address 0x48 - assertion arg 1']
  #allocation18 [shape = 's32[]', space=sflag, size = 0x4, offset = 0, fixed_abs, tag = 'sflag constant byte address 0x0 - dummy sync flag']
  #allocation19 [shape = 's32[]', space=sflag, size = 0x4, offset = 0, fixed_abs, tag = 'sflag constant byte address 0x0 - dummy sync flag']
  #allocation20 [shape = 's32[]', space=sflag, size = 0x4, offset = 0, fixed_abs, tag = 'sflag constant byte address 0x0 - dummy sync flag']
  #allocation21 [shape = 's32[]', space=sflag, size = 0x4, offset = 0, fixed_abs, tag = 'sflag constant byte address 0x0 - dummy sync flag']
  #allocation22 [shape = 's32[]', space=sflag, size = 0x4, offset = 0, fixed_abs, tag = 'sflag constant byte address 0x0 - dummy sync flag']
  #allocation23 [shape = 's32[]', space=sflag, size = 0x4, offset = 0, fixed_abs, tag = 'sflag constant byte address 0x0 - dummy sync flag']
  %s0 = inlined_call_operand.hbm [shape: f32[3,4,512], index: 0, kind: input, shape index: {}]
  %s1 = inlined_call_operand.hbm [shape: f32[4,384], index: 1, kind: input, shape index: {}]
  %s2 = inlined_call_operand.hbm [shape: f32[12,512], index: 2, kind: input, shape index: {}]
  %s3 = inlined_call_operand.hbm [shape: bf16[512,384], index: 3, kind: input, shape index: {}]
  %s4 = inlined_call_operand.hbm [shape: bf16[3,128,512], index: 4, kind: input, shape index: {}]
  %s5 = inlined_call_operand.hbm [shape: bf16[512,384], index: 5, kind: input, shape index: {}]
  %s6 = inlined_call_operand.hbm [shape: bf16[3,128,512], index: 6, kind: input, shape index: {}]
  %s7 = inlined_call_operand.hbm [shape: f32[4,512], index: 7, kind: output, shape index: {}]
  %s8 = sld [smem:[#allocation0]]
  $region50: #{tpu_custom_call.1} parent=0
    _
  %s10 = ssub.s32 1, %s8
  %s11 = scalar_select 0, %s10, %s8
  $region1: #{tpu_custom_call.1} parent=0
    #allocation7 [shape = 'u8[24576]{0}', space=vmem, size = 0x6000, scoped, tag = 'input window, operand 0, single buffered']
    #allocation8 [shape = 's32[1]{0}', space=sflag, size = 0x4, scoped, tag = 'scoped memory for tpu_custom_call.1']
    #allocation9 [shape = 's32[1]{0}', space=sflag, size = 0x4, scoped, tag = 'scoped memory for tpu_custom_call.1']
    #allocation10 [shape = 'u8[6144]{0}', space=vmem, size = 0x1800, scoped, tag = 'input window, operand 1, single buffered']
    #allocation11 [shape = 's32[1]{0}', space=sflag, size = 0x4, scoped, tag = 'scoped memory for tpu_custom_call.1']
    #allocation12 [shape = 'u8[32768]{0}', space=vmem, size = 0x8000, scoped, tag = 'input window, operand 2, single buffered']
    #allocation13 [shape = 'u8[8192]{0}', space=vmem, size = 0x2000, scoped, tag = 'output window, operand 0, single buffered']
    %12 = vsyncpa [#allocation8], 0
    %13 = vsyncpa [#allocation11], 0
    %14 = vsyncpa [#allocation9], 0
    // Predicated region
    $region2: #{tpu_custom_call.1} parent=1 // pred_check
      _
    $region3: #{tpu_custom_call.1} parent=1 // pred_check_branch
      %16 = sbr.rel (0) target = $region5
    $region4: #{tpu_custom_call.1} parent=1 // pred_region
      %s18 = ssub.s32 768, 768
      %19 = vsyncadd [#allocation8], %s18
      %s20 = sshll.u32 [#allocation7], 4
      %s21 = int_to_ptr.vmem [resolvable:$true] %s20
      %26 = dma.hbm_to_vmem [thread:$0]  %s0, 768, %s21, [#allocation8], 256, 256, 16
    $region5: #{tpu_custom_call.1} parent=1 // pred_fallthru
      _
    // Predicated region
    $region6: #{tpu_custom_call.1} parent=1 // pred_check
      _
    $region7: #{tpu_custom_call.1} parent=1 // pred_check_branch
      %28 = sbr.rel (0) target = $region9
    $region8: #{tpu_custom_call.1} parent=1 // pred_region
      %s30 = ssub.s32 192, 192
      %31 = vsyncadd [#allocation11], %s30
      %s33 = sshll.u32 [#allocation10], 4
      %s34 = int_to_ptr.vmem [resolvable:$true] %s33
      %36 = dma.hbm_to_vmem [thread:$0]  %s1, 192, %s34, [#allocation11]
    $region9: #{tpu_custom_call.1} parent=1 // pred_fallthru
      _
    // Predicated region
    $region10: #{tpu_custom_call.1} parent=1 // pred_check
      _
    $region11: #{tpu_custom_call.1} parent=1 // pred_check_branch
      %38 = sbr.rel (0) target = $region13
    $region12: #{tpu_custom_call.1} parent=1 // pred_region
      %s40 = ssub.s32 1024, 1024
      %41 = vsyncadd [#allocation11], %s40
      %s42 = sshll.u32 [#allocation12], 4
      %s43 = int_to_ptr.vmem [resolvable:$true] %s42
      %48 = dma.hbm_to_vmem [thread:$0]  %s2, 1024, %s43, [#allocation11], 512, 512, 32
    $region13: #{tpu_custom_call.1} parent=1 // pred_fallthru
      _
    // Predicated region
    $region14: #{tpu_custom_call.1} parent=1 // pred_check
      _
    $region15: #{tpu_custom_call.1} parent=1 // pred_check_branch
      %50 = sbr.rel (0) target = $region17
    $region16: #{tpu_custom_call.1} parent=1 // pred_region
      %51 = dma.done [#allocation8], 768
    $region17: #{tpu_custom_call.1} parent=1 // pred_fallthru
      _
    // Predicated region
    $region18: #{tpu_custom_call.1} parent=1 // pred_check
      _
    $region19: #{tpu_custom_call.1} parent=1 // pred_check_branch
      %53 = sbr.rel (0) target = $region21
    $region20: #{tpu_custom_call.1} parent=1 // pred_region
      %54 = dma.done [#allocation11], 192
    $region21: #{tpu_custom_call.1} parent=1 // pred_fallthru
      _
    // Predicated region
    $region22: #{tpu_custom_call.1} parent=1 // pred_check
      _
    $region23: #{tpu_custom_call.1} parent=1 // pred_check_branch
      %56 = sbr.rel (0) target = $region25
    $region24: #{tpu_custom_call.1} parent=1 // pred_region
      %57 = dma.done [#allocation11], 1024
    $region25: #{tpu_custom_call.1} parent=1 // pred_fallthru
      _
    // Predicated region
    $region26: #{tpu_custom_call.1} parent=1 // pred_check
      _
    $region27: #{tpu_custom_call.1} parent=1 // pred_check_branch
      %60 = sbr.rel target = $region29
    $region28: #{tpu_custom_call.1} parent=1 // pred_region
      %61 = sst [smem:[#allocation16]] [#allocation15]
      %62 = sst [smem:[#allocation17]] [#allocation14]
    $region29: #{tpu_custom_call.1} parent=1 // pred_fallthru
      _
    %64 = shalt.err (0)
    %s66 = sshll.u32 [#allocation2], 4
    %s67 = int_to_ptr.vmem [resolvable:$true] %s66
    %69 = dma.hbm_to_vmem [thread:$0]  %s3, 12288, %s67, [#allocation6]
    %s70 = scalar_lea.sflag [#allocation6], 1
    // Predicated region
    $region30: #{tpu_custom_call.1} parent=1 // pred_check
      _
    $region31: #{tpu_custom_call.1} parent=1 // pred_check_branch
      %72 = sbr.rel target = $region33
    $region32: #{tpu_custom_call.1} parent=1 // pred_region
      %73 = sst [smem:[#allocation16]] [#allocation19]
      %74 = sst [smem:[#allocation17]] [#allocation18]
    $region33: #{tpu_custom_call.1} parent=1 // pred_fallthru
      _
    %76 = shalt.err (0)
    %s78 = sshll.u32 [#allocation3], 4
    %s79 = int_to_ptr.vmem [resolvable:$true] %s78
    %81 = dma.hbm_to_vmem [thread:$0]  %s4, 12288, %s79, %s70
    %s82 = scalar_lea.sflag [#allocation6], 2
    // Predicated region
    $region34: #{tpu_custom_call.1} parent=1 // pred_check
      _
    $region35: #{tpu_custom_call.1} parent=1 // pred_check_branch
      %84 = sbr.rel target = $region37
    $region36: #{tpu_custom_call.1} parent=1 // pred_region
      %85 = sst [smem:[#allocation16]] [#allocation21]
      %86 = sst [smem:[#allocation17]] [#allocation20]
    $region37: #{tpu_custom_call.1} parent=1 // pred_fallthru
      _
    %88 = shalt.err (0)
    %s90 = sshll.u32 [#allocation4], 4
    %s91 = int_to_ptr.vmem [resolvable:$true] %s90
    %93 = dma.hbm_to_vmem [thread:$0]  %s5, 12288, %s91, %s82
    %s94 = scalar_lea.sflag [#allocation6], 3
    // Predicated region
    $region38: #{tpu_custom_call.1} parent=1 // pred_check
      _
    $region39: #{tpu_custom_call.1} parent=1 // pred_check_branch
      %96 = sbr.rel target = $region41
    $region40: #{tpu_custom_call.1} parent=1 // pred_region
      %97 = sst [smem:[#allocation16]] [#allocation23]
      %98 = sst [smem:[#allocation17]] [#allocation22]
    $region41: #{tpu_custom_call.1} parent=1 // pred_fallthru
      _
    %100 = shalt.err (0)
    %s102 = sshll.u32 [#allocation5], 4
    %s103 = int_to_ptr.vmem [resolvable:$true] %s102
    %105 = dma.hbm_to_vmem [thread:$0]  %s6, 12288, %s103, %s94
    %v106 = vld [vmem:[#allocation7] sm:$0xff]
    %v107 = vld [vmem:[#allocation7 + $0x8] sm:$0xff]
    %s108 = scalar_lea.vmem [#allocation7], 16
    %v109 = vld [vmem:[%s108] sm:$0xff]
    %v110 = vld [vmem:[%s108 + $0x8] sm:$0xff]
    %v111 = vadd.f32 %v106, %v109
    %v112 = vadd.f32 %v107, %v110
    %s113 = scalar_lea.vmem [#allocation7], 32
    %v114 = vld [vmem:[%s113] sm:$0xff]
    %v115 = vld [vmem:[%s113 + $0x8] sm:$0xff]
    %v116 = vadd.f32 %v111, %v114
    %v117 = vadd.f32 %v112, %v115
    %s118 = smul.u32 4, 64
    %s119 = smul.u32 %s118, 3
    %s120 = sshll.u32 %s119, 4
    %121 = dma.done [#allocation6], %s120
    %v124 = vcombine.high %v116, %v116
    %v125 = vcombine.high %v117, %v117
    %v128 = vpack.c.bf16 %v116, %v116
    %v129 = vpack.c.bf16 %v124, %v124
    %v130 = vpack.c.bf16 %v117, %v117
    %v131 = vpack.c.bf16 %v125, %v125
    %v132 = vld [vmem:[#allocation2] sm:$0xff]
    %v133 = vld [vmem:[#allocation2 + $0x8] sm:$0xf]
    %v134 = vld [vmem:[#allocation2 + $0xc] sm:$0xff]
    %v135 = vld [vmem:[#allocation2 + $0x14] sm:$0xf]
    %v136 = vld [vmem:[#allocation2 + $0x18] sm:$0xff]
    %v137 = vld [vmem:[#allocation2 + $0x20] sm:$0xf]
    %v138 = vld [vmem:[#allocation2 + $0x24] sm:$0xff]
    %v139 = vld [vmem:[#allocation2 + $0x2c] sm:$0xf]
    %v140 = vld [vmem:[#allocation2 + $0x30] sm:$0xff]
    %v141 = vld [vmem:[#allocation2 + $0x38] sm:$0xf]
    %v142 = vld [vmem:[#allocation2 + $0x3c] sm:$0xff]
    %v143 = vld [vmem:[#allocation2 + $0x44] sm:$0xf]
    %v144 = vld [vmem:[#allocation2 + $0x48] sm:$0xff]
    %v145 = vld [vmem:[#allocation2 + $0x50] sm:$0xf]
    %v146 = vld [vmem:[#allocation2 + $0x54] sm:$0xff]
    %v147 = vld [vmem:[#allocation2 + $0x5c] sm:$0xf]
    %v148 = vld [vmem:[#allocation2 + $0x60] sm:$0xff]
    %v149 = vld [vmem:[#allocation2 + $0x68] sm:$0xf]
    %v150 = vld [vmem:[#allocation2 + $0x6c] sm:$0xff]
    %v151 = vld [vmem:[#allocation2 + $0x74] sm:$0xf]
    %v152 = vld [vmem:[#allocation2 + $0x78] sm:$0xff]
    %v153 = vld [vmem:[#allocation2 + $0x80] sm:$0xf]
    %v154 = vld [vmem:[#allocation2 + $0x84] sm:$0xff]
    %v155 = vld [vmem:[#allocation2 + $0x8c] sm:$0xf]
    %v156 = vld [vmem:[#allocation2 + $0x90] sm:$0xff]
    %v157 = vld [vmem:[#allocation2 + $0x98] sm:$0xf]
    %v158 = vld [vmem:[#allocation2 + $0x9c] sm:$0xff]
    %v159 = vld [vmem:[#allocation2 + $0xa4] sm:$0xf]
    %v160 = vld [vmem:[#allocation2 + $0xa8] sm:$0xff]
    %v161 = vld [vmem:[#allocation2 + $0xb0] sm:$0xf]
    %v162 = vld [vmem:[#allocation2 + $0xb4] sm:$0xff]
    %v163 = vld [vmem:[#allocation2 + $0xbc] sm:$0xf]
    %v164 = vld [vmem:[#allocation2 + $0xc0] sm:$0xff]
    %v165 = vld [vmem:[#allocation2 + $0xc8] sm:$0xf]
    %v166 = vld [vmem:[#allocation2 + $0xcc] sm:$0xff]
    %v167 = vld [vmem:[#allocation2 + $0xd4] sm:$0xf]
    %v168 = vld [vmem:[#allocation2 + $0xd8] sm:$0xff]
    %v169 = vld [vmem:[#allocation2 + $0xe0] sm:$0xf]
    %v170 = vld [vmem:[#allocation2 + $0xe4] sm:$0xff]
    %v171 = vld [vmem:[#allocation2 + $0xec] sm:$0xf]
    %v172 = vld [vmem:[#allocation2 + $0xf0] sm:$0xff]
    %v173 = vld [vmem:[#allocation2 + $0xf8] sm:$0xf]
    %v174 = vld [vmem:[#allocation2 + $0xfc] sm:$0xff]
    %v175 = vld [vmem:[#allocation2 + $0x104] sm:$0xf]
    %v176 = vld [vmem:[#allocation2 + $0x108] sm:$0xff]
    %v177 = vld [vmem:[#allocation2 + $0x110] sm:$0xf]
    %v178 = vld [vmem:[#allocation2 + $0x114] sm:$0xff]
    %v179 = vld [vmem:[#allocation2 + $0x11c] sm:$0xf]
    %v180 = vld [vmem:[#allocation2 + $0x120] sm:$0xff]
    %v181 = vld [vmem:[#allocation2 + $0x128] sm:$0xf]
    %v182 = vld [vmem:[#allocation2 + $0x12c] sm:$0xff]
    %v183 = vld [vmem:[#allocation2 + $0x134] sm:$0xf]
    %v184 = vld [vmem:[#allocation2 + $0x138] sm:$0xff]
    %v185 = vld [vmem:[#allocation2 + $0x140] sm:$0xf]
    %v186 = vld [vmem:[#allocation2 + $0x144] sm:$0xff]
    %v187 = vld [vmem:[#allocation2 + $0x14c] sm:$0xf]
    %v188 = vld [vmem:[#allocation2 + $0x150] sm:$0xff]
    %v189 = vld [vmem:[#allocation2 + $0x158] sm:$0xf]
    %v190 = vld [vmem:[#allocation2 + $0x15c] sm:$0xff]
    %v191 = vld [vmem:[#allocation2 + $0x164] sm:$0xf]
    %v192 = vld [vmem:[#allocation2 + $0x168] sm:$0xff]
    %v193 = vld [vmem:[#allocation2 + $0x170] sm:$0xf]
    %v194 = vld [vmem:[#allocation2 + $0x174] sm:$0xff]
    %v195 = vld [vmem:[#allocation2 + $0x17c] sm:$0xf]
    %v196 = vld [vmem:[#allocation2 + $0x180] sm:$0xff]
    %v197 = vld [vmem:[#allocation2 + $0x188] sm:$0xf]
    %v198 = vld [vmem:[#allocation2 + $0x18c] sm:$0xff]
    %v199 = vld [vmem:[#allocation2 + $0x194] sm:$0xf]
    %v200 = vld [vmem:[#allocation2 + $0x198] sm:$0xff]
    %v201 = vld [vmem:[#allocation2 + $0x1a0] sm:$0xf]
    %v202 = vld [vmem:[#allocation2 + $0x1a4] sm:$0xff]
    %v203 = vld [vmem:[#allocation2 + $0x1ac] sm:$0xf]
    %v204 = vld [vmem:[#allocation2 + $0x1b0] sm:$0xff]
    %v205 = vld [vmem:[#allocation2 + $0x1b8] sm:$0xf]
    %v206 = vld [vmem:[#allocation2 + $0x1bc] sm:$0xff]
    %v207 = vld [vmem:[#allocation2 + $0x1c4] sm:$0xf]
    %v208 = vld [vmem:[#allocation2 + $0x1c8] sm:$0xff]
    %v209 = vld [vmem:[#allocation2 + $0x1d0] sm:$0xf]
    %v210 = vld [vmem:[#allocation2 + $0x1d4] sm:$0xff]
    %v211 = vld [vmem:[#allocation2 + $0x1dc] sm:$0xf]
    %v212 = vld [vmem:[#allocation2 + $0x1e0] sm:$0xff]
    %v213 = vld [vmem:[#allocation2 + $0x1e8] sm:$0xf]
    %v214 = vld [vmem:[#allocation2 + $0x1ec] sm:$0xff]
    %v215 = vld [vmem:[#allocation2 + $0x1f4] sm:$0xf]
    %v216 = vld [vmem:[#allocation2 + $0x1f8] sm:$0xff]
    %v217 = vld [vmem:[#allocation2 + $0x200] sm:$0xf]
    %v218 = vld [vmem:[#allocation2 + $0x204] sm:$0xff]
    %v219 = vld [vmem:[#allocation2 + $0x20c] sm:$0xf]
    %v220 = vld [vmem:[#allocation2 + $0x210] sm:$0xff]
    %v221 = vld [vmem:[#allocation2 + $0x218] sm:$0xf]
    %v222 = vld [vmem:[#allocation2 + $0x21c] sm:$0xff]
    %v223 = vld [vmem:[#allocation2 + $0x224] sm:$0xf]
    %v224 = vld [vmem:[#allocation2 + $0x228] sm:$0xff]
    %v225 = vld [vmem:[#allocation2 + $0x230] sm:$0xf]
    %v226 = vld [vmem:[#allocation2 + $0x234] sm:$0xff]
    %v227 = vld [vmem:[#allocation2 + $0x23c] sm:$0xf]
    %v228 = vld [vmem:[#allocation2 + $0x240] sm:$0xff]
    %v229 = vld [vmem:[#allocation2 + $0x248] sm:$0xf]
    %v230 = vld [vmem:[#allocation2 + $0x24c] sm:$0xff]
    %v231 = vld [vmem:[#allocation2 + $0x254] sm:$0xf]
    %v232 = vld [vmem:[#allocation2 + $0x258] sm:$0xff]
    %v233 = vld [vmem:[#allocation2 + $0x260] sm:$0xf]
    %v234 = vld [vmem:[#allocation2 + $0x264] sm:$0xff]
    %v235 = vld [vmem:[#allocation2 + $0x26c] sm:$0xf]
    %v236 = vld [vmem:[#allocation2 + $0x270] sm:$0xff]
    %v237 = vld [vmem:[#allocation2 + $0x278] sm:$0xf]
    %v238 = vld [vmem:[#allocation2 + $0x27c] sm:$0xff]
    %v239 = vld [vmem:[#allocation2 + $0x284] sm:$0xf]
    %v240 = vld [vmem:[#allocation2 + $0x288] sm:$0xff]
    %v241 = vld [vmem:[#allocation2 + $0x290] sm:$0xf]
    %v242 = vld [vmem:[#allocation2 + $0x294] sm:$0xff]
    %v243 = vld [vmem:[#allocation2 + $0x29c] sm:$0xf]
    %v244 = vld [vmem:[#allocation2 + $0x2a0] sm:$0xff]
    %v245 = vld [vmem:[#allocation2 + $0x2a8] sm:$0xf]
    %v246 = vld [vmem:[#allocation2 + $0x2ac] sm:$0xff]
    %v247 = vld [vmem:[#allocation2 + $0x2b4] sm:$0xf]
    %v248 = vld [vmem:[#allocation2 + $0x2b8] sm:$0xff]
    %v249 = vld [vmem:[#allocation2 + $0x2c0] sm:$0xf]
    %v250 = vld [vmem:[#allocation2 + $0x2c4] sm:$0xff]
    %v251 = vld [vmem:[#allocation2 + $0x2cc] sm:$0xf]
    %v252 = vld [vmem:[#allocation2 + $0x2d0] sm:$0xff]
    %v253 = vld [vmem:[#allocation2 + $0x2d8] sm:$0xf]
    %v254 = vld [vmem:[#allocation2 + $0x2dc] sm:$0xff]
    %v255 = vld [vmem:[#allocation2 + $0x2e4] sm:$0xf]
    %v256 = vld [vmem:[#allocation2 + $0x2e8] sm:$0xff]
    %v257 = vld [vmem:[#allocation2 + $0x2f0] sm:$0xf]
    %v258 = vld [vmem:[#allocation2 + $0x2f4] sm:$0xff]
    %v259 = vld [vmem:[#allocation2 + $0x2fc] sm:$0xf]
    %v388 = vunpack.c.l.b16 %v132
    %v389 = vunpack.c.h.b16 %v132
    %v390 = vunpack.c.l.b16 %v133
    %v391 = vunpack.c.l.b16 %v134
    %v392 = vunpack.c.h.b16 %v134
    %v393 = vunpack.c.l.b16 %v135
    %v394 = vunpack.c.l.b16 %v136
    %v395 = vunpack.c.h.b16 %v136
    %v396 = vunpack.c.l.b16 %v137
    %v397 = vunpack.c.l.b16 %v138
    %v398 = vunpack.c.h.b16 %v138
    %v399 = vunpack.c.l.b16 %v139
    %v400 = vunpack.c.l.b16 %v140
    %v401 = vunpack.c.h.b16 %v140
    %v402 = vunpack.c.l.b16 %v141
    %v403 = vunpack.c.l.b16 %v142
    %v404 = vunpack.c.h.b16 %v142
    %v405 = vunpack.c.l.b16 %v143
    %v406 = vunpack.c.l.b16 %v144
    %v407 = vunpack.c.h.b16 %v144
    %v408 = vunpack.c.l.b16 %v145
    %v409 = vunpack.c.l.b16 %v146
    %v410 = vunpack.c.h.b16 %v146
    %v411 = vunpack.c.l.b16 %v147
    %v412 = vunpack.c.l.b16 %v148
    %v413 = vunpack.c.h.b16 %v148
    %v414 = vunpack.c.l.b16 %v149
    %v415 = vunpack.c.l.b16 %v150
    %v416 = vunpack.c.h.b16 %v150
    %v417 = vunpack.c.l.b16 %v151
    %v418 = vunpack.c.l.b16 %v152
    %v419 = vunpack.c.h.b16 %v152
    %v420 = vunpack.c.l.b16 %v153
    %v421 = vunpack.c.l.b16 %v154
    %v422 = vunpack.c.h.b16 %v154
    %v423 = vunpack.c.l.b16 %v155
    %v424 = vunpack.c.l.b16 %v156
    %v425 = vunpack.c.h.b16 %v156
    %v426 = vunpack.c.l.b16 %v157
    %v427 = vunpack.c.l.b16 %v158
    %v428 = vunpack.c.h.b16 %v158
    %v429 = vunpack.c.l.b16 %v159
    %v430 = vunpack.c.l.b16 %v160
    %v431 = vunpack.c.h.b16 %v160
    %v432 = vunpack.c.l.b16 %v161
    %v433 = vunpack.c.l.b16 %v162
    %v434 = vunpack.c.h.b16 %v162
    %v435 = vunpack.c.l.b16 %v163
    %v436 = vunpack.c.l.b16 %v164
    %v437 = vunpack.c.h.b16 %v164
    %v438 = vunpack.c.l.b16 %v165
    %v439 = vunpack.c.l.b16 %v166
    %v440 = vunpack.c.h.b16 %v166
    %v441 = vunpack.c.l.b16 %v167
    %v442 = vunpack.c.l.b16 %v168
    %v443 = vunpack.c.h.b16 %v168
    %v444 = vunpack.c.l.b16 %v169
    %v445 = vunpack.c.l.b16 %v170
    %v446 = vunpack.c.h.b16 %v170
    %v447 = vunpack.c.l.b16 %v171
    %v448 = vunpack.c.l.b16 %v172
    %v449 = vunpack.c.h.b16 %v172
    %v450 = vunpack.c.l.b16 %v173
    %v451 = vunpack.c.l.b16 %v174
    %v452 = vunpack.c.h.b16 %v174
    %v453 = vunpack.c.l.b16 %v175
    %v454 = vunpack.c.l.b16 %v176
    %v455 = vunpack.c.h.b16 %v176
    %v456 = vunpack.c.l.b16 %v177
    %v457 = vunpack.c.l.b16 %v178
    %v458 = vunpack.c.h.b16 %v178
    %v459 = vunpack.c.l.b16 %v179
    %v460 = vunpack.c.l.b16 %v180
    %v461 = vunpack.c.h.b16 %v180
    %v462 = vunpack.c.l.b16 %v181
    %v463 = vunpack.c.l.b16 %v182
    %v464 = vunpack.c.h.b16 %v182
    %v465 = vunpack.c.l.b16 %v183
    %v466 = vunpack.c.l.b16 %v184
    %v467 = vunpack.c.h.b16 %v184
    %v468 = vunpack.c.l.b16 %v185
    %v469 = vunpack.c.l.b16 %v186
    %v470 = vunpack.c.h.b16 %v186
    %v471 = vunpack.c.l.b16 %v187
    %v472 = vunpack.c.l.b16 %v188
    %v473 = vunpack.c.h.b16 %v188
    %v474 = vunpack.c.l.b16 %v189
    %v475 = vunpack.c.l.b16 %v190
    %v476 = vunpack.c.h.b16 %v190
    %v477 = vunpack.c.l.b16 %v191
    %v478 = vunpack.c.l.b16 %v192
    %v479 = vunpack.c.h.b16 %v192
    %v480 = vunpack.c.l.b16 %v193
    %v481 = vunpack.c.l.b16 %v194
    %v482 = vunpack.c.h.b16 %v194
    %v483 = vunpack.c.l.b16 %v195
    %v484 = vunpack.c.l.b16 %v196
    %v485 = vunpack.c.h.b16 %v196
    %v486 = vunpack.c.l.b16 %v197
    %v487 = vunpack.c.l.b16 %v198
    %v488 = vunpack.c.h.b16 %v198
    %v489 = vunpack.c.l.b16 %v199
    %v490 = vunpack.c.l.b16 %v200
    %v491 = vunpack.c.h.b16 %v200
    %v492 = vunpack.c.l.b16 %v201
    %v493 = vunpack.c.l.b16 %v202
    %v494 = vunpack.c.h.b16 %v202
    %v495 = vunpack.c.l.b16 %v203
    %v496 = vunpack.c.l.b16 %v204
    %v497 = vunpack.c.h.b16 %v204
    %v498 = vunpack.c.l.b16 %v205
    %v499 = vunpack.c.l.b16 %v206
    %v500 = vunpack.c.h.b16 %v206
    %v501 = vunpack.c.l.b16 %v207
    %v502 = vunpack.c.l.b16 %v208
    %v503 = vunpack.c.h.b16 %v208
    %v504 = vunpack.c.l.b16 %v209
    %v505 = vunpack.c.l.b16 %v210
    %v506 = vunpack.c.h.b16 %v210
    %v507 = vunpack.c.l.b16 %v211
    %v508 = vunpack.c.l.b16 %v212
    %v509 = vunpack.c.h.b16 %v212
    %v510 = vunpack.c.l.b16 %v213
    %v511 = vunpack.c.l.b16 %v214
    %v512 = vunpack.c.h.b16 %v214
    %v513 = vunpack.c.l.b16 %v215
    %v514 = vunpack.c.l.b16 %v216
    %v515 = vunpack.c.h.b16 %v216
    %v516 = vunpack.c.l.b16 %v217
    %v517 = vunpack.c.l.b16 %v218
    %v518 = vunpack.c.h.b16 %v218
    %v519 = vunpack.c.l.b16 %v219
    %v520 = vunpack.c.l.b16 %v220
    %v521 = vunpack.c.h.b16 %v220
    %v522 = vunpack.c.l.b16 %v221
    %v523 = vunpack.c.l.b16 %v222
    %v524 = vunpack.c.h.b16 %v222
    %v525 = vunpack.c.l.b16 %v223
    %v526 = vunpack.c.l.b16 %v224
    %v527 = vunpack.c.h.b16 %v224
    %v528 = vunpack.c.l.b16 %v225
    %v529 = vunpack.c.l.b16 %v226
    %v530 = vunpack.c.h.b16 %v226
    %v531 = vunpack.c.l.b16 %v227
    %v532 = vunpack.c.l.b16 %v228
    %v533 = vunpack.c.h.b16 %v228
    %v534 = vunpack.c.l.b16 %v229
    %v535 = vunpack.c.l.b16 %v230
    %v536 = vunpack.c.h.b16 %v230
    %v537 = vunpack.c.l.b16 %v231
    %v538 = vunpack.c.l.b16 %v232
    %v539 = vunpack.c.h.b16 %v232
    %v540 = vunpack.c.l.b16 %v233
    %v541 = vunpack.c.l.b16 %v234
    %v542 = vunpack.c.h.b16 %v234
    %v543 = vunpack.c.l.b16 %v235
    %v544 = vunpack.c.l.b16 %v236
    %v545 = vunpack.c.h.b16 %v236
    %v546 = vunpack.c.l.b16 %v237
    %v547 = vunpack.c.l.b16 %v238
    %v548 = vunpack.c.h.b16 %v238
    %v549 = vunpack.c.l.b16 %v239
    %v550 = vunpack.c.l.b16 %v240
    %v551 = vunpack.c.h.b16 %v240
    %v552 = vunpack.c.l.b16 %v241
    %v553 = vunpack.c.l.b16 %v242
    %v554 = vunpack.c.h.b16 %v242
    %v555 = vunpack.c.l.b16 %v243
    %v556 = vunpack.c.l.b16 %v244
    %v557 = vunpack.c.h.b16 %v244
    %v558 = vunpack.c.l.b16 %v245
    %v559 = vunpack.c.l.b16 %v246
    %v560 = vunpack.c.h.b16 %v246
    %v561 = vunpack.c.l.b16 %v247
    %v562 = vunpack.c.l.b16 %v248
    %v563 = vunpack.c.h.b16 %v248
    %v564 = vunpack.c.l.b16 %v249
    %v565 = vunpack.c.l.b16 %v250
    %v566 = vunpack.c.h.b16 %v250
    %v567 = vunpack.c.l.b16 %v251
    %v568 = vunpack.c.l.b16 %v252
    %v569 = vunpack.c.h.b16 %v252
    %v570 = vunpack.c.l.b16 %v253
    %v571 = vunpack.c.l.b16 %v254
    %v572 = vunpack.c.h.b16 %v254
    %v573 = vunpack.c.l.b16 %v255
    %v574 = vunpack.c.l.b16 %v256
    %v575 = vunpack.c.h.b16 %v256
    %v576 = vunpack.c.l.b16 %v257
    %v577 = vunpack.c.l.b16 %v258
    %v578 = vunpack.c.h.b16 %v258
    %v579 = vunpack.c.l.b16 %v259
    %v580 = vpack.c.b16 %v391, %v388
    %v581 = vpack.c.b16 %v392, %v389
    %v582 = vpack.c.b16 %v393, %v390
    %v583 = vpack.c.b16 %v397, %v394
    %v584 = vpack.c.b16 %v398, %v395
    %v585 = vpack.c.b16 %v399, %v396
    %v586 = vpack.c.b16 %v403, %v400
    %v587 = vpack.c.b16 %v404, %v401
    %v588 = vpack.c.b16 %v405, %v402
    %v589 = vpack.c.b16 %v409, %v406
    %v590 = vpack.c.b16 %v410, %v407
    %v591 = vpack.c.b16 %v411, %v408
    %v592 = vpack.c.b16 %v415, %v412
    %v593 = vpack.c.b16 %v416, %v413
    %v594 = vpack.c.b16 %v417, %v414
    %v595 = vpack.c.b16 %v421, %v418
    %v596 = vpack.c.b16 %v422, %v419
    %v597 = vpack.c.b16 %v423, %v420
    %v598 = vpack.c.b16 %v427, %v424
    %v599 = vpack.c.b16 %v428, %v425
    %v600 = vpack.c.b16 %v429, %v426
    %v601 = vpack.c.b16 %v433, %v430
    %v602 = vpack.c.b16 %v434, %v431
    %v603 = vpack.c.b16 %v435, %v432
    %v604 = vpack.c.b16 %v439, %v436
    %v605 = vpack.c.b16 %v440, %v437
    %v606 = vpack.c.b16 %v441, %v438
    %v607 = vpack.c.b16 %v445, %v442
    %v608 = vpack.c.b16 %v446, %v443
    %v609 = vpack.c.b16 %v447, %v444
    %v610 = vpack.c.b16 %v451, %v448
    %v611 = vpack.c.b16 %v452, %v449
    %v612 = vpack.c.b16 %v453, %v450
    %v613 = vpack.c.b16 %v457, %v454
    %v614 = vpack.c.b16 %v458, %v455
    %v615 = vpack.c.b16 %v459, %v456
    %v616 = vpack.c.b16 %v463, %v460
    %v617 = vpack.c.b16 %v464, %v461
    %v618 = vpack.c.b16 %v465, %v462
    %v619 = vpack.c.b16 %v469, %v466
    %v620 = vpack.c.b16 %v470, %v467
    %v621 = vpack.c.b16 %v471, %v468
    %v622 = vpack.c.b16 %v475, %v472
    %v623 = vpack.c.b16 %v476, %v473
    %v624 = vpack.c.b16 %v477, %v474
    %v625 = vpack.c.b16 %v481, %v478
    %v626 = vpack.c.b16 %v482, %v479
    %v627 = vpack.c.b16 %v483, %v480
    %v628 = vpack.c.b16 %v487, %v484
    %v629 = vpack.c.b16 %v488, %v485
    %v630 = vpack.c.b16 %v489, %v486
    %v631 = vpack.c.b16 %v493, %v490
    %v632 = vpack.c.b16 %v494, %v491
    %v633 = vpack.c.b16 %v495, %v492
    %v634 = vpack.c.b16 %v499, %v496
    %v635 = vpack.c.b16 %v500, %v497
    %v636 = vpack.c.b16 %v501, %v498
    %v637 = vpack.c.b16 %v505, %v502
    %v638 = vpack.c.b16 %v506, %v503
    %v639 = vpack.c.b16 %v507, %v504
    %v640 = vpack.c.b16 %v511, %v508
    %v641 = vpack.c.b16 %v512, %v509
    %v642 = vpack.c.b16 %v513, %v510
    %v643 = vpack.c.b16 %v517, %v514
    %v644 = vpack.c.b16 %v518, %v515
    %v645 = vpack.c.b16 %v519, %v516
    %v646 = vpack.c.b16 %v523, %v520
    %v647 = vpack.c.b16 %v524, %v521
    %v648 = vpack.c.b16 %v525, %v522
    %v649 = vpack.c.b16 %v529, %v526
    %v650 = vpack.c.b16 %v530, %v527
    %v651 = vpack.c.b16 %v531, %v528
    %v652 = vpack.c.b16 %v535, %v532
    %v653 = vpack.c.b16 %v536, %v533
    %v654 = vpack.c.b16 %v537, %v534
    %v655 = vpack.c.b16 %v541, %v538
    %v656 = vpack.c.b16 %v542, %v539
    %v657 = vpack.c.b16 %v543, %v540
    %v658 = vpack.c.b16 %v547, %v544
    %v659 = vpack.c.b16 %v548, %v545
    %v660 = vpack.c.b16 %v549, %v546
    %v661 = vpack.c.b16 %v553, %v550
    %v662 = vpack.c.b16 %v554, %v551
    %v663 = vpack.c.b16 %v555, %v552
    %v664 = vpack.c.b16 %v559, %v556
    %v665 = vpack.c.b16 %v560, %v557
    %v666 = vpack.c.b16 %v561, %v558
    %v667 = vpack.c.b16 %v565, %v562
    %v668 = vpack.c.b16 %v566, %v563
    %v669 = vpack.c.b16 %v567, %v564
    %v670 = vpack.c.b16 %v571, %v568
    %v671 = vpack.c.b16 %v572, %v569
    %v672 = vpack.c.b16 %v573, %v570
    %v673 = vpack.c.b16 %v577, %v574
    %v674 = vpack.c.b16 %v578, %v575
    %v675 = vpack.c.b16 %v579, %v576
    %772 = vmatprep.subr.bf16.mxu0 %v602
    %773 = vmatpush1.bf16.msra.mxu0 %v601
    %774 = vmatprep.subr.bf16.mxu0 %v599
    %775 = vmatpush1.bf16.msra.mxu0 %v598
    %776 = vmatprep.subr.bf16.mxu0 %v596
    %777 = vmatpush1.bf16.msra.mxu0 %v595
    %778 = vmatprep.subr.bf16.mxu0 %v593
    %779 = vmatpush1.bf16.msra.mxu0 %v592
    %780 = vmatprep.subr.bf16.mxu0 %v590
    %781 = vmatpush1.bf16.msra.mxu0 %v589
    %782 = vmatprep.subr.bf16.mxu0 %v587
    %783 = vmatpush1.bf16.msra.mxu0 %v586
    %784 = vmatprep.subr.bf16.mxu0 %v584
    %785 = vmatpush1.bf16.msra.mxu0 %v583
    %786 = vmatprep.subr.bf16.mxu0 %v581
    %787 = vmatpush1.bf16.msra.mxu0 %v580
    %788 = vmatprep.subr.bf16.mxu0 %v626
    %789 = vmatpush2.bf16.msra.mxu0 %v625
    %790 = vmatprep.subr.bf16.mxu0 %v623
    %791 = vmatpush2.bf16.msra.mxu0 %v622
    %792 = vmatprep.subr.bf16.mxu0 %v620
    %793 = vmatpush2.bf16.msra.mxu0 %v619
    %794 = vmatprep.subr.bf16.mxu0 %v617
    %795 = vmatpush2.bf16.msra.mxu0 %v616
    %796 = vmatprep.subr.bf16.mxu0 %v614
    %797 = vmatpush2.bf16.msra.mxu0 %v613
    %798 = vmatprep.subr.bf16.mxu0 %v611
    %799 = vmatpush2.bf16.msra.mxu0 %v610
    %800 = vmatprep.subr.bf16.mxu0 %v608
    %801 = vmatpush2.bf16.msra.mxu0 %v607
    %802 = vmatprep.subr.bf16.mxu0 %v605
    %803 = vmatpush2.bf16.msra.mxu0 %v604
    %804 = vmatprep.mubr.bf16.mxu0 %v129
    %805 = vmatmul.mubr.bf16.gmra.mxu0 %v128
    %v806 = vpop.f32.mrf.mxu0
    %v807 = vadd.f32 0.0, %v806
    %v808 = vpop.f32.mrf.mxu0
    %v809 = vadd.f32 0.0, %v808
    %v810 = vpop.f32.mrf.mxu0
    %v811 = vpop.f32.mrf.mxu0
    %812 = vdwg.mxu0
    %813 = vmatprep.subr.bf16.mxu0 %v650
    %814 = vmatpush1.bf16.msra.mxu0 %v649
    %815 = vmatprep.subr.bf16.mxu0 %v647
    %816 = vmatpush1.bf16.msra.mxu0 %v646
    %817 = vmatprep.subr.bf16.mxu0 %v644
    %818 = vmatpush1.bf16.msra.mxu0 %v643
    %819 = vmatprep.subr.bf16.mxu0 %v641
    %820 = vmatpush1.bf16.msra.mxu0 %v640
    %821 = vmatprep.subr.bf16.mxu0 %v638
    %822 = vmatpush1.bf16.msra.mxu0 %v637
    %823 = vmatprep.subr.bf16.mxu0 %v635
    %824 = vmatpush1.bf16.msra.mxu0 %v634
    %825 = vmatprep.subr.bf16.mxu0 %v632
    %826 = vmatpush1.bf16.msra.mxu0 %v631
    %827 = vmatprep.subr.bf16.mxu0 %v629
    %828 = vmatpush1.bf16.msra.mxu0 %v628
    %829 = vmatprep.subr.bf16.mxu0 %v674
    %830 = vmatpush2.bf16.msra.mxu0 %v673
    %831 = vmatprep.subr.bf16.mxu0 %v671
    %832 = vmatpush2.bf16.msra.mxu0 %v670
    %833 = vmatprep.subr.bf16.mxu0 %v668
    %834 = vmatpush2.bf16.msra.mxu0 %v667
    %835 = vmatprep.subr.bf16.mxu0 %v665
    %836 = vmatpush2.bf16.msra.mxu0 %v664
    %837 = vmatprep.subr.bf16.mxu0 %v662
    %838 = vmatpush2.bf16.msra.mxu0 %v661
    %839 = vmatprep.subr.bf16.mxu0 %v659
    %840 = vmatpush2.bf16.msra.mxu0 %v658
    %841 = vmatprep.subr.bf16.mxu0 %v656
    %842 = vmatpush2.bf16.msra.mxu0 %v655
    %843 = vmatprep.subr.bf16.mxu0 %v653
    %844 = vmatpush2.bf16.msra.mxu0 %v652
    %845 = vmatprep.mubr.bf16.mxu0 %v131
    %846 = vmatmul.mubr.bf16.gmra.mxu0 %v130
    %v847 = vpop.f32.mrf.mxu0
    %v848 = vadd.f32 %v807, %v847
    %v849 = vpop.f32.mrf.mxu0
    %v850 = vadd.f32 %v809, %v849
    %v851 = vpop.f32.mrf.mxu0
    %v852 = vpop.f32.mrf.mxu0
    %853 = vdwg.mxu0
    %854 = vmatprep.subr.bf16.mxu0 0
    %855 = vmatpush1.bf16.msra.mxu0 %v603
    %856 = vmatprep.subr.bf16.mxu0 0
    %857 = vmatpush1.bf16.msra.mxu0 %v600
    %858 = vmatprep.subr.bf16.mxu0 0
    %859 = vmatpush1.bf16.msra.mxu0 %v597
    %860 = vmatprep.subr.bf16.mxu0 0
    %861 = vmatpush1.bf16.msra.mxu0 %v594
    %862 = vmatprep.subr.bf16.mxu0 0
    %863 = vmatpush1.bf16.msra.mxu0 %v591
    %864 = vmatprep.subr.bf16.mxu0 0
    %865 = vmatpush1.bf16.msra.mxu0 %v588
    %866 = vmatprep.subr.bf16.mxu0 0
    %867 = vmatpush1.bf16.msra.mxu0 %v585
    %868 = vmatprep.subr.bf16.mxu0 0
    %869 = vmatpush1.bf16.msra.mxu0 %v582
    %870 = vmatprep.subr.bf16.mxu0 0
    %871 = vmatpush2.bf16.msra.mxu0 %v627
    %872 = vmatprep.subr.bf16.mxu0 0
    %873 = vmatpush2.bf16.msra.mxu0 %v624
    %874 = vmatprep.subr.bf16.mxu0 0
    %875 = vmatpush2.bf16.msra.mxu0 %v621
    %876 = vmatprep.subr.bf16.mxu0 0
    %877 = vmatpush2.bf16.msra.mxu0 %v618
    %878 = vmatprep.subr.bf16.mxu0 0
    %879 = vmatpush2.bf16.msra.mxu0 %v615
    %880 = vmatprep.subr.bf16.mxu0 0
    %881 = vmatpush2.bf16.msra.mxu0 %v612
    %882 = vmatprep.subr.bf16.mxu0 0
    %883 = vmatpush2.bf16.msra.mxu0 %v609
    %884 = vmatprep.subr.bf16.mxu0 0
    %885 = vmatpush2.bf16.msra.mxu0 %v606
    %886 = vmatprep.mubr.bf16.mxu0 %v129
    %887 = vmatmul.mubr.bf16.gmra.mxu0 %v128
    %v888 = vpop.f32.mrf.mxu0
    %v889 = vadd.f32 0.0, %v888
    %v890 = vpop.f32.mrf.mxu0
    %v891 = vpop.f32.mrf.mxu0
    %v892 = vpop.f32.mrf.mxu0
    %893 = vdwg.mxu0
    %894 = vmatprep.subr.bf16.mxu0 0
    %895 = vmatpush1.bf16.msra.mxu0 %v651
    %896 = vmatprep.subr.bf16.mxu0 0
    %897 = vmatpush1.bf16.msra.mxu0 %v648
    %898 = vmatprep.subr.bf16.mxu0 0
    %899 = vmatpush1.bf16.msra.mxu0 %v645
    %900 = vmatprep.subr.bf16.mxu0 0
    %901 = vmatpush1.bf16.msra.mxu0 %v642
    %902 = vmatprep.subr.bf16.mxu0 0
    %903 = vmatpush1.bf16.msra.mxu0 %v639
    %904 = vmatprep.subr.bf16.mxu0 0
    %905 = vmatpush1.bf16.msra.mxu0 %v636
    %906 = vmatprep.subr.bf16.mxu0 0
    %907 = vmatpush1.bf16.msra.mxu0 %v633
    %908 = vmatprep.subr.bf16.mxu0 0
    %909 = vmatpush1.bf16.msra.mxu0 %v630
    %910 = vmatprep.subr.bf16.mxu0 0
    %911 = vmatpush2.bf16.msra.mxu0 %v675
    %912 = vmatprep.subr.bf16.mxu0 0
    %913 = vmatpush2.bf16.msra.mxu0 %v672
    %914 = vmatprep.subr.bf16.mxu0 0
    %915 = vmatpush2.bf16.msra.mxu0 %v669
    %916 = vmatprep.subr.bf16.mxu0 0
    %917 = vmatpush2.bf16.msra.mxu0 %v666
    %918 = vmatprep.subr.bf16.mxu0 0
    %919 = vmatpush2.bf16.msra.mxu0 %v663
    %920 = vmatprep.subr.bf16.mxu0 0
    %921 = vmatpush2.bf16.msra.mxu0 %v660
    %922 = vmatprep.subr.bf16.mxu0 0
    %923 = vmatpush2.bf16.msra.mxu0 %v657
    %924 = vmatprep.subr.bf16.mxu0 0
    %925 = vmatpush2.bf16.msra.mxu0 %v654
    %926 = vmatprep.mubr.bf16.mxu0 %v131
    %927 = vmatmul.mubr.bf16.gmra.mxu0 %v130
    %v928 = vpop.f32.mrf.mxu0
    %v929 = vadd.f32 %v889, %v928
    %v930 = vpop.f32.mrf.mxu0
    %v931 = vpop.f32.mrf.mxu0
    %v932 = vpop.f32.mrf.mxu0
    %933 = vdwg.mxu0
    %v934 = vld [vmem:[#allocation10] ss:$4 sm:$0x7]
    %s935 = scalar_lea.vmem [#allocation10], 1
    %v936 = vld [vmem:[%s935] ss:$4 sm:$0x7]
    %vm937 = vcmask 1043456
    %v938 = vsel %vm937, %v848, 0.0
    %v939 = vrot.slane %v938, 4
    %v940 = vadd.f32 %v938, %v939
    %v941 = vrot.slane %v940, 2
    %v942 = vadd.f32 %v940, %v941
    %v943 = vrot.slane %v942, 1
    %v944 = vadd.f32 %v942, %v943
    %v945 = vsel %vm937, %v850, 0.0
    %v946 = vrot.slane %v945, 4
    %v947 = vadd.f32 %v945, %v946
    %v948 = vrot.slane %v947, 2
    %v949 = vadd.f32 %v947, %v948
    %v950 = vrot.slane %v949, 1
    %v951 = vadd.f32 %v949, %v950
    %v952 = vsel %vm937, %v929, 0.0
    %v953 = vrot.slane %v952, 4
    %v954 = vadd.f32 %v952, %v953
    %v955 = vrot.slane %v954, 2
    %v956 = vadd.f32 %v954, %v955
    %v957 = vrot.slane %v956, 1
    %v958 = vadd.f32 %v956, %v957
    %v959 = vrcp.pop 4.0
    %v960 = vmul.f32 %v944, %v959
    %v961 = vmul.f32 %v951, %v959
    %v962 = vmul.f32 %v958, %v959
    %v963 = vmul.f32 %v848, %v848
    %v964 = vmul.f32 %v850, %v850
    %v965 = vmul.f32 %v929, %v929
    %v966 = vsel %vm937, %v963, 0.0
    %v967 = vrot.slane %v966, 4
    %v968 = vadd.f32 %v966, %v967
    %v969 = vrot.slane %v968, 2
    %v970 = vadd.f32 %v968, %v969
    %v971 = vrot.slane %v970, 1
    %v972 = vadd.f32 %v970, %v971
    %v973 = vsel %vm937, %v964, 0.0
    %v974 = vrot.slane %v973, 4
    %v975 = vadd.f32 %v973, %v974
    %v976 = vrot.slane %v975, 2
    %v977 = vadd.f32 %v975, %v976
    %v978 = vrot.slane %v977, 1
    %v979 = vadd.f32 %v977, %v978
    %v980 = vsel %vm937, %v965, 0.0
    %v981 = vrot.slane %v980, 4
    %v982 = vadd.f32 %v980, %v981
    %v983 = vrot.slane %v982, 2
    %v984 = vadd.f32 %v982, %v983
    %v985 = vrot.slane %v984, 1
    %v986 = vadd.f32 %v984, %v985
    %v987 = vmul.f32 %v972, %v959
    %v988 = vmul.f32 %v979, %v959
    %v989 = vmul.f32 %v986, %v959
    %v990 = vmul.f32 %v960, %v960
    %v991 = vmul.f32 %v961, %v961
    %v992 = vmul.f32 %v962, %v962
    %v993 = vsub.f32 %v987, %v990
    %v994 = vsub.f32 %v988, %v991
    %v995 = vsub.f32 %v989, %v992
    %v996 = vmax.f32 %v993, 0.0
    %v997 = vmax.f32 %v994, 0.0
    %v998 = vmax.f32 %v995, 0.0
    %v999 = vadd.f32 %v996, 1e-05
    %v1000 = vadd.f32 %v997, 1e-05
    %v1001 = vadd.f32 %v998, 1e-05
    %v1002 = vrsqrt.pop %v999
    %v1003 = vrsqrt.pop %v1000
    %v1004 = vrsqrt.pop %v1001
    %v1008 = vcombine.low %v1002, %v1003
    %v1010 = vunpack.c.l.s4 1966171168
    %v1011 = vunpack.c.0.s8 %v1010
    %v1012 = vlaneseq
    %v1013 = vshrl.u32 %v1012, 7
    %v1014 = vsub.s32 %v1011, %v1013
    %v1015 = vrot.slane %v1008, %v1014
    %v1017 = vunpack.c.l.s4 1966171168
    %v1018 = vunpack.c.0.s8 %v1017
    %v1019 = vlaneseq
    %v1020 = vshrl.u32 %v1019, 7
    %v1021 = vsub.s32 %v1018, %v1020
    %v1022 = vrot.slane %v1004, %v1021
    %v1023 = vcombine.low %v1015, %v1022
    %v1025 = vunpack.c.l.s4 1966171168
    %v1026 = vunpack.c.0.s8 %v1025
    %v1027 = vlaneseq
    %v1028 = vshrl.u32 %v1027, 7
    %v1029 = vsub.s32 %v1026, %v1028
    %v1030 = vrot.slane %v1023, %v1029
    %v1032 = vmul.f32 %v934, %v1030
    %v1034 = vlaneseq
    %v1035 = vshrl.u32 %v1034, 7
    %v1036 = vsub.s32 0, %v1035
    %v1037 = vrot.slane %v1032, %v1036
    %v1038 = vlaneseq
    %v1039 = vshrl.u32 %v1038, 7
    %v1040 = vsub.s32 1, %v1039
    %v1041 = vrot.slane %v1032, %v1040
    %v1042 = vlaneseq
    %v1043 = vshrl.u32 %v1042, 7
    %v1044 = vsub.s32 2, %v1043
    %v1045 = vrot.slane %v1032, %v1044
    %v1049 = vmul.f32 %v960, %v1037
    %v1050 = vmul.f32 %v961, %v1041
    %v1051 = vmul.f32 %v962, %v1045
    %v1055 = vcombine.low %v1049, %v1050
    %v1057 = vunpack.c.l.s4 1966171168
    %v1058 = vunpack.c.0.s8 %v1057
    %v1059 = vlaneseq
    %v1060 = vshrl.u32 %v1059, 7
    %v1061 = vsub.s32 %v1058, %v1060
    %v1062 = vrot.slane %v1055, %v1061
    %v1064 = vunpack.c.l.s4 1966171168
    %v1065 = vunpack.c.0.s8 %v1064
    %v1066 = vlaneseq
    %v1067 = vshrl.u32 %v1066, 7
    %v1068 = vsub.s32 %v1065, %v1067
    %v1069 = vrot.slane %v1051, %v1068
    %v1070 = vcombine.low %v1062, %v1069
    %v1072 = vunpack.c.l.s4 1966171168
    %v1073 = vunpack.c.0.s8 %v1072
    %v1074 = vlaneseq
    %v1075 = vshrl.u32 %v1074, 7
    %v1076 = vsub.s32 %v1073, %v1075
    %v1077 = vrot.slane %v1070, %v1076
    %v1079 = vsub.f32 %v936, %v1077
    %v1080 = vmul.f32 %v848, %v1037
    %v1081 = vmul.f32 %v850, %v1041
    %v1082 = vmul.f32 %v929, %v1045
    %v1084 = vlaneseq
    %v1085 = vshrl.u32 %v1084, 7
    %v1086 = vsub.s32 0, %v1085
    %v1087 = vrot.slane %v1079, %v1086
    %v1088 = vlaneseq
    %v1089 = vshrl.u32 %v1088, 7
    %v1090 = vsub.s32 1, %v1089
    %v1091 = vrot.slane %v1079, %v1090
    %v1092 = vlaneseq
    %v1093 = vshrl.u32 %v1092, 7
    %v1094 = vsub.s32 2, %v1093
    %v1095 = vrot.slane %v1079, %v1094
    %v1099 = vadd.f32 %v1080, %v1087
    %v1100 = vadd.f32 %v1081, %v1091
    %v1101 = vadd.f32 %v1082, %v1095
    %v1102 = vmax.f32 %v1099, 0.0
    %v1103 = vmax.f32 %v1100, 0.0
    %v1104 = vmax.f32 %v1101, 0.0
    %v1105 = vpack.c.bf16 %v1102, %v1102
    %v1106 = vpack.c.bf16 %v1103, %v1103
    %v1107 = vpack.c.bf16 %v1104, %v1104
    %s1108 = smul.u32 4, 3
    %s1109 = smul.u32 %s1108, 16
    %s1110 = smul.u32 %s1109, 4
    %s1111 = sshll.u32 %s1110, 4
    %1112 = dma.done %s70, %s1111
    %v1113 = vld [vmem:[#allocation3] sm:$0xff]
    %v1114 = vld [vmem:[#allocation3 + $0x8] sm:$0xff]
    %v1115 = vld [vmem:[#allocation3 + $0x10] sm:$0xff]
    %v1116 = vld [vmem:[#allocation3 + $0x18] sm:$0xff]
    %v1117 = vld [vmem:[#allocation3 + $0x20] sm:$0xff]
    %v1118 = vld [vmem:[#allocation3 + $0x28] sm:$0xff]
    %v1119 = vld [vmem:[#allocation3 + $0x30] sm:$0xff]
    %v1120 = vld [vmem:[#allocation3 + $0x38] sm:$0xff]
    %v1121 = vld [vmem:[#allocation3 + $0x40] sm:$0xff]
    %v1122 = vld [vmem:[#allocation3 + $0x48] sm:$0xff]
    %v1123 = vld [vmem:[#allocation3 + $0x50] sm:$0xff]
    %v1124 = vld [vmem:[#allocation3 + $0x58] sm:$0xff]
    %v1125 = vld [vmem:[#allocation3 + $0x60] sm:$0xff]
    %v1126 = vld [vmem:[#allocation3 + $0x68] sm:$0xff]
    %v1127 = vld [vmem:[#allocation3 + $0x70] sm:$0xff]
    %v1128 = vld [vmem:[#allocation3 + $0x78] sm:$0xff]
    %v1129 = vld [vmem:[#allocation3 + $0x80] sm:$0xff]
    %v1130 = vld [vmem:[#allocation3 + $0x88] sm:$0xff]
    %v1131 = vld [vmem:[#allocation3 + $0x90] sm:$0xff]
    %v1132 = vld [vmem:[#allocation3 + $0x98] sm:$0xff]
    %v1133 = vld [vmem:[#allocation3 + $0xa0] sm:$0xff]
    %v1134 = vld [vmem:[#allocation3 + $0xa8] sm:$0xff]
    %v1135 = vld [vmem:[#allocation3 + $0xb0] sm:$0xff]
    %v1136 = vld [vmem:[#allocation3 + $0xb8] sm:$0xff]
    %v1137 = vld [vmem:[#allocation3 + $0xc0] sm:$0xff]
    %v1138 = vld [vmem:[#allocation3 + $0xc8] sm:$0xff]
    %v1139 = vld [vmem:[#allocation3 + $0xd0] sm:$0xff]
    %v1140 = vld [vmem:[#allocation3 + $0xd8] sm:$0xff]
    %v1141 = vld [vmem:[#allocation3 + $0xe0] sm:$0xff]
    %v1142 = vld [vmem:[#allocation3 + $0xe8] sm:$0xff]
    %v1143 = vld [vmem:[#allocation3 + $0xf0] sm:$0xff]
    %v1144 = vld [vmem:[#allocation3 + $0xf8] sm:$0xff]
    %v1177 = vunpack.c.l.b16 %v1113
    %v1178 = vunpack.c.h.b16 %v1113
    %v1179 = vunpack.c.l.b16 %v1114
    %v1180 = vunpack.c.h.b16 %v1114
    %v1181 = vunpack.c.l.b16 %v1115
    %v1182 = vunpack.c.h.b16 %v1115
    %v1183 = vunpack.c.l.b16 %v1116
    %v1184 = vunpack.c.h.b16 %v1116
    %v1185 = vunpack.c.l.b16 %v1117
    %v1186 = vunpack.c.h.b16 %v1117
    %v1187 = vunpack.c.l.b16 %v1118
    %v1188 = vunpack.c.h.b16 %v1118
    %v1189 = vunpack.c.l.b16 %v1119
    %v1190 = vunpack.c.h.b16 %v1119
    %v1191 = vunpack.c.l.b16 %v1120
    %v1192 = vunpack.c.h.b16 %v1120
    %v1193 = vunpack.c.l.b16 %v1121
    %v1194 = vunpack.c.h.b16 %v1121
    %v1195 = vunpack.c.l.b16 %v1122
    %v1196 = vunpack.c.h.b16 %v1122
    %v1197 = vunpack.c.l.b16 %v1123
    %v1198 = vunpack.c.h.b16 %v1123
    %v1199 = vunpack.c.l.b16 %v1124
    %v1200 = vunpack.c.h.b16 %v1124
    %v1201 = vunpack.c.l.b16 %v1125
    %v1202 = vunpack.c.h.b16 %v1125
    %v1203 = vunpack.c.l.b16 %v1126
    %v1204 = vunpack.c.h.b16 %v1126
    %v1205 = vunpack.c.l.b16 %v1127
    %v1206 = vunpack.c.h.b16 %v1127
    %v1207 = vunpack.c.l.b16 %v1128
    %v1208 = vunpack.c.h.b16 %v1128
    %v1209 = vunpack.c.l.b16 %v1129
    %v1210 = vunpack.c.h.b16 %v1129
    %v1211 = vunpack.c.l.b16 %v1130
    %v1212 = vunpack.c.h.b16 %v1130
    %v1213 = vunpack.c.l.b16 %v1131
    %v1214 = vunpack.c.h.b16 %v1131
    %v1215 = vunpack.c.l.b16 %v1132
    %v1216 = vunpack.c.h.b16 %v1132
    %v1217 = vunpack.c.l.b16 %v1133
    %v1218 = vunpack.c.h.b16 %v1133
    %v1219 = vunpack.c.l.b16 %v1134
    %v1220 = vunpack.c.h.b16 %v1134
    %v1221 = vunpack.c.l.b16 %v1135
    %v1222 = vunpack.c.h.b16 %v1135
    %v1223 = vunpack.c.l.b16 %v1136
    %v1224 = vunpack.c.h.b16 %v1136
    %v1225 = vunpack.c.l.b16 %v1137
    %v1226 = vunpack.c.h.b16 %v1137
    %v1227 = vunpack.c.l.b16 %v1138
    %v1228 = vunpack.c.h.b16 %v1138
    %v1229 = vunpack.c.l.b16 %v1139
    %v1230 = vunpack.c.h.b16 %v1139
    %v1231 = vunpack.c.l.b16 %v1140
    %v1232 = vunpack.c.h.b16 %v1140
    %v1233 = vunpack.c.l.b16 %v1141
    %v1234 = vunpack.c.h.b16 %v1141
    %v1235 = vunpack.c.l.b16 %v1142
    %v1236 = vunpack.c.h.b16 %v1142
    %v1237 = vunpack.c.l.b16 %v1143
    %v1238 = vunpack.c.h.b16 %v1143
    %v1239 = vunpack.c.l.b16 %v1144
    %v1240 = vunpack.c.h.b16 %v1144
    %v1241 = vpack.c.b16 %v1181, %v1177
    %v1242 = vpack.c.b16 %v1182, %v1178
    %v1243 = vpack.c.b16 %v1183, %v1179
    %v1244 = vpack.c.b16 %v1184, %v1180
    %v1245 = vpack.c.b16 %v1189, %v1185
    %v1246 = vpack.c.b16 %v1190, %v1186
    %v1247 = vpack.c.b16 %v1191, %v1187
    %v1248 = vpack.c.b16 %v1192, %v1188
    %v1249 = vpack.c.b16 %v1197, %v1193
    %v1250 = vpack.c.b16 %v1198, %v1194
    %v1251 = vpack.c.b16 %v1199, %v1195
    %v1252 = vpack.c.b16 %v1200, %v1196
    %v1253 = vpack.c.b16 %v1205, %v1201
    %v1254 = vpack.c.b16 %v1206, %v1202
    %v1255 = vpack.c.b16 %v1207, %v1203
    %v1256 = vpack.c.b16 %v1208, %v1204
    %v1257 = vpack.c.b16 %v1213, %v1209
    %v1258 = vpack.c.b16 %v1214, %v1210
    %v1259 = vpack.c.b16 %v1215, %v1211
    %v1260 = vpack.c.b16 %v1216, %v1212
    %v1261 = vpack.c.b16 %v1221, %v1217
    %v1262 = vpack.c.b16 %v1222, %v1218
    %v1263 = vpack.c.b16 %v1223, %v1219
    %v1264 = vpack.c.b16 %v1224, %v1220
    %v1265 = vpack.c.b16 %v1229, %v1225
    %v1266 = vpack.c.b16 %v1230, %v1226
    %v1267 = vpack.c.b16 %v1231, %v1227
    %v1268 = vpack.c.b16 %v1232, %v1228
    %v1269 = vpack.c.b16 %v1237, %v1233
    %v1270 = vpack.c.b16 %v1238, %v1234
    %v1271 = vpack.c.b16 %v1239, %v1235
    %v1272 = vpack.c.b16 %v1240, %v1236
    %1305 = vmatprep.subr.bf16.mxu0 %v1270
    %1306 = vmatpush1.bf16.msra.mxu0 %v1269
    %1307 = vmatprep.subr.bf16.mxu0 %v1266
    %1308 = vmatpush1.bf16.msra.mxu0 %v1265
    %1309 = vmatprep.subr.bf16.mxu0 %v1262
    %1310 = vmatpush1.bf16.msra.mxu0 %v1261
    %1311 = vmatprep.subr.bf16.mxu0 %v1258
    %1312 = vmatpush1.bf16.msra.mxu0 %v1257
    %1313 = vmatprep.subr.bf16.mxu0 %v1254
    %1314 = vmatpush1.bf16.msra.mxu0 %v1253
    %1315 = vmatprep.subr.bf16.mxu0 %v1250
    %1316 = vmatpush1.bf16.msra.mxu0 %v1249
    %1317 = vmatprep.subr.bf16.mxu0 %v1246
    %1318 = vmatpush1.bf16.msra.mxu0 %v1245
    %1319 = vmatprep.subr.bf16.mxu0 %v1242
    %1320 = vmatpush1.bf16.msra.mxu0 %v1241
    %1321 = vmatprep.subr.bf16.mxu0 0
    %1322 = vmatpush2.bf16.msra.mxu0 0
    %1323 = vmatprep.subr.bf16.mxu0 0
    %1324 = vmatpush2.bf16.msra.mxu0 0
    %1325 = vmatprep.subr.bf16.mxu0 0
    %1326 = vmatpush2.bf16.msra.mxu0 0
    %1327 = vmatprep.subr.bf16.mxu0 0
    %1328 = vmatpush2.bf16.msra.mxu0 0
    %1329 = vmatprep.subr.bf16.mxu0 0
    %1330 = vmatpush2.bf16.msra.mxu0 0
    %1331 = vmatprep.subr.bf16.mxu0 0
    %1332 = vmatpush2.bf16.msra.mxu0 0
    %1333 = vmatprep.subr.bf16.mxu0 0
    %1334 = vmatpush2.bf16.msra.mxu0 0
    %1335 = vmatprep.subr.bf16.mxu0 0
    %1336 = vmatpush2.bf16.msra.mxu0 0
    %1337 = vmatprep.mubr.bf16.mxu0 0
    %1338 = vmatmul.mubr.bf16.gmra.mxu0 %v1105
    %v1339 = vpop.f32.mrf.mxu0
    %v1340 = vadd.f32 0.0, %v1339
    %v1341 = vpop.f32.mrf.mxu0
    %v1342 = vadd.f32 0.0, %v1341
    %v1343 = vpop.f32.mrf.mxu0
    %v1344 = vpop.f32.mrf.mxu0
    %1345 = vdwg.mxu0
    %1346 = vmatprep.subr.bf16.mxu0 %v1272
    %1347 = vmatpush1.bf16.msra.mxu0 %v1271
    %1348 = vmatprep.subr.bf16.mxu0 %v1268
    %1349 = vmatpush1.bf16.msra.mxu0 %v1267
    %1350 = vmatprep.subr.bf16.mxu0 %v1264
    %1351 = vmatpush1.bf16.msra.mxu0 %v1263
    %1352 = vmatprep.subr.bf16.mxu0 %v1260
    %1353 = vmatpush1.bf16.msra.mxu0 %v1259
    %1354 = vmatprep.subr.bf16.mxu0 %v1256
    %1355 = vmatpush1.bf16.msra.mxu0 %v1255
    %1356 = vmatprep.subr.bf16.mxu0 %v1252
    %1357 = vmatpush1.bf16.msra.mxu0 %v1251
    %1358 = vmatprep.subr.bf16.mxu0 %v1248
    %1359 = vmatpush1.bf16.msra.mxu0 %v1247
    %1360 = vmatprep.subr.bf16.mxu0 %v1244
    %1361 = vmatpush1.bf16.msra.mxu0 %v1243
    %1362 = vmatprep.subr.bf16.mxu0 0
    %1363 = vmatpush2.bf16.msra.mxu0 0
    %1364 = vmatprep.subr.bf16.mxu0 0
    %1365 = vmatpush2.bf16.msra.mxu0 0
    %1366 = vmatprep.subr.bf16.mxu0 0
    %1367 = vmatpush2.bf16.msra.mxu0 0
    %1368 = vmatprep.subr.bf16.mxu0 0
    %1369 = vmatpush2.bf16.msra.mxu0 0
    %1370 = vmatprep.subr.bf16.mxu0 0
    %1371 = vmatpush2.bf16.msra.mxu0 0
    %1372 = vmatprep.subr.bf16.mxu0 0
    %1373 = vmatpush2.bf16.msra.mxu0 0
    %1374 = vmatprep.subr.bf16.mxu0 0
    %1375 = vmatpush2.bf16.msra.mxu0 0
    %1376 = vmatprep.subr.bf16.mxu0 0
    %1377 = vmatpush2.bf16.msra.mxu0 0
    %1378 = vmatprep.mubr.bf16.mxu0 0
    %1379 = vmatmul.mubr.bf16.gmra.mxu0 %v1105
    %v1380 = vpop.f32.mrf.mxu0
    %v1381 = vadd.f32 0.0, %v1380
    %v1382 = vpop.f32.mrf.mxu0
    %v1383 = vadd.f32 0.0, %v1382
    %v1384 = vpop.f32.mrf.mxu0
    %v1385 = vpop.f32.mrf.mxu0
    %1386 = vdwg.mxu0
    %v1387 = vld [vmem:[#allocation12] ss:$8 sm:$0xf]
    %s1388 = scalar_lea.vmem [#allocation12], 3
    %v1389 = vld [vmem:[%s1388] ss:$8 sm:$0xf]
    %v1390 = vsel %vm937, %v1340, 0.0
    %v1391 = vrot.slane %v1390, 4
    %v1392 = vadd.f32 %v1390, %v1391
    %v1393 = vrot.slane %v1392, 2
    %v1394 = vadd.f32 %v1392, %v1393
    %v1395 = vrot.slane %v1394, 1
    %v1396 = vadd.f32 %v1394, %v1395
    %v1397 = vsel %vm937, %v1342, 0.0
    %v1398 = vrot.slane %v1397, 4
    %v1399 = vadd.f32 %v1397, %v1398
    %v1400 = vrot.slane %v1399, 2
    %v1401 = vadd.f32 %v1399, %v1400
    %v1402 = vrot.slane %v1401, 1
    %v1403 = vadd.f32 %v1401, %v1402
    %v1404 = vsel %vm937, %v1381, 0.0
    %v1405 = vrot.slane %v1404, 4
    %v1406 = vadd.f32 %v1404, %v1405
    %v1407 = vrot.slane %v1406, 2
    %v1408 = vadd.f32 %v1406, %v1407
    %v1409 = vrot.slane %v1408, 1
    %v1410 = vadd.f32 %v1408, %v1409
    %v1411 = vsel %vm937, %v1383, 0.0
    %v1412 = vrot.slane %v1411, 4
    %v1413 = vadd.f32 %v1411, %v1412
    %v1414 = vrot.slane %v1413, 2
    %v1415 = vadd.f32 %v1413, %v1414
    %v1416 = vrot.slane %v1415, 1
    %v1417 = vadd.f32 %v1415, %v1416
    %v1418 = vmul.f32 %v1396, %v959
    %v1419 = vmul.f32 %v1403, %v959
    %v1420 = vmul.f32 %v1410, %v959
    %v1421 = vmul.f32 %v1417, %v959
    %v1422 = vmul.f32 %v1340, %v1340
    %v1423 = vmul.f32 %v1342, %v1342
    %v1424 = vmul.f32 %v1381, %v1381
    %v1425 = vmul.f32 %v1383, %v1383
    %v1426 = vsel %vm937, %v1422, 0.0
    %v1427 = vrot.slane %v1426, 4
    %v1428 = vadd.f32 %v1426, %v1427
    %v1429 = vrot.slane %v1428, 2
    %v1430 = vadd.f32 %v1428, %v1429
    %v1431 = vrot.slane %v1430, 1
    %v1432 = vadd.f32 %v1430, %v1431
    %v1433 = vsel %vm937, %v1423, 0.0
    %v1434 = vrot.slane %v1433, 4
    %v1435 = vadd.f32 %v1433, %v1434
    %v1436 = vrot.slane %v1435, 2
    %v1437 = vadd.f32 %v1435, %v1436
    %v1438 = vrot.slane %v1437, 1
    %v1439 = vadd.f32 %v1437, %v1438
    %v1440 = vsel %vm937, %v1424, 0.0
    %v1441 = vrot.slane %v1440, 4
    %v1442 = vadd.f32 %v1440, %v1441
    %v1443 = vrot.slane %v1442, 2
    %v1444 = vadd.f32 %v1442, %v1443
    %v1445 = vrot.slane %v1444, 1
    %v1446 = vadd.f32 %v1444, %v1445
    %v1447 = vsel %vm937, %v1425, 0.0
    %v1448 = vrot.slane %v1447, 4
    %v1449 = vadd.f32 %v1447, %v1448
    %v1450 = vrot.slane %v1449, 2
    %v1451 = vadd.f32 %v1449, %v1450
    %v1452 = vrot.slane %v1451, 1
    %v1453 = vadd.f32 %v1451, %v1452
    %v1454 = vmul.f32 %v1432, %v959
    %v1455 = vmul.f32 %v1439, %v959
    %v1456 = vmul.f32 %v1446, %v959
    %v1457 = vmul.f32 %v1453, %v959
    %v1458 = vmul.f32 %v1418, %v1418
    %v1459 = vmul.f32 %v1419, %v1419
    %v1460 = vmul.f32 %v1420, %v1420
    %v1461 = vmul.f32 %v1421, %v1421
    %v1462 = vsub.f32 %v1454, %v1458
    %v1463 = vsub.f32 %v1455, %v1459
    %v1464 = vsub.f32 %v1456, %v1460
    %v1465 = vsub.f32 %v1457, %v1461
    %v1466 = vmax.f32 %v1462, 0.0
    %v1467 = vmax.f32 %v1463, 0.0
    %v1468 = vmax.f32 %v1464, 0.0
    %v1469 = vmax.f32 %v1465, 0.0
    %v1470 = vadd.f32 %v1466, 1e-05
    %v1471 = vadd.f32 %v1467, 1e-05
    %v1472 = vadd.f32 %v1468, 1e-05
    %v1473 = vadd.f32 %v1469, 1e-05
    %v1474 = vrsqrt.pop %v1470
    %v1475 = vrsqrt.pop %v1471
    %v1476 = vrsqrt.pop %v1472
    %v1477 = vrsqrt.pop %v1473
    %v1482 = vcombine.low %v1474, %v1475
    %v1483 = vcombine.low %v1476, %v1477
    %v1485 = vunpack.c.l.s4 1966171168
    %v1486 = vunpack.c.0.s8 %v1485
    %v1487 = vlaneseq
    %v1488 = vshrl.u32 %v1487, 7
    %v1489 = vsub.s32 %v1486, %v1488
    %v1490 = vrot.slane %v1482, %v1489
    %v1492 = vunpack.c.l.s4 1966171168
    %v1493 = vunpack.c.0.s8 %v1492
    %v1494 = vlaneseq
    %v1495 = vshrl.u32 %v1494, 7
    %v1496 = vsub.s32 %v1493, %v1495
    %v1497 = vrot.slane %v1483, %v1496
    %v1498 = vcombine.low %v1490, %v1497
    %v1500 = vunpack.c.l.s4 1966171168
    %v1501 = vunpack.c.0.s8 %v1500
    %v1502 = vlaneseq
    %v1503 = vshrl.u32 %v1502, 7
    %v1504 = vsub.s32 %v1501, %v1503
    %v1505 = vrot.slane %v1498, %v1504
    %v1507 = vmul.f32 %v1387, %v1505
    %v1509 = vlaneseq
    %v1510 = vshrl.u32 %v1509, 7
    %v1511 = vsub.s32 0, %v1510
    %v1512 = vrot.slane %v1507, %v1511
    %v1513 = vlaneseq
    %v1514 = vshrl.u32 %v1513, 7
    %v1515 = vsub.s32 1, %v1514
    %v1516 = vrot.slane %v1507, %v1515
    %v1517 = vlaneseq
    %v1518 = vshrl.u32 %v1517, 7
    %v1519 = vsub.s32 2, %v1518
    %v1520 = vrot.slane %v1507, %v1519
    %v1521 = vlaneseq
    %v1522 = vshrl.u32 %v1521, 7
    %v1523 = vsub.s32 3, %v1522
    %v1524 = vrot.slane %v1507, %v1523
    %v1529 = vmul.f32 %v1418, %v1512
    %v1530 = vmul.f32 %v1419, %v1516
    %v1531 = vmul.f32 %v1420, %v1520
    %v1532 = vmul.f32 %v1421, %v1524
    %v1537 = vcombine.low %v1529, %v1530
    %v1538 = vcombine.low %v1531, %v1532
    %v1540 = vunpack.c.l.s4 1966171168
    %v1541 = vunpack.c.0.s8 %v1540
    %v1542 = vlaneseq
    %v1543 = vshrl.u32 %v1542, 7
    %v1544 = vsub.s32 %v1541, %v1543
    %v1545 = vrot.slane %v1537, %v1544
    %v1547 = vunpack.c.l.s4 1966171168
    %v1548 = vunpack.c.0.s8 %v1547
    %v1549 = vlaneseq
    %v1550 = vshrl.u32 %v1549, 7
    %v1551 = vsub.s32 %v1548, %v1550
    %v1552 = vrot.slane %v1538, %v1551
    %v1553 = vcombine.low %v1545, %v1552
    %v1555 = vunpack.c.l.s4 1966171168
    %v1556 = vunpack.c.0.s8 %v1555
    %v1557 = vlaneseq
    %v1558 = vshrl.u32 %v1557, 7
    %v1559 = vsub.s32 %v1556, %v1558
    %v1560 = vrot.slane %v1553, %v1559
    %v1562 = vsub.f32 %v1389, %v1560
    %v1563 = vmul.f32 %v1340, %v1512
    %v1564 = vmul.f32 %v1342, %v1516
    %v1565 = vmul.f32 %v1381, %v1520
    %v1566 = vmul.f32 %v1383, %v1524
    %v1568 = vlaneseq
    %v1569 = vshrl.u32 %v1568, 7
    %v1570 = vsub.s32 0, %v1569
    %v1571 = vrot.slane %v1562, %v1570
    %v1572 = vlaneseq
    %v1573 = vshrl.u32 %v1572, 7
    %v1574 = vsub.s32 1, %v1573
    %v1575 = vrot.slane %v1562, %v1574
    %v1576 = vlaneseq
    %v1577 = vshrl.u32 %v1576, 7
    %v1578 = vsub.s32 2, %v1577
    %v1579 = vrot.slane %v1562, %v1578
    %v1580 = vlaneseq
    %v1581 = vshrl.u32 %v1580, 7
    %v1582 = vsub.s32 3, %v1581
    %v1583 = vrot.slane %v1562, %v1582
    %v1588 = vadd.f32 %v1563, %v1571
    %v1589 = vadd.f32 %v1564, %v1575
    %v1590 = vadd.f32 %v1565, %v1579
    %v1591 = vadd.f32 %v1566, %v1583
    %v1592 = vxor.u32 %v1588, 2147483648
    %v1593 = vxor.u32 %v1589, 2147483648
    %v1594 = vxor.u32 %v1590, 2147483648
    %v1595 = vxor.u32 %v1591, 2147483648
    %v1596 = vmul.f32 %v1592, 1.442695
    %v1597 = vpow.pop %v1596
    %v1598 = vmul.f32 %v1593, 1.442695
    %v1599 = vpow.pop %v1598
    %v1600 = vmul.f32 %v1594, 1.442695
    %v1601 = vpow.pop %v1600
    %v1602 = vmul.f32 %v1595, 1.442695
    %v1603 = vpow.pop %v1602
    %v1604 = vadd.f32 %v1597, 1.0
    %v1605 = vadd.f32 %v1599, 1.0
    %v1606 = vadd.f32 %v1601, 1.0
    %v1607 = vadd.f32 %v1603, 1.0
    %v1608 = vrcp.pop %v1604
    %v1609 = vmul.f32 1.0, %v1608
    %v1610 = vrcp.pop %v1605
    %v1611 = vmul.f32 1.0, %v1610
    %v1612 = vrcp.pop %v1606
    %v1613 = vmul.f32 1.0, %v1612
    %v1614 = vrcp.pop %v1607
    %v1615 = vmul.f32 1.0, %v1614
    %v1616 = vld [vmem:[#allocation7] sm:$0xff]
    %v1617 = vld [vmem:[#allocation7 + $0x8] sm:$0xff]
    %v1620 = vcombine.high %v1616, %v1616
    %v1621 = vcombine.high %v1617, %v1617
    %v1624 = vmul.f32 %v1609, %v1616
    %v1625 = vmul.f32 %v1611, %v1620
    %v1626 = vmul.f32 %v1613, %v1617
    %v1627 = vmul.f32 %v1615, %v1621
    %v1628 = vadd.f32 %v1624, 0.0
    %v1629 = vadd.f32 %v1625, 0.0
    %v1630 = vadd.f32 %v1626, 0.0
    %v1631 = vadd.f32 %v1627, 0.0
    %s1632 = scalar_lea.vmem [#allocation3], 256
    %v1633 = vld [vmem:[%s1632] sm:$0xff]
    %v1634 = vld [vmem:[%s1632 + $0x8] sm:$0xff]
    %v1635 = vld [vmem:[%s1632 + $0x10] sm:$0xff]
    %v1636 = vld [vmem:[%s1632 + $0x18] sm:$0xff]
    %v1637 = vld [vmem:[%s1632 + $0x20] sm:$0xff]
    %v1638 = vld [vmem:[%s1632 + $0x28] sm:$0xff]
    %v1639 = vld [vmem:[%s1632 + $0x30] sm:$0xff]
    %v1640 = vld [vmem:[%s1632 + $0x38] sm:$0xff]
    %v1641 = vld [vmem:[%s1632 + $0x40] sm:$0xff]
    %v1642 = vld [vmem:[%s1632 + $0x48] sm:$0xff]
    %v1643 = vld [vmem:[%s1632 + $0x50] sm:$0xff]
    %v1644 = vld [vmem:[%s1632 + $0x58] sm:$0xff]
    %v1645 = vld [vmem:[%s1632 + $0x60] sm:$0xff]
    %v1646 = vld [vmem:[%s1632 + $0x68] sm:$0xff]
    %v1647 = vld [vmem:[%s1632 + $0x70] sm:$0xff]
    %v1648 = vld [vmem:[%s1632 + $0x78] sm:$0xff]
    %v1649 = vld [vmem:[%s1632 + $0x80] sm:$0xff]
    %v1650 = vld [vmem:[%s1632 + $0x88] sm:$0xff]
    %v1651 = vld [vmem:[%s1632 + $0x90] sm:$0xff]
    %v1652 = vld [vmem:[%s1632 + $0x98] sm:$0xff]
    %v1653 = vld [vmem:[%s1632 + $0xa0] sm:$0xff]
    %v1654 = vld [vmem:[%s1632 + $0xa8] sm:$0xff]
    %v1655 = vld [vmem:[%s1632 + $0xb0] sm:$0xff]
    %v1656 = vld [vmem:[%s1632 + $0xb8] sm:$0xff]
    %v1657 = vld [vmem:[%s1632 + $0xc0] sm:$0xff]
    %v1658 = vld [vmem:[%s1632 + $0xc8] sm:$0xff]
    %v1659 = vld [vmem:[%s1632 + $0xd0] sm:$0xff]
    %v1660 = vld [vmem:[%s1632 + $0xd8] sm:$0xff]
    %v1661 = vld [vmem:[%s1632 + $0xe0] sm:$0xff]
    %v1662 = vld [vmem:[%s1632 + $0xe8] sm:$0xff]
    %v1663 = vld [vmem:[%s1632 + $0xf0] sm:$0xff]
    %v1664 = vld [vmem:[%s1632 + $0xf8] sm:$0xff]
    %v1697 = vunpack.c.l.b16 %v1633
    %v1698 = vunpack.c.h.b16 %v1633
    %v1699 = vunpack.c.l.b16 %v1634
    %v1700 = vunpack.c.h.b16 %v1634
    %v1701 = vunpack.c.l.b16 %v1635
    %v1702 = vunpack.c.h.b16 %v1635
    %v1703 = vunpack.c.l.b16 %v1636
    %v1704 = vunpack.c.h.b16 %v1636
    %v1705 = vunpack.c.l.b16 %v1637
    %v1706 = vunpack.c.h.b16 %v1637
    %v1707 = vunpack.c.l.b16 %v1638
    %v1708 = vunpack.c.h.b16 %v1638
    %v1709 = vunpack.c.l.b16 %v1639
    %v1710 = vunpack.c.h.b16 %v1639
    %v1711 = vunpack.c.l.b16 %v1640
    %v1712 = vunpack.c.h.b16 %v1640
    %v1713 = vunpack.c.l.b16 %v1641
    %v1714 = vunpack.c.h.b16 %v1641
    %v1715 = vunpack.c.l.b16 %v1642
    %v1716 = vunpack.c.h.b16 %v1642
    %v1717 = vunpack.c.l.b16 %v1643
    %v1718 = vunpack.c.h.b16 %v1643
    %v1719 = vunpack.c.l.b16 %v1644
    %v1720 = vunpack.c.h.b16 %v1644
    %v1721 = vunpack.c.l.b16 %v1645
    %v1722 = vunpack.c.h.b16 %v1645
    %v1723 = vunpack.c.l.b16 %v1646
    %v1724 = vunpack.c.h.b16 %v1646
    %v1725 = vunpack.c.l.b16 %v1647
    %v1726 = vunpack.c.h.b16 %v1647
    %v1727 = vunpack.c.l.b16 %v1648
    %v1728 = vunpack.c.h.b16 %v1648
    %v1729 = vunpack.c.l.b16 %v1649
    %v1730 = vunpack.c.h.b16 %v1649
    %v1731 = vunpack.c.l.b16 %v1650
    %v1732 = vunpack.c.h.b16 %v1650
    %v1733 = vunpack.c.l.b16 %v1651
    %v1734 = vunpack.c.h.b16 %v1651
    %v1735 = vunpack.c.l.b16 %v1652
    %v1736 = vunpack.c.h.b16 %v1652
    %v1737 = vunpack.c.l.b16 %v1653
    %v1738 = vunpack.c.h.b16 %v1653
    %v1739 = vunpack.c.l.b16 %v1654
    %v1740 = vunpack.c.h.b16 %v1654
    %v1741 = vunpack.c.l.b16 %v1655
    %v1742 = vunpack.c.h.b16 %v1655
    %v1743 = vunpack.c.l.b16 %v1656
    %v1744 = vunpack.c.h.b16 %v1656
    %v1745 = vunpack.c.l.b16 %v1657
    %v1746 = vunpack.c.h.b16 %v1657
    %v1747 = vunpack.c.l.b16 %v1658
    %v1748 = vunpack.c.h.b16 %v1658
    %v1749 = vunpack.c.l.b16 %v1659
    %v1750 = vunpack.c.h.b16 %v1659
    %v1751 = vunpack.c.l.b16 %v1660
    %v1752 = vunpack.c.h.b16 %v1660
    %v1753 = vunpack.c.l.b16 %v1661
    %v1754 = vunpack.c.h.b16 %v1661
    %v1755 = vunpack.c.l.b16 %v1662
    %v1756 = vunpack.c.h.b16 %v1662
    %v1757 = vunpack.c.l.b16 %v1663
    %v1758 = vunpack.c.h.b16 %v1663
    %v1759 = vunpack.c.l.b16 %v1664
    %v1760 = vunpack.c.h.b16 %v1664
    %v1761 = vpack.c.b16 %v1701, %v1697
    %v1762 = vpack.c.b16 %v1702, %v1698
    %v1763 = vpack.c.b16 %v1703, %v1699
    %v1764 = vpack.c.b16 %v1704, %v1700
    %v1765 = vpack.c.b16 %v1709, %v1705
    %v1766 = vpack.c.b16 %v1710, %v1706
    %v1767 = vpack.c.b16 %v1711, %v1707
    %v1768 = vpack.c.b16 %v1712, %v1708
    %v1769 = vpack.c.b16 %v1717, %v1713
    %v1770 = vpack.c.b16 %v1718, %v1714
    %v1771 = vpack.c.b16 %v1719, %v1715
    %v1772 = vpack.c.b16 %v1720, %v1716
    %v1773 = vpack.c.b16 %v1725, %v1721
    %v1774 = vpack.c.b16 %v1726, %v1722
    %v1775 = vpack.c.b16 %v1727, %v1723
    %v1776 = vpack.c.b16 %v1728, %v1724
    %v1777 = vpack.c.b16 %v1733, %v1729
    %v1778 = vpack.c.b16 %v1734, %v1730
    %v1779 = vpack.c.b16 %v1735, %v1731
    %v1780 = vpack.c.b16 %v1736, %v1732
    %v1781 = vpack.c.b16 %v1741, %v1737
    %v1782 = vpack.c.b16 %v1742, %v1738
    %v1783 = vpack.c.b16 %v1743, %v1739
    %v1784 = vpack.c.b16 %v1744, %v1740
    %v1785 = vpack.c.b16 %v1749, %v1745
    %v1786 = vpack.c.b16 %v1750, %v1746
    %v1787 = vpack.c.b16 %v1751, %v1747
    %v1788 = vpack.c.b16 %v1752, %v1748
    %v1789 = vpack.c.b16 %v1757, %v1753
    %v1790 = vpack.c.b16 %v1758, %v1754
    %v1791 = vpack.c.b16 %v1759, %v1755
    %v1792 = vpack.c.b16 %v1760, %v1756
    %1825 = vmatprep.subr.bf16.mxu0 %v1790
    %1826 = vmatpush1.bf16.msra.mxu0 %v1789
    %1827 = vmatprep.subr.bf16.mxu0 %v1786
    %1828 = vmatpush1.bf16.msra.mxu0 %v1785
    %1829 = vmatprep.subr.bf16.mxu0 %v1782
    %1830 = vmatpush1.bf16.msra.mxu0 %v1781
    %1831 = vmatprep.subr.bf16.mxu0 %v1778
    %1832 = vmatpush1.bf16.msra.mxu0 %v1777
    %1833 = vmatprep.subr.bf16.mxu0 %v1774
    %1834 = vmatpush1.bf16.msra.mxu0 %v1773
    %1835 = vmatprep.subr.bf16.mxu0 %v1770
    %1836 = vmatpush1.bf16.msra.mxu0 %v1769
    %1837 = vmatprep.subr.bf16.mxu0 %v1766
    %1838 = vmatpush1.bf16.msra.mxu0 %v1765
    %1839 = vmatprep.subr.bf16.mxu0 %v1762
    %1840 = vmatpush1.bf16.msra.mxu0 %v1761
    %1841 = vmatprep.subr.bf16.mxu0 0
    %1842 = vmatpush2.bf16.msra.mxu0 0
    %1843 = vmatprep.subr.bf16.mxu0 0
    %1844 = vmatpush2.bf16.msra.mxu0 0
    %1845 = vmatprep.subr.bf16.mxu0 0
    %1846 = vmatpush2.bf16.msra.mxu0 0
    %1847 = vmatprep.subr.bf16.mxu0 0
    %1848 = vmatpush2.bf16.msra.mxu0 0
    %1849 = vmatprep.subr.bf16.mxu0 0
    %1850 = vmatpush2.bf16.msra.mxu0 0
    %1851 = vmatprep.subr.bf16.mxu0 0
    %1852 = vmatpush2.bf16.msra.mxu0 0
    %1853 = vmatprep.subr.bf16.mxu0 0
    %1854 = vmatpush2.bf16.msra.mxu0 0
    %1855 = vmatprep.subr.bf16.mxu0 0
    %1856 = vmatpush2.bf16.msra.mxu0 0
    %1857 = vmatprep.mubr.bf16.mxu0 0
    %1858 = vmatmul.mubr.bf16.gmra.mxu0 %v1106
    %v1859 = vpop.f32.mrf.mxu0
    %v1860 = vadd.f32 0.0, %v1859
    %v1861 = vpop.f32.mrf.mxu0
    %v1862 = vadd.f32 0.0, %v1861
    %v1863 = vpop.f32.mrf.mxu0
    %v1864 = vpop.f32.mrf.mxu0
    %1865 = vdwg.mxu0
    %1866 = vmatprep.subr.bf16.mxu0 %v1792
    %1867 = vmatpush1.bf16.msra.mxu0 %v1791
    %1868 = vmatprep.subr.bf16.mxu0 %v1788
    %1869 = vmatpush1.bf16.msra.mxu0 %v1787
    %1870 = vmatprep.subr.bf16.mxu0 %v1784
    %1871 = vmatpush1.bf16.msra.mxu0 %v1783
    %1872 = vmatprep.subr.bf16.mxu0 %v1780
    %1873 = vmatpush1.bf16.msra.mxu0 %v1779
    %1874 = vmatprep.subr.bf16.mxu0 %v1776
    %1875 = vmatpush1.bf16.msra.mxu0 %v1775
    %1876 = vmatprep.subr.bf16.mxu0 %v1772
    %1877 = vmatpush1.bf16.msra.mxu0 %v1771
    %1878 = vmatprep.subr.bf16.mxu0 %v1768
    %1879 = vmatpush1.bf16.msra.mxu0 %v1767
    %1880 = vmatprep.subr.bf16.mxu0 %v1764
    %1881 = vmatpush1.bf16.msra.mxu0 %v1763
    %1882 = vmatprep.subr.bf16.mxu0 0
    %1883 = vmatpush2.bf16.msra.mxu0 0
    %1884 = vmatprep.subr.bf16.mxu0 0
    %1885 = vmatpush2.bf16.msra.mxu0 0
    %1886 = vmatprep.subr.bf16.mxu0 0
    %1887 = vmatpush2.bf16.msra.mxu0 0
    %1888 = vmatprep.subr.bf16.mxu0 0
    %1889 = vmatpush2.bf16.msra.mxu0 0
    %1890 = vmatprep.subr.bf16.mxu0 0
    %1891 = vmatpush2.bf16.msra.mxu0 0
    %1892 = vmatprep.subr.bf16.mxu0 0
    %1893 = vmatpush2.bf16.msra.mxu0 0
    %1894 = vmatprep.subr.bf16.mxu0 0
    %1895 = vmatpush2.bf16.msra.mxu0 0
    %1896 = vmatprep.subr.bf16.mxu0 0
    %1897 = vmatpush2.bf16.msra.mxu0 0
    %1898 = vmatprep.mubr.bf16.mxu0 0
    %1899 = vmatmul.mubr.bf16.gmra.mxu0 %v1106
    %v1900 = vpop.f32.mrf.mxu0
    %v1901 = vadd.f32 0.0, %v1900
    %v1902 = vpop.f32.mrf.mxu0
    %v1903 = vadd.f32 0.0, %v1902
    %v1904 = vpop.f32.mrf.mxu0
    %v1905 = vpop.f32.mrf.mxu0
    %1906 = vdwg.mxu0
    %s1907 = scalar_lea.vmem [#allocation12], 1
    %v1908 = vld [vmem:[%s1907] ss:$8 sm:$0xf]
    %s1909 = scalar_lea.vmem [#allocation12], 4
    %v1910 = vld [vmem:[%s1909] ss:$8 sm:$0xf]
    %v1911 = vsel %vm937, %v1860, 0.0
    %v1912 = vrot.slane %v1911, 4
    %v1913 = vadd.f32 %v1911, %v1912
    %v1914 = vrot.slane %v1913, 2
    %v1915 = vadd.f32 %v1913, %v1914
    %v1916 = vrot.slane %v1915, 1
    %v1917 = vadd.f32 %v1915, %v1916
    %v1918 = vsel %vm937, %v1862, 0.0
    %v1919 = vrot.slane %v1918, 4
    %v1920 = vadd.f32 %v1918, %v1919
    %v1921 = vrot.slane %v1920, 2
    %v1922 = vadd.f32 %v1920, %v1921
    %v1923 = vrot.slane %v1922, 1
    %v1924 = vadd.f32 %v1922, %v1923
    %v1925 = vsel %vm937, %v1901, 0.0
    %v1926 = vrot.slane %v1925, 4
    %v1927 = vadd.f32 %v1925, %v1926
    %v1928 = vrot.slane %v1927, 2
    %v1929 = vadd.f32 %v1927, %v1928
    %v1930 = vrot.slane %v1929, 1
    %v1931 = vadd.f32 %v1929, %v1930
    %v1932 = vsel %vm937, %v1903, 0.0
    %v1933 = vrot.slane %v1932, 4
    %v1934 = vadd.f32 %v1932, %v1933
    %v1935 = vrot.slane %v1934, 2
    %v1936 = vadd.f32 %v1934, %v1935
    %v1937 = vrot.slane %v1936, 1
    %v1938 = vadd.f32 %v1936, %v1937
    %v1939 = vmul.f32 %v1917, %v959
    %v1940 = vmul.f32 %v1924, %v959
    %v1941 = vmul.f32 %v1931, %v959
    %v1942 = vmul.f32 %v1938, %v959
    %v1943 = vmul.f32 %v1860, %v1860
    %v1944 = vmul.f32 %v1862, %v1862
    %v1945 = vmul.f32 %v1901, %v1901
    %v1946 = vmul.f32 %v1903, %v1903
    %v1947 = vsel %vm937, %v1943, 0.0
    %v1948 = vrot.slane %v1947, 4
    %v1949 = vadd.f32 %v1947, %v1948
    %v1950 = vrot.slane %v1949, 2
    %v1951 = vadd.f32 %v1949, %v1950
    %v1952 = vrot.slane %v1951, 1
    %v1953 = vadd.f32 %v1951, %v1952
    %v1954 = vsel %vm937, %v1944, 0.0
    %v1955 = vrot.slane %v1954, 4
    %v1956 = vadd.f32 %v1954, %v1955
    %v1957 = vrot.slane %v1956, 2
    %v1958 = vadd.f32 %v1956, %v1957
    %v1959 = vrot.slane %v1958, 1
    %v1960 = vadd.f32 %v1958, %v1959
    %v1961 = vsel %vm937, %v1945, 0.0
    %v1962 = vrot.slane %v1961, 4
    %v1963 = vadd.f32 %v1961, %v1962
    %v1964 = vrot.slane %v1963, 2
    %v1965 = vadd.f32 %v1963, %v1964
    %v1966 = vrot.slane %v1965, 1
    %v1967 = vadd.f32 %v1965, %v1966
    %v1968 = vsel %vm937, %v1946, 0.0
    %v1969 = vrot.slane %v1968, 4
    %v1970 = vadd.f32 %v1968, %v1969
    %v1971 = vrot.slane %v1970, 2
    %v1972 = vadd.f32 %v1970, %v1971
    %v1973 = vrot.slane %v1972, 1
    %v1974 = vadd.f32 %v1972, %v1973
    %v1975 = vmul.f32 %v1953, %v959
    %v1976 = vmul.f32 %v1960, %v959
    %v1977 = vmul.f32 %v1967, %v959
    %v1978 = vmul.f32 %v1974, %v959
    %v1979 = vmul.f32 %v1939, %v1939
    %v1980 = vmul.f32 %v1940, %v1940
    %v1981 = vmul.f32 %v1941, %v1941
    %v1982 = vmul.f32 %v1942, %v1942
    %v1983 = vsub.f32 %v1975, %v1979
    %v1984 = vsub.f32 %v1976, %v1980
    %v1985 = vsub.f32 %v1977, %v1981
    %v1986 = vsub.f32 %v1978, %v1982
    %v1987 = vmax.f32 %v1983, 0.0
    %v1988 = vmax.f32 %v1984, 0.0
    %v1989 = vmax.f32 %v1985, 0.0
    %v1990 = vmax.f32 %v1986, 0.0
    %v1991 = vadd.f32 %v1987, 1e-05
    %v1992 = vadd.f32 %v1988, 1e-05
    %v1993 = vadd.f32 %v1989, 1e-05
    %v1994 = vadd.f32 %v1990, 1e-05
    %v1995 = vrsqrt.pop %v1991
    %v1996 = vrsqrt.pop %v1992
    %v1997 = vrsqrt.pop %v1993
    %v1998 = vrsqrt.pop %v1994
    %v2003 = vcombine.low %v1995, %v1996
    %v2004 = vcombine.low %v1997, %v1998
    %v2006 = vunpack.c.l.s4 1966171168
    %v2007 = vunpack.c.0.s8 %v2006
    %v2008 = vlaneseq
    %v2009 = vshrl.u32 %v2008, 7
    %v2010 = vsub.s32 %v2007, %v2009
    %v2011 = vrot.slane %v2003, %v2010
    %v2013 = vunpack.c.l.s4 1966171168
    %v2014 = vunpack.c.0.s8 %v2013
    %v2015 = vlaneseq
    %v2016 = vshrl.u32 %v2015, 7
    %v2017 = vsub.s32 %v2014, %v2016
    %v2018 = vrot.slane %v2004, %v2017
    %v2019 = vcombine.low %v2011, %v2018
    %v2021 = vunpack.c.l.s4 1966171168
    %v2022 = vunpack.c.0.s8 %v2021
    %v2023 = vlaneseq
    %v2024 = vshrl.u32 %v2023, 7
    %v2025 = vsub.s32 %v2022, %v2024
    %v2026 = vrot.slane %v2019, %v2025
    %v2028 = vmul.f32 %v1908, %v2026
    %v2030 = vlaneseq
    %v2031 = vshrl.u32 %v2030, 7
    %v2032 = vsub.s32 0, %v2031
    %v2033 = vrot.slane %v2028, %v2032
    %v2034 = vlaneseq
    %v2035 = vshrl.u32 %v2034, 7
    %v2036 = vsub.s32 1, %v2035
    %v2037 = vrot.slane %v2028, %v2036
    %v2038 = vlaneseq
    %v2039 = vshrl.u32 %v2038, 7
    %v2040 = vsub.s32 2, %v2039
    %v2041 = vrot.slane %v2028, %v2040
    %v2042 = vlaneseq
    %v2043 = vshrl.u32 %v2042, 7
    %v2044 = vsub.s32 3, %v2043
    %v2045 = vrot.slane %v2028, %v2044
    %v2050 = vmul.f32 %v1939, %v2033
    %v2051 = vmul.f32 %v1940, %v2037
    %v2052 = vmul.f32 %v1941, %v2041
    %v2053 = vmul.f32 %v1942, %v2045
    %v2058 = vcombine.low %v2050, %v2051
    %v2059 = vcombine.low %v2052, %v2053
    %v2061 = vunpack.c.l.s4 1966171168
    %v2062 = vunpack.c.0.s8 %v2061
    %v2063 = vlaneseq
    %v2064 = vshrl.u32 %v2063, 7
    %v2065 = vsub.s32 %v2062, %v2064
    %v2066 = vrot.slane %v2058, %v2065
    %v2068 = vunpack.c.l.s4 1966171168
    %v2069 = vunpack.c.0.s8 %v2068
    %v2070 = vlaneseq
    %v2071 = vshrl.u32 %v2070, 7
    %v2072 = vsub.s32 %v2069, %v2071
    %v2073 = vrot.slane %v2059, %v2072
    %v2074 = vcombine.low %v2066, %v2073
    %v2076 = vunpack.c.l.s4 1966171168
    %v2077 = vunpack.c.0.s8 %v2076
    %v2078 = vlaneseq
    %v2079 = vshrl.u32 %v2078, 7
    %v2080 = vsub.s32 %v2077, %v2079
    %v2081 = vrot.slane %v2074, %v2080
    %v2083 = vsub.f32 %v1910, %v2081
    %v2084 = vmul.f32 %v1860, %v2033
    %v2085 = vmul.f32 %v1862, %v2037
    %v2086 = vmul.f32 %v1901, %v2041
    %v2087 = vmul.f32 %v1903, %v2045
    %v2089 = vlaneseq
    %v2090 = vshrl.u32 %v2089, 7
    %v2091 = vsub.s32 0, %v2090
    %v2092 = vrot.slane %v2083, %v2091
    %v2093 = vlaneseq
    %v2094 = vshrl.u32 %v2093, 7
    %v2095 = vsub.s32 1, %v2094
    %v2096 = vrot.slane %v2083, %v2095
    %v2097 = vlaneseq
    %v2098 = vshrl.u32 %v2097, 7
    %v2099 = vsub.s32 2, %v2098
    %v2100 = vrot.slane %v2083, %v2099
    %v2101 = vlaneseq
    %v2102 = vshrl.u32 %v2101, 7
    %v2103 = vsub.s32 3, %v2102
    %v2104 = vrot.slane %v2083, %v2103
    %v2109 = vadd.f32 %v2084, %v2092
    %v2110 = vadd.f32 %v2085, %v2096
    %v2111 = vadd.f32 %v2086, %v2100
    %v2112 = vadd.f32 %v2087, %v2104
    %v2113 = vxor.u32 %v2109, 2147483648
    %v2114 = vxor.u32 %v2110, 2147483648
    %v2115 = vxor.u32 %v2111, 2147483648
    %v2116 = vxor.u32 %v2112, 2147483648
    %v2117 = vmul.f32 %v2113, 1.442695
    %v2118 = vpow.pop %v2117
    %v2119 = vmul.f32 %v2114, 1.442695
    %v2120 = vpow.pop %v2119
    %v2121 = vmul.f32 %v2115, 1.442695
    %v2122 = vpow.pop %v2121
    %v2123 = vmul.f32 %v2116, 1.442695
    %v2124 = vpow.pop %v2123
    %v2125 = vadd.f32 %v2118, 1.0
    %v2126 = vadd.f32 %v2120, 1.0
    %v2127 = vadd.f32 %v2122, 1.0
    %v2128 = vadd.f32 %v2124, 1.0
    %v2129 = vrcp.pop %v2125
    %v2130 = vmul.f32 1.0, %v2129
    %v2131 = vrcp.pop %v2126
    %v2132 = vmul.f32 1.0, %v2131
    %v2133 = vrcp.pop %v2127
    %v2134 = vmul.f32 1.0, %v2133
    %v2135 = vrcp.pop %v2128
    %v2136 = vmul.f32 1.0, %v2135
    %v2137 = vld [vmem:[%s108] sm:$0xff]
    %v2138 = vld [vmem:[%s108 + $0x8] sm:$0xff]
    %v2141 = vcombine.high %v2137, %v2137
    %v2142 = vcombine.high %v2138, %v2138
    %v2145 = vmul.f32 %v2130, %v2137
    %v2146 = vmul.f32 %v2132, %v2141
    %v2147 = vmul.f32 %v2134, %v2138
    %v2148 = vmul.f32 %v2136, %v2142
    %v2149 = vadd.f32 %v1628, %v2145
    %v2150 = vadd.f32 %v1629, %v2146
    %v2151 = vadd.f32 %v1630, %v2147
    %v2152 = vadd.f32 %v1631, %v2148
    %s2153 = scalar_lea.vmem [#allocation3], 512
    %v2154 = vld [vmem:[%s2153] sm:$0xff]
    %v2155 = vld [vmem:[%s2153 + $0x8] sm:$0xff]
    %v2156 = vld [vmem:[%s2153 + $0x10] sm:$0xff]
    %v2157 = vld [vmem:[%s2153 + $0x18] sm:$0xff]
    %v2158 = vld [vmem:[%s2153 + $0x20] sm:$0xff]
    %v2159 = vld [vmem:[%s2153 + $0x28] sm:$0xff]
    %v2160 = vld [vmem:[%s2153 + $0x30] sm:$0xff]
    %v2161 = vld [vmem:[%s2153 + $0x38] sm:$0xff]
    %v2162 = vld [vmem:[%s2153 + $0x40] sm:$0xff]
    %v2163 = vld [vmem:[%s2153 + $0x48] sm:$0xff]
    %v2164 = vld [vmem:[%s2153 + $0x50] sm:$0xff]
    %v2165 = vld [vmem:[%s2153 + $0x58] sm:$0xff]
    %v2166 = vld [vmem:[%s2153 + $0x60] sm:$0xff]
    %v2167 = vld [vmem:[%s2153 + $0x68] sm:$0xff]
    %v2168 = vld [vmem:[%s2153 + $0x70] sm:$0xff]
    %v2169 = vld [vmem:[%s2153 + $0x78] sm:$0xff]
    %v2170 = vld [vmem:[%s2153 + $0x80] sm:$0xff]
    %v2171 = vld [vmem:[%s2153 + $0x88] sm:$0xff]
    %v2172 = vld [vmem:[%s2153 + $0x90] sm:$0xff]
    %v2173 = vld [vmem:[%s2153 + $0x98] sm:$0xff]
    %v2174 = vld [vmem:[%s2153 + $0xa0] sm:$0xff]
    %v2175 = vld [vmem:[%s2153 + $0xa8] sm:$0xff]
    %v2176 = vld [vmem:[%s2153 + $0xb0] sm:$0xff]
    %v2177 = vld [vmem:[%s2153 + $0xb8] sm:$0xff]
    %v2178 = vld [vmem:[%s2153 + $0xc0] sm:$0xff]
    %v2179 = vld [vmem:[%s2153 + $0xc8] sm:$0xff]
    %v2180 = vld [vmem:[%s2153 + $0xd0] sm:$0xff]
    %v2181 = vld [vmem:[%s2153 + $0xd8] sm:$0xff]
    %v2182 = vld [vmem:[%s2153 + $0xe0] sm:$0xff]
    %v2183 = vld [vmem:[%s2153 + $0xe8] sm:$0xff]
    %v2184 = vld [vmem:[%s2153 + $0xf0] sm:$0xff]
    %v2185 = vld [vmem:[%s2153 + $0xf8] sm:$0xff]
    %v2218 = vunpack.c.l.b16 %v2154
    %v2219 = vunpack.c.h.b16 %v2154
    %v2220 = vunpack.c.l.b16 %v2155
    %v2221 = vunpack.c.h.b16 %v2155
    %v2222 = vunpack.c.l.b16 %v2156
    %v2223 = vunpack.c.h.b16 %v2156
    %v2224 = vunpack.c.l.b16 %v2157
    %v2225 = vunpack.c.h.b16 %v2157
    %v2226 = vunpack.c.l.b16 %v2158
    %v2227 = vunpack.c.h.b16 %v2158
    %v2228 = vunpack.c.l.b16 %v2159
    %v2229 = vunpack.c.h.b16 %v2159
    %v2230 = vunpack.c.l.b16 %v2160
    %v2231 = vunpack.c.h.b16 %v2160
    %v2232 = vunpack.c.l.b16 %v2161
    %v2233 = vunpack.c.h.b16 %v2161
    %v2234 = vunpack.c.l.b16 %v2162
    %v2235 = vunpack.c.h.b16 %v2162
    %v2236 = vunpack.c.l.b16 %v2163
    %v2237 = vunpack.c.h.b16 %v2163
    %v2238 = vunpack.c.l.b16 %v2164
    %v2239 = vunpack.c.h.b16 %v2164
    %v2240 = vunpack.c.l.b16 %v2165
    %v2241 = vunpack.c.h.b16 %v2165
    %v2242 = vunpack.c.l.b16 %v2166
    %v2243 = vunpack.c.h.b16 %v2166
    %v2244 = vunpack.c.l.b16 %v2167
    %v2245 = vunpack.c.h.b16 %v2167
    %v2246 = vunpack.c.l.b16 %v2168
    %v2247 = vunpack.c.h.b16 %v2168
    %v2248 = vunpack.c.l.b16 %v2169
    %v2249 = vunpack.c.h.b16 %v2169
    %v2250 = vunpack.c.l.b16 %v2170
    %v2251 = vunpack.c.h.b16 %v2170
    %v2252 = vunpack.c.l.b16 %v2171
    %v2253 = vunpack.c.h.b16 %v2171
    %v2254 = vunpack.c.l.b16 %v2172
    %v2255 = vunpack.c.h.b16 %v2172
    %v2256 = vunpack.c.l.b16 %v2173
    %v2257 = vunpack.c.h.b16 %v2173
    %v2258 = vunpack.c.l.b16 %v2174
    %v2259 = vunpack.c.h.b16 %v2174
    %v2260 = vunpack.c.l.b16 %v2175
    %v2261 = vunpack.c.h.b16 %v2175
    %v2262 = vunpack.c.l.b16 %v2176
    %v2263 = vunpack.c.h.b16 %v2176
    %v2264 = vunpack.c.l.b16 %v2177
    %v2265 = vunpack.c.h.b16 %v2177
    %v2266 = vunpack.c.l.b16 %v2178
    %v2267 = vunpack.c.h.b16 %v2178
    %v2268 = vunpack.c.l.b16 %v2179
    %v2269 = vunpack.c.h.b16 %v2179
    %v2270 = vunpack.c.l.b16 %v2180
    %v2271 = vunpack.c.h.b16 %v2180
    %v2272 = vunpack.c.l.b16 %v2181
    %v2273 = vunpack.c.h.b16 %v2181
    %v2274 = vunpack.c.l.b16 %v2182
    %v2275 = vunpack.c.h.b16 %v2182
    %v2276 = vunpack.c.l.b16 %v2183
    %v2277 = vunpack.c.h.b16 %v2183
    %v2278 = vunpack.c.l.b16 %v2184
    %v2279 = vunpack.c.h.b16 %v2184
    %v2280 = vunpack.c.l.b16 %v2185
    %v2281 = vunpack.c.h.b16 %v2185
    %v2282 = vpack.c.b16 %v2222, %v2218
    %v2283 = vpack.c.b16 %v2223, %v2219
    %v2284 = vpack.c.b16 %v2224, %v2220
    %v2285 = vpack.c.b16 %v2225, %v2221
    %v2286 = vpack.c.b16 %v2230, %v2226
    %v2287 = vpack.c.b16 %v2231, %v2227
    %v2288 = vpack.c.b16 %v2232, %v2228
    %v2289 = vpack.c.b16 %v2233, %v2229
    %v2290 = vpack.c.b16 %v2238, %v2234
    %v2291 = vpack.c.b16 %v2239, %v2235
    %v2292 = vpack.c.b16 %v2240, %v2236
    %v2293 = vpack.c.b16 %v2241, %v2237
    %v2294 = vpack.c.b16 %v2246, %v2242
    %v2295 = vpack.c.b16 %v2247, %v2243
    %v2296 = vpack.c.b16 %v2248, %v2244
    %v2297 = vpack.c.b16 %v2249, %v2245
    %v2298 = vpack.c.b16 %v2254, %v2250
    %v2299 = vpack.c.b16 %v2255, %v2251
    %v2300 = vpack.c.b16 %v2256, %v2252
    %v2301 = vpack.c.b16 %v2257, %v2253
    %v2302 = vpack.c.b16 %v2262, %v2258
    %v2303 = vpack.c.b16 %v2263, %v2259
    %v2304 = vpack.c.b16 %v2264, %v2260
    %v2305 = vpack.c.b16 %v2265, %v2261
    %v2306 = vpack.c.b16 %v2270, %v2266
    %v2307 = vpack.c.b16 %v2271, %v2267
    %v2308 = vpack.c.b16 %v2272, %v2268
    %v2309 = vpack.c.b16 %v2273, %v2269
    %v2310 = vpack.c.b16 %v2278, %v2274
    %v2311 = vpack.c.b16 %v2279, %v2275
    %v2312 = vpack.c.b16 %v2280, %v2276
    %v2313 = vpack.c.b16 %v2281, %v2277
    %2346 = vmatprep.subr.bf16.mxu0 %v2311
    %2347 = vmatpush1.bf16.msra.mxu0 %v2310
    %2348 = vmatprep.subr.bf16.mxu0 %v2307
    %2349 = vmatpush1.bf16.msra.mxu0 %v2306
    %2350 = vmatprep.subr.bf16.mxu0 %v2303
    %2351 = vmatpush1.bf16.msra.mxu0 %v2302
    %2352 = vmatprep.subr.bf16.mxu0 %v2299
    %2353 = vmatpush1.bf16.msra.mxu0 %v2298
    %2354 = vmatprep.subr.bf16.mxu0 %v2295
    %2355 = vmatpush1.bf16.msra.mxu0 %v2294
    %2356 = vmatprep.subr.bf16.mxu0 %v2291
    %2357 = vmatpush1.bf16.msra.mxu0 %v2290
    %2358 = vmatprep.subr.bf16.mxu0 %v2287
    %2359 = vmatpush1.bf16.msra.mxu0 %v2286
    %2360 = vmatprep.subr.bf16.mxu0 %v2283
    %2361 = vmatpush1.bf16.msra.mxu0 %v2282
    %2362 = vmatprep.subr.bf16.mxu0 0
    %2363 = vmatpush2.bf16.msra.mxu0 0
    %2364 = vmatprep.subr.bf16.mxu0 0
    %2365 = vmatpush2.bf16.msra.mxu0 0
    %2366 = vmatprep.subr.bf16.mxu0 0
    %2367 = vmatpush2.bf16.msra.mxu0 0
    %2368 = vmatprep.subr.bf16.mxu0 0
    %2369 = vmatpush2.bf16.msra.mxu0 0
    %2370 = vmatprep.subr.bf16.mxu0 0
    %2371 = vmatpush2.bf16.msra.mxu0 0
    %2372 = vmatprep.subr.bf16.mxu0 0
    %2373 = vmatpush2.bf16.msra.mxu0 0
    %2374 = vmatprep.subr.bf16.mxu0 0
    %2375 = vmatpush2.bf16.msra.mxu0 0
    %2376 = vmatprep.subr.bf16.mxu0 0
    %2377 = vmatpush2.bf16.msra.mxu0 0
    %2378 = vmatprep.mubr.bf16.mxu0 0
    %2379 = vmatmul.mubr.bf16.gmra.mxu0 %v1107
    %v2380 = vpop.f32.mrf.mxu0
    %v2381 = vadd.f32 0.0, %v2380
    %v2382 = vpop.f32.mrf.mxu0
    %v2383 = vadd.f32 0.0, %v2382
    %v2384 = vpop.f32.mrf.mxu0
    %v2385 = vpop.f32.mrf.mxu0
    %2386 = vdwg.mxu0
    %2387 = vmatprep.subr.bf16.mxu0 %v2313
    %2388 = vmatpush1.bf16.msra.mxu0 %v2312
    %2389 = vmatprep.subr.bf16.mxu0 %v2309
    %2390 = vmatpush1.bf16.msra.mxu0 %v2308
    %2391 = vmatprep.subr.bf16.mxu0 %v2305
    %2392 = vmatpush1.bf16.msra.mxu0 %v2304
    %2393 = vmatprep.subr.bf16.mxu0 %v2301
    %2394 = vmatpush1.bf16.msra.mxu0 %v2300
    %2395 = vmatprep.subr.bf16.mxu0 %v2297
    %2396 = vmatpush1.bf16.msra.mxu0 %v2296
    %2397 = vmatprep.subr.bf16.mxu0 %v2293
    %2398 = vmatpush1.bf16.msra.mxu0 %v2292
    %2399 = vmatprep.subr.bf16.mxu0 %v2289
    %2400 = vmatpush1.bf16.msra.mxu0 %v2288
    %2401 = vmatprep.subr.bf16.mxu0 %v2285
    %2402 = vmatpush1.bf16.msra.mxu0 %v2284
    %2403 = vmatprep.subr.bf16.mxu0 0
    %2404 = vmatpush2.bf16.msra.mxu0 0
    %2405 = vmatprep.subr.bf16.mxu0 0
    %2406 = vmatpush2.bf16.msra.mxu0 0
    %2407 = vmatprep.subr.bf16.mxu0 0
    %2408 = vmatpush2.bf16.msra.mxu0 0
    %2409 = vmatprep.subr.bf16.mxu0 0
    %2410 = vmatpush2.bf16.msra.mxu0 0
    %2411 = vmatprep.subr.bf16.mxu0 0
    %2412 = vmatpush2.bf16.msra.mxu0 0
    %2413 = vmatprep.subr.bf16.mxu0 0
    %2414 = vmatpush2.bf16.msra.mxu0 0
    %2415 = vmatprep.subr.bf16.mxu0 0
    %2416 = vmatpush2.bf16.msra.mxu0 0
    %2417 = vmatprep.subr.bf16.mxu0 0
    %2418 = vmatpush2.bf16.msra.mxu0 0
    %2419 = vmatprep.mubr.bf16.mxu0 0
    %2420 = vmatmul.mubr.bf16.gmra.mxu0 %v1107
    %v2421 = vpop.f32.mrf.mxu0
    %v2422 = vadd.f32 0.0, %v2421
    %v2423 = vpop.f32.mrf.mxu0
    %v2424 = vadd.f32 0.0, %v2423
    %v2425 = vpop.f32.mrf.mxu0
    %v2426 = vpop.f32.mrf.mxu0
    %2427 = vdwg.mxu0
    %s2428 = scalar_lea.vmem [#allocation12], 2
    %v2429 = vld [vmem:[%s2428] ss:$8 sm:$0xf]
    %s2430 = scalar_lea.vmem [#allocation12], 5
    %v2431 = vld [vmem:[%s2430] ss:$8 sm:$0xf]
    %v2432 = vsel %vm937, %v2381, 0.0
    %v2433 = vrot.slane %v2432, 4
    %v2434 = vadd.f32 %v2432, %v2433
    %v2435 = vrot.slane %v2434, 2
    %v2436 = vadd.f32 %v2434, %v2435
    %v2437 = vrot.slane %v2436, 1
    %v2438 = vadd.f32 %v2436, %v2437
    %v2439 = vsel %vm937, %v2383, 0.0
    %v2440 = vrot.slane %v2439, 4
    %v2441 = vadd.f32 %v2439, %v2440
    %v2442 = vrot.slane %v2441, 2
    %v2443 = vadd.f32 %v2441, %v2442
    %v2444 = vrot.slane %v2443, 1
    %v2445 = vadd.f32 %v2443, %v2444
    %v2446 = vsel %vm937, %v2422, 0.0
    %v2447 = vrot.slane %v2446, 4
    %v2448 = vadd.f32 %v2446, %v2447
    %v2449 = vrot.slane %v2448, 2
    %v2450 = vadd.f32 %v2448, %v2449
    %v2451 = vrot.slane %v2450, 1
    %v2452 = vadd.f32 %v2450, %v2451
    %v2453 = vsel %vm937, %v2424, 0.0
    %v2454 = vrot.slane %v2453, 4
    %v2455 = vadd.f32 %v2453, %v2454
    %v2456 = vrot.slane %v2455, 2
    %v2457 = vadd.f32 %v2455, %v2456
    %v2458 = vrot.slane %v2457, 1
    %v2459 = vadd.f32 %v2457, %v2458
    %v2460 = vmul.f32 %v2438, %v959
    %v2461 = vmul.f32 %v2445, %v959
    %v2462 = vmul.f32 %v2452, %v959
    %v2463 = vmul.f32 %v2459, %v959
    %v2464 = vmul.f32 %v2381, %v2381
    %v2465 = vmul.f32 %v2383, %v2383
    %v2466 = vmul.f32 %v2422, %v2422
    %v2467 = vmul.f32 %v2424, %v2424
    %v2468 = vsel %vm937, %v2464, 0.0
    %v2469 = vrot.slane %v2468, 4
    %v2470 = vadd.f32 %v2468, %v2469
    %v2471 = vrot.slane %v2470, 2
    %v2472 = vadd.f32 %v2470, %v2471
    %v2473 = vrot.slane %v2472, 1
    %v2474 = vadd.f32 %v2472, %v2473
    %v2475 = vsel %vm937, %v2465, 0.0
    %v2476 = vrot.slane %v2475, 4
    %v2477 = vadd.f32 %v2475, %v2476
    %v2478 = vrot.slane %v2477, 2
    %v2479 = vadd.f32 %v2477, %v2478
    %v2480 = vrot.slane %v2479, 1
    %v2481 = vadd.f32 %v2479, %v2480
    %v2482 = vsel %vm937, %v2466, 0.0
    %v2483 = vrot.slane %v2482, 4
    %v2484 = vadd.f32 %v2482, %v2483
    %v2485 = vrot.slane %v2484, 2
    %v2486 = vadd.f32 %v2484, %v2485
    %v2487 = vrot.slane %v2486, 1
    %v2488 = vadd.f32 %v2486, %v2487
    %v2489 = vsel %vm937, %v2467, 0.0
    %v2490 = vrot.slane %v2489, 4
    %v2491 = vadd.f32 %v2489, %v2490
    %v2492 = vrot.slane %v2491, 2
    %v2493 = vadd.f32 %v2491, %v2492
    %v2494 = vrot.slane %v2493, 1
    %v2495 = vadd.f32 %v2493, %v2494
    %v2496 = vmul.f32 %v2474, %v959
    %v2497 = vmul.f32 %v2481, %v959
    %v2498 = vmul.f32 %v2488, %v959
    %v2499 = vmul.f32 %v2495, %v959
    %v2500 = vmul.f32 %v2460, %v2460
    %v2501 = vmul.f32 %v2461, %v2461
    %v2502 = vmul.f32 %v2462, %v2462
    %v2503 = vmul.f32 %v2463, %v2463
    %v2504 = vsub.f32 %v2496, %v2500
    %v2505 = vsub.f32 %v2497, %v2501
    %v2506 = vsub.f32 %v2498, %v2502
    %v2507 = vsub.f32 %v2499, %v2503
    %v2508 = vmax.f32 %v2504, 0.0
    %v2509 = vmax.f32 %v2505, 0.0
    %v2510 = vmax.f32 %v2506, 0.0
    %v2511 = vmax.f32 %v2507, 0.0
    %v2512 = vadd.f32 %v2508, 1e-05
    %v2513 = vadd.f32 %v2509, 1e-05
    %v2514 = vadd.f32 %v2510, 1e-05
    %v2515 = vadd.f32 %v2511, 1e-05
    %v2516 = vrsqrt.pop %v2512
    %v2517 = vrsqrt.pop %v2513
    %v2518 = vrsqrt.pop %v2514
    %v2519 = vrsqrt.pop %v2515
    %v2524 = vcombine.low %v2516, %v2517
    %v2525 = vcombine.low %v2518, %v2519
    %v2527 = vunpack.c.l.s4 1966171168
    %v2528 = vunpack.c.0.s8 %v2527
    %v2529 = vlaneseq
    %v2530 = vshrl.u32 %v2529, 7
    %v2531 = vsub.s32 %v2528, %v2530
    %v2532 = vrot.slane %v2524, %v2531
    %v2534 = vunpack.c.l.s4 1966171168
    %v2535 = vunpack.c.0.s8 %v2534
    %v2536 = vlaneseq
    %v2537 = vshrl.u32 %v2536, 7
    %v2538 = vsub.s32 %v2535, %v2537
    %v2539 = vrot.slane %v2525, %v2538
    %v2540 = vcombine.low %v2532, %v2539
    %v2542 = vunpack.c.l.s4 1966171168
    %v2543 = vunpack.c.0.s8 %v2542
    %v2544 = vlaneseq
    %v2545 = vshrl.u32 %v2544, 7
    %v2546 = vsub.s32 %v2543, %v2545
    %v2547 = vrot.slane %v2540, %v2546
    %v2549 = vmul.f32 %v2429, %v2547
    %v2551 = vlaneseq
    %v2552 = vshrl.u32 %v2551, 7
    %v2553 = vsub.s32 0, %v2552
    %v2554 = vrot.slane %v2549, %v2553
    %v2555 = vlaneseq
    %v2556 = vshrl.u32 %v2555, 7
    %v2557 = vsub.s32 1, %v2556
    %v2558 = vrot.slane %v2549, %v2557
    %v2559 = vlaneseq
    %v2560 = vshrl.u32 %v2559, 7
    %v2561 = vsub.s32 2, %v2560
    %v2562 = vrot.slane %v2549, %v2561
    %v2563 = vlaneseq
    %v2564 = vshrl.u32 %v2563, 7
    %v2565 = vsub.s32 3, %v2564
    %v2566 = vrot.slane %v2549, %v2565
    %v2571 = vmul.f32 %v2460, %v2554
    %v2572 = vmul.f32 %v2461, %v2558
    %v2573 = vmul.f32 %v2462, %v2562
    %v2574 = vmul.f32 %v2463, %v2566
    %v2579 = vcombine.low %v2571, %v2572
    %v2580 = vcombine.low %v2573, %v2574
    %v2582 = vunpack.c.l.s4 1966171168
    %v2583 = vunpack.c.0.s8 %v2582
    %v2584 = vlaneseq
    %v2585 = vshrl.u32 %v2584, 7
    %v2586 = vsub.s32 %v2583, %v2585
    %v2587 = vrot.slane %v2579, %v2586
    %v2589 = vunpack.c.l.s4 1966171168
    %v2590 = vunpack.c.0.s8 %v2589
    %v2591 = vlaneseq
    %v2592 = vshrl.u32 %v2591, 7
    %v2593 = vsub.s32 %v2590, %v2592
    %v2594 = vrot.slane %v2580, %v2593
    %v2595 = vcombine.low %v2587, %v2594
    %v2597 = vunpack.c.l.s4 1966171168
    %v2598 = vunpack.c.0.s8 %v2597
    %v2599 = vlaneseq
    %v2600 = vshrl.u32 %v2599, 7
    %v2601 = vsub.s32 %v2598, %v2600
    %v2602 = vrot.slane %v2595, %v2601
    %v2604 = vsub.f32 %v2431, %v2602
    %v2605 = vmul.f32 %v2381, %v2554
    %v2606 = vmul.f32 %v2383, %v2558
    %v2607 = vmul.f32 %v2422, %v2562
    %v2608 = vmul.f32 %v2424, %v2566
    %v2610 = vlaneseq
    %v2611 = vshrl.u32 %v2610, 7
    %v2612 = vsub.s32 0, %v2611
    %v2613 = vrot.slane %v2604, %v2612
    %v2614 = vlaneseq
    %v2615 = vshrl.u32 %v2614, 7
    %v2616 = vsub.s32 1, %v2615
    %v2617 = vrot.slane %v2604, %v2616
    %v2618 = vlaneseq
    %v2619 = vshrl.u32 %v2618, 7
    %v2620 = vsub.s32 2, %v2619
    %v2621 = vrot.slane %v2604, %v2620
    %v2622 = vlaneseq
    %v2623 = vshrl.u32 %v2622, 7
    %v2624 = vsub.s32 3, %v2623
    %v2625 = vrot.slane %v2604, %v2624
    %v2630 = vadd.f32 %v2605, %v2613
    %v2631 = vadd.f32 %v2606, %v2617
    %v2632 = vadd.f32 %v2607, %v2621
    %v2633 = vadd.f32 %v2608, %v2625
    %v2634 = vxor.u32 %v2630, 2147483648
    %v2635 = vxor.u32 %v2631, 2147483648
    %v2636 = vxor.u32 %v2632, 2147483648
    %v2637 = vxor.u32 %v2633, 2147483648
    %v2638 = vmul.f32 %v2634, 1.442695
    %v2639 = vpow.pop %v2638
    %v2640 = vmul.f32 %v2635, 1.442695
    %v2641 = vpow.pop %v2640
    %v2642 = vmul.f32 %v2636, 1.442695
    %v2643 = vpow.pop %v2642
    %v2644 = vmul.f32 %v2637, 1.442695
    %v2645 = vpow.pop %v2644
    %v2646 = vadd.f32 %v2639, 1.0
    %v2647 = vadd.f32 %v2641, 1.0
    %v2648 = vadd.f32 %v2643, 1.0
    %v2649 = vadd.f32 %v2645, 1.0
    %v2650 = vrcp.pop %v2646
    %v2651 = vmul.f32 1.0, %v2650
    %v2652 = vrcp.pop %v2647
    %v2653 = vmul.f32 1.0, %v2652
    %v2654 = vrcp.pop %v2648
    %v2655 = vmul.f32 1.0, %v2654
    %v2656 = vrcp.pop %v2649
    %v2657 = vmul.f32 1.0, %v2656
    %v2658 = vld [vmem:[%s113] sm:$0xff]
    %v2659 = vld [vmem:[%s113 + $0x8] sm:$0xff]
    %v2662 = vcombine.high %v2658, %v2658
    %v2663 = vcombine.high %v2659, %v2659
    %v2666 = vmul.f32 %v2651, %v2658
    %v2667 = vmul.f32 %v2653, %v2662
    %v2668 = vmul.f32 %v2655, %v2659
    %v2669 = vmul.f32 %v2657, %v2663
    %v2670 = vadd.f32 %v2149, %v2666
    %v2671 = vadd.f32 %v2150, %v2667
    %v2672 = vadd.f32 %v2151, %v2668
    %v2673 = vadd.f32 %v2152, %v2669
    %s2674 = sshll.u32 %s119, 4
    %2675 = dma.done %s82, %s2674
    %v2676 = vpack.c.bf16 %v2670, %v2670
    %v2677 = vpack.c.bf16 %v2671, %v2671
    %v2678 = vpack.c.bf16 %v2672, %v2672
    %v2679 = vpack.c.bf16 %v2673, %v2673
    %v2680 = vld [vmem:[#allocation4] sm:$0xff]
    %v2681 = vld [vmem:[#allocation4 + $0x8] sm:$0xf]
    %v2682 = vld [vmem:[#allocation4 + $0xc] sm:$0xff]
    %v2683 = vld [vmem:[#allocation4 + $0x14] sm:$0xf]
    %v2684 = vld [vmem:[#allocation4 + $0x18] sm:$0xff]
    %v2685 = vld [vmem:[#allocation4 + $0x20] sm:$0xf]
    %v2686 = vld [vmem:[#allocation4 + $0x24] sm:$0xff]
    %v2687 = vld [vmem:[#allocation4 + $0x2c] sm:$0xf]
    %v2688 = vld [vmem:[#allocation4 + $0x30] sm:$0xff]
    %v2689 = vld [vmem:[#allocation4 + $0x38] sm:$0xf]
    %v2690 = vld [vmem:[#allocation4 + $0x3c] sm:$0xff]
    %v2691 = vld [vmem:[#allocation4 + $0x44] sm:$0xf]
    %v2692 = vld [vmem:[#allocation4 + $0x48] sm:$0xff]
    %v2693 = vld [vmem:[#allocation4 + $0x50] sm:$0xf]
    %v2694 = vld [vmem:[#allocation4 + $0x54] sm:$0xff]
    %v2695 = vld [vmem:[#allocation4 + $0x5c] sm:$0xf]
    %v2696 = vld [vmem:[#allocation4 + $0x60] sm:$0xff]
    %v2697 = vld [vmem:[#allocation4 + $0x68] sm:$0xf]
    %v2698 = vld [vmem:[#allocation4 + $0x6c] sm:$0xff]
    %v2699 = vld [vmem:[#allocation4 + $0x74] sm:$0xf]
    %v2700 = vld [vmem:[#allocation4 + $0x78] sm:$0xff]
    %v2701 = vld [vmem:[#allocation4 + $0x80] sm:$0xf]
    %v2702 = vld [vmem:[#allocation4 + $0x84] sm:$0xff]
    %v2703 = vld [vmem:[#allocation4 + $0x8c] sm:$0xf]
    %v2704 = vld [vmem:[#allocation4 + $0x90] sm:$0xff]
    %v2705 = vld [vmem:[#allocation4 + $0x98] sm:$0xf]
    %v2706 = vld [vmem:[#allocation4 + $0x9c] sm:$0xff]
    %v2707 = vld [vmem:[#allocation4 + $0xa4] sm:$0xf]
    %v2708 = vld [vmem:[#allocation4 + $0xa8] sm:$0xff]
    %v2709 = vld [vmem:[#allocation4 + $0xb0] sm:$0xf]
    %v2710 = vld [vmem:[#allocation4 + $0xb4] sm:$0xff]
    %v2711 = vld [vmem:[#allocation4 + $0xbc] sm:$0xf]
    %v2712 = vld [vmem:[#allocation4 + $0xc0] sm:$0xff]
    %v2713 = vld [vmem:[#allocation4 + $0xc8] sm:$0xf]
    %v2714 = vld [vmem:[#allocation4 + $0xcc] sm:$0xff]
    %v2715 = vld [vmem:[#allocation4 + $0xd4] sm:$0xf]
    %v2716 = vld [vmem:[#allocation4 + $0xd8] sm:$0xff]
    %v2717 = vld [vmem:[#allocation4 + $0xe0] sm:$0xf]
    %v2718 = vld [vmem:[#allocation4 + $0xe4] sm:$0xff]
    %v2719 = vld [vmem:[#allocation4 + $0xec] sm:$0xf]
    %v2720 = vld [vmem:[#allocation4 + $0xf0] sm:$0xff]
    %v2721 = vld [vmem:[#allocation4 + $0xf8] sm:$0xf]
    %v2722 = vld [vmem:[#allocation4 + $0xfc] sm:$0xff]
    %v2723 = vld [vmem:[#allocation4 + $0x104] sm:$0xf]
    %v2724 = vld [vmem:[#allocation4 + $0x108] sm:$0xff]
    %v2725 = vld [vmem:[#allocation4 + $0x110] sm:$0xf]
    %v2726 = vld [vmem:[#allocation4 + $0x114] sm:$0xff]
    %v2727 = vld [vmem:[#allocation4 + $0x11c] sm:$0xf]
    %v2728 = vld [vmem:[#allocation4 + $0x120] sm:$0xff]
    %v2729 = vld [vmem:[#allocation4 + $0x128] sm:$0xf]
    %v2730 = vld [vmem:[#allocation4 + $0x12c] sm:$0xff]
    %v2731 = vld [vmem:[#allocation4 + $0x134] sm:$0xf]
    %v2732 = vld [vmem:[#allocation4 + $0x138] sm:$0xff]
    %v2733 = vld [vmem:[#allocation4 + $0x140] sm:$0xf]
    %v2734 = vld [vmem:[#allocation4 + $0x144] sm:$0xff]
    %v2735 = vld [vmem:[#allocation4 + $0x14c] sm:$0xf]
    %v2736 = vld [vmem:[#allocation4 + $0x150] sm:$0xff]
    %v2737 = vld [vmem:[#allocation4 + $0x158] sm:$0xf]
    %v2738 = vld [vmem:[#allocation4 + $0x15c] sm:$0xff]
    %v2739 = vld [vmem:[#allocation4 + $0x164] sm:$0xf]
    %v2740 = vld [vmem:[#allocation4 + $0x168] sm:$0xff]
    %v2741 = vld [vmem:[#allocation4 + $0x170] sm:$0xf]
    %v2742 = vld [vmem:[#allocation4 + $0x174] sm:$0xff]
    %v2743 = vld [vmem:[#allocation4 + $0x17c] sm:$0xf]
    %v2744 = vld [vmem:[#allocation4 + $0x180] sm:$0xff]
    %v2745 = vld [vmem:[#allocation4 + $0x188] sm:$0xf]
    %v2746 = vld [vmem:[#allocation4 + $0x18c] sm:$0xff]
    %v2747 = vld [vmem:[#allocation4 + $0x194] sm:$0xf]
    %v2748 = vld [vmem:[#allocation4 + $0x198] sm:$0xff]
    %v2749 = vld [vmem:[#allocation4 + $0x1a0] sm:$0xf]
    %v2750 = vld [vmem:[#allocation4 + $0x1a4] sm:$0xff]
    %v2751 = vld [vmem:[#allocation4 + $0x1ac] sm:$0xf]
    %v2752 = vld [vmem:[#allocation4 + $0x1b0] sm:$0xff]
    %v2753 = vld [vmem:[#allocation4 + $0x1b8] sm:$0xf]
    %v2754 = vld [vmem:[#allocation4 + $0x1bc] sm:$0xff]
    %v2755 = vld [vmem:[#allocation4 + $0x1c4] sm:$0xf]
    %v2756 = vld [vmem:[#allocation4 + $0x1c8] sm:$0xff]
    %v2757 = vld [vmem:[#allocation4 + $0x1d0] sm:$0xf]
    %v2758 = vld [vmem:[#allocation4 + $0x1d4] sm:$0xff]
    %v2759 = vld [vmem:[#allocation4 + $0x1dc] sm:$0xf]
    %v2760 = vld [vmem:[#allocation4 + $0x1e0] sm:$0xff]
    %v2761 = vld [vmem:[#allocation4 + $0x1e8] sm:$0xf]
    %v2762 = vld [vmem:[#allocation4 + $0x1ec] sm:$0xff]
    %v2763 = vld [vmem:[#allocation4 + $0x1f4] sm:$0xf]
    %v2764 = vld [vmem:[#allocation4 + $0x1f8] sm:$0xff]
    %v2765 = vld [vmem:[#allocation4 + $0x200] sm:$0xf]
    %v2766 = vld [vmem:[#allocation4 + $0x204] sm:$0xff]
    %v2767 = vld [vmem:[#allocation4 + $0x20c] sm:$0xf]
    %v2768 = vld [vmem:[#allocation4 + $0x210] sm:$0xff]
    %v2769 = vld [vmem:[#allocation4 + $0x218] sm:$0xf]
    %v2770 = vld [vmem:[#allocation4 + $0x21c] sm:$0xff]
    %v2771 = vld [vmem:[#allocation4 + $0x224] sm:$0xf]
    %v2772 = vld [vmem:[#allocation4 + $0x228] sm:$0xff]
    %v2773 = vld [vmem:[#allocation4 + $0x230] sm:$0xf]
    %v2774 = vld [vmem:[#allocation4 + $0x234] sm:$0xff]
    %v2775 = vld [vmem:[#allocation4 + $0x23c] sm:$0xf]
    %v2776 = vld [vmem:[#allocation4 + $0x240] sm:$0xff]
    %v2777 = vld [vmem:[#allocation4 + $0x248] sm:$0xf]
    %v2778 = vld [vmem:[#allocation4 + $0x24c] sm:$0xff]
    %v2779 = vld [vmem:[#allocation4 + $0x254] sm:$0xf]
    %v2780 = vld [vmem:[#allocation4 + $0x258] sm:$0xff]
    %v2781 = vld [vmem:[#allocation4 + $0x260] sm:$0xf]
    %v2782 = vld [vmem:[#allocation4 + $0x264] sm:$0xff]
    %v2783 = vld [vmem:[#allocation4 + $0x26c] sm:$0xf]
    %v2784 = vld [vmem:[#allocation4 + $0x270] sm:$0xff]
    %v2785 = vld [vmem:[#allocation4 + $0x278] sm:$0xf]
    %v2786 = vld [vmem:[#allocation4 + $0x27c] sm:$0xff]
    %v2787 = vld [vmem:[#allocation4 + $0x284] sm:$0xf]
    %v2788 = vld [vmem:[#allocation4 + $0x288] sm:$0xff]
    %v2789 = vld [vmem:[#allocation4 + $0x290] sm:$0xf]
    %v2790 = vld [vmem:[#allocation4 + $0x294] sm:$0xff]
    %v2791 = vld [vmem:[#allocation4 + $0x29c] sm:$0xf]
    %v2792 = vld [vmem:[#allocation4 + $0x2a0] sm:$0xff]
    %v2793 = vld [vmem:[#allocation4 + $0x2a8] sm:$0xf]
    %v2794 = vld [vmem:[#allocation4 + $0x2ac] sm:$0xff]
    %v2795 = vld [vmem:[#allocation4 + $0x2b4] sm:$0xf]
    %v2796 = vld [vmem:[#allocation4 + $0x2b8] sm:$0xff]
    %v2797 = vld [vmem:[#allocation4 + $0x2c0] sm:$0xf]
    %v2798 = vld [vmem:[#allocation4 + $0x2c4] sm:$0xff]
    %v2799 = vld [vmem:[#allocation4 + $0x2cc] sm:$0xf]
    %v2800 = vld [vmem:[#allocation4 + $0x2d0] sm:$0xff]
    %v2801 = vld [vmem:[#allocation4 + $0x2d8] sm:$0xf]
    %v2802 = vld [vmem:[#allocation4 + $0x2dc] sm:$0xff]
    %v2803 = vld [vmem:[#allocation4 + $0x2e4] sm:$0xf]
    %v2804 = vld [vmem:[#allocation4 + $0x2e8] sm:$0xff]
    %v2805 = vld [vmem:[#allocation4 + $0x2f0] sm:$0xf]
    %v2806 = vld [vmem:[#allocation4 + $0x2f4] sm:$0xff]
    %v2807 = vld [vmem:[#allocation4 + $0x2fc] sm:$0xf]
    %v2936 = vunpack.c.l.b16 %v2680
    %v2937 = vunpack.c.h.b16 %v2680
    %v2938 = vunpack.c.l.b16 %v2681
    %v2939 = vunpack.c.l.b16 %v2682
    %v2940 = vunpack.c.h.b16 %v2682
    %v2941 = vunpack.c.l.b16 %v2683
    %v2942 = vunpack.c.l.b16 %v2684
    %v2943 = vunpack.c.h.b16 %v2684
    %v2944 = vunpack.c.l.b16 %v2685
    %v2945 = vunpack.c.l.b16 %v2686
    %v2946 = vunpack.c.h.b16 %v2686
    %v2947 = vunpack.c.l.b16 %v2687
    %v2948 = vunpack.c.l.b16 %v2688
    %v2949 = vunpack.c.h.b16 %v2688
    %v2950 = vunpack.c.l.b16 %v2689
    %v2951 = vunpack.c.l.b16 %v2690
    %v2952 = vunpack.c.h.b16 %v2690
    %v2953 = vunpack.c.l.b16 %v2691
    %v2954 = vunpack.c.l.b16 %v2692
    %v2955 = vunpack.c.h.b16 %v2692
    %v2956 = vunpack.c.l.b16 %v2693
    %v2957 = vunpack.c.l.b16 %v2694
    %v2958 = vunpack.c.h.b16 %v2694
    %v2959 = vunpack.c.l.b16 %v2695
    %v2960 = vunpack.c.l.b16 %v2696
    %v2961 = vunpack.c.h.b16 %v2696
    %v2962 = vunpack.c.l.b16 %v2697
    %v2963 = vunpack.c.l.b16 %v2698
    %v2964 = vunpack.c.h.b16 %v2698
    %v2965 = vunpack.c.l.b16 %v2699
    %v2966 = vunpack.c.l.b16 %v2700
    %v2967 = vunpack.c.h.b16 %v2700
    %v2968 = vunpack.c.l.b16 %v2701
    %v2969 = vunpack.c.l.b16 %v2702
    %v2970 = vunpack.c.h.b16 %v2702
    %v2971 = vunpack.c.l.b16 %v2703
    %v2972 = vunpack.c.l.b16 %v2704
    %v2973 = vunpack.c.h.b16 %v2704
    %v2974 = vunpack.c.l.b16 %v2705
    %v2975 = vunpack.c.l.b16 %v2706
    %v2976 = vunpack.c.h.b16 %v2706
    %v2977 = vunpack.c.l.b16 %v2707
    %v2978 = vunpack.c.l.b16 %v2708
    %v2979 = vunpack.c.h.b16 %v2708
    %v2980 = vunpack.c.l.b16 %v2709
    %v2981 = vunpack.c.l.b16 %v2710
    %v2982 = vunpack.c.h.b16 %v2710
    %v2983 = vunpack.c.l.b16 %v2711
    %v2984 = vunpack.c.l.b16 %v2712
    %v2985 = vunpack.c.h.b16 %v2712
    %v2986 = vunpack.c.l.b16 %v2713
    %v2987 = vunpack.c.l.b16 %v2714
    %v2988 = vunpack.c.h.b16 %v2714
    %v2989 = vunpack.c.l.b16 %v2715
    %v2990 = vunpack.c.l.b16 %v2716
    %v2991 = vunpack.c.h.b16 %v2716
    %v2992 = vunpack.c.l.b16 %v2717
    %v2993 = vunpack.c.l.b16 %v2718
    %v2994 = vunpack.c.h.b16 %v2718
    %v2995 = vunpack.c.l.b16 %v2719
    %v2996 = vunpack.c.l.b16 %v2720
    %v2997 = vunpack.c.h.b16 %v2720
    %v2998 = vunpack.c.l.b16 %v2721
    %v2999 = vunpack.c.l.b16 %v2722
    %v3000 = vunpack.c.h.b16 %v2722
    %v3001 = vunpack.c.l.b16 %v2723
    %v3002 = vunpack.c.l.b16 %v2724
    %v3003 = vunpack.c.h.b16 %v2724
    %v3004 = vunpack.c.l.b16 %v2725
    %v3005 = vunpack.c.l.b16 %v2726
    %v3006 = vunpack.c.h.b16 %v2726
    %v3007 = vunpack.c.l.b16 %v2727
    %v3008 = vunpack.c.l.b16 %v2728
    %v3009 = vunpack.c.h.b16 %v2728
    %v3010 = vunpack.c.l.b16 %v2729
    %v3011 = vunpack.c.l.b16 %v2730
    %v3012 = vunpack.c.h.b16 %v2730
    %v3013 = vunpack.c.l.b16 %v2731
    %v3014 = vunpack.c.l.b16 %v2732
    %v3015 = vunpack.c.h.b16 %v2732
    %v3016 = vunpack.c.l.b16 %v2733
    %v3017 = vunpack.c.l.b16 %v2734
    %v3018 = vunpack.c.h.b16 %v2734
    %v3019 = vunpack.c.l.b16 %v2735
    %v3020 = vunpack.c.l.b16 %v2736
    %v3021 = vunpack.c.h.b16 %v2736
    %v3022 = vunpack.c.l.b16 %v2737
    %v3023 = vunpack.c.l.b16 %v2738
    %v3024 = vunpack.c.h.b16 %v2738
    %v3025 = vunpack.c.l.b16 %v2739
    %v3026 = vunpack.c.l.b16 %v2740
    %v3027 = vunpack.c.h.b16 %v2740
    %v3028 = vunpack.c.l.b16 %v2741
    %v3029 = vunpack.c.l.b16 %v2742
    %v3030 = vunpack.c.h.b16 %v2742
    %v3031 = vunpack.c.l.b16 %v2743
    %v3032 = vunpack.c.l.b16 %v2744
    %v3033 = vunpack.c.h.b16 %v2744
    %v3034 = vunpack.c.l.b16 %v2745
    %v3035 = vunpack.c.l.b16 %v2746
    %v3036 = vunpack.c.h.b16 %v2746
    %v3037 = vunpack.c.l.b16 %v2747
    %v3038 = vunpack.c.l.b16 %v2748
    %v3039 = vunpack.c.h.b16 %v2748
    %v3040 = vunpack.c.l.b16 %v2749
    %v3041 = vunpack.c.l.b16 %v2750
    %v3042 = vunpack.c.h.b16 %v2750
    %v3043 = vunpack.c.l.b16 %v2751
    %v3044 = vunpack.c.l.b16 %v2752
    %v3045 = vunpack.c.h.b16 %v2752
    %v3046 = vunpack.c.l.b16 %v2753
    %v3047 = vunpack.c.l.b16 %v2754
    %v3048 = vunpack.c.h.b16 %v2754
    %v3049 = vunpack.c.l.b16 %v2755
    %v3050 = vunpack.c.l.b16 %v2756
    %v3051 = vunpack.c.h.b16 %v2756
    %v3052 = vunpack.c.l.b16 %v2757
    %v3053 = vunpack.c.l.b16 %v2758
    %v3054 = vunpack.c.h.b16 %v2758
    %v3055 = vunpack.c.l.b16 %v2759
    %v3056 = vunpack.c.l.b16 %v2760
    %v3057 = vunpack.c.h.b16 %v2760
    %v3058 = vunpack.c.l.b16 %v2761
    %v3059 = vunpack.c.l.b16 %v2762
    %v3060 = vunpack.c.h.b16 %v2762
    %v3061 = vunpack.c.l.b16 %v2763
    %v3062 = vunpack.c.l.b16 %v2764
    %v3063 = vunpack.c.h.b16 %v2764
    %v3064 = vunpack.c.l.b16 %v2765
    %v3065 = vunpack.c.l.b16 %v2766
    %v3066 = vunpack.c.h.b16 %v2766
    %v3067 = vunpack.c.l.b16 %v2767
    %v3068 = vunpack.c.l.b16 %v2768
    %v3069 = vunpack.c.h.b16 %v2768
    %v3070 = vunpack.c.l.b16 %v2769
    %v3071 = vunpack.c.l.b16 %v2770
    %v3072 = vunpack.c.h.b16 %v2770
    %v3073 = vunpack.c.l.b16 %v2771
    %v3074 = vunpack.c.l.b16 %v2772
    %v3075 = vunpack.c.h.b16 %v2772
    %v3076 = vunpack.c.l.b16 %v2773
    %v3077 = vunpack.c.l.b16 %v2774
    %v3078 = vunpack.c.h.b16 %v2774
    %v3079 = vunpack.c.l.b16 %v2775
    %v3080 = vunpack.c.l.b16 %v2776
    %v3081 = vunpack.c.h.b16 %v2776
    %v3082 = vunpack.c.l.b16 %v2777
    %v3083 = vunpack.c.l.b16 %v2778
    %v3084 = vunpack.c.h.b16 %v2778
    %v3085 = vunpack.c.l.b16 %v2779
    %v3086 = vunpack.c.l.b16 %v2780
    %v3087 = vunpack.c.h.b16 %v2780
    %v3088 = vunpack.c.l.b16 %v2781
    %v3089 = vunpack.c.l.b16 %v2782
    %v3090 = vunpack.c.h.b16 %v2782
    %v3091 = vunpack.c.l.b16 %v2783
    %v3092 = vunpack.c.l.b16 %v2784
    %v3093 = vunpack.c.h.b16 %v2784
    %v3094 = vunpack.c.l.b16 %v2785
    %v3095 = vunpack.c.l.b16 %v2786
    %v3096 = vunpack.c.h.b16 %v2786
    %v3097 = vunpack.c.l.b16 %v2787
    %v3098 = vunpack.c.l.b16 %v2788
    %v3099 = vunpack.c.h.b16 %v2788
    %v3100 = vunpack.c.l.b16 %v2789
    %v3101 = vunpack.c.l.b16 %v2790
    %v3102 = vunpack.c.h.b16 %v2790
    %v3103 = vunpack.c.l.b16 %v2791
    %v3104 = vunpack.c.l.b16 %v2792
    %v3105 = vunpack.c.h.b16 %v2792
    %v3106 = vunpack.c.l.b16 %v2793
    %v3107 = vunpack.c.l.b16 %v2794
    %v3108 = vunpack.c.h.b16 %v2794
    %v3109 = vunpack.c.l.b16 %v2795
    %v3110 = vunpack.c.l.b16 %v2796
    %v3111 = vunpack.c.h.b16 %v2796
    %v3112 = vunpack.c.l.b16 %v2797
    %v3113 = vunpack.c.l.b16 %v2798
    %v3114 = vunpack.c.h.b16 %v2798
    %v3115 = vunpack.c.l.b16 %v2799
    %v3116 = vunpack.c.l.b16 %v2800
    %v3117 = vunpack.c.h.b16 %v2800
    %v3118 = vunpack.c.l.b16 %v2801
    %v3119 = vunpack.c.l.b16 %v2802
    %v3120 = vunpack.c.h.b16 %v2802
    %v3121 = vunpack.c.l.b16 %v2803
    %v3122 = vunpack.c.l.b16 %v2804
    %v3123 = vunpack.c.h.b16 %v2804
    %v3124 = vunpack.c.l.b16 %v2805
    %v3125 = vunpack.c.l.b16 %v2806
    %v3126 = vunpack.c.h.b16 %v2806
    %v3127 = vunpack.c.l.b16 %v2807
    %v3128 = vpack.c.b16 %v2939, %v2936
    %v3129 = vpack.c.b16 %v2940, %v2937
    %v3130 = vpack.c.b16 %v2941, %v2938
    %v3131 = vpack.c.b16 %v2945, %v2942
    %v3132 = vpack.c.b16 %v2946, %v2943
    %v3133 = vpack.c.b16 %v2947, %v2944
    %v3134 = vpack.c.b16 %v2951, %v2948
    %v3135 = vpack.c.b16 %v2952, %v2949
    %v3136 = vpack.c.b16 %v2953, %v2950
    %v3137 = vpack.c.b16 %v2957, %v2954
    %v3138 = vpack.c.b16 %v2958, %v2955
    %v3139 = vpack.c.b16 %v2959, %v2956
    %v3140 = vpack.c.b16 %v2963, %v2960
    %v3141 = vpack.c.b16 %v2964, %v2961
    %v3142 = vpack.c.b16 %v2965, %v2962
    %v3143 = vpack.c.b16 %v2969, %v2966
    %v3144 = vpack.c.b16 %v2970, %v2967
    %v3145 = vpack.c.b16 %v2971, %v2968
    %v3146 = vpack.c.b16 %v2975, %v2972
    %v3147 = vpack.c.b16 %v2976, %v2973
    %v3148 = vpack.c.b16 %v2977, %v2974
    %v3149 = vpack.c.b16 %v2981, %v2978
    %v3150 = vpack.c.b16 %v2982, %v2979
    %v3151 = vpack.c.b16 %v2983, %v2980
    %v3152 = vpack.c.b16 %v2987, %v2984
    %v3153 = vpack.c.b16 %v2988, %v2985
    %v3154 = vpack.c.b16 %v2989, %v2986
    %v3155 = vpack.c.b16 %v2993, %v2990
    %v3156 = vpack.c.b16 %v2994, %v2991
    %v3157 = vpack.c.b16 %v2995, %v2992
    %v3158 = vpack.c.b16 %v2999, %v2996
    %v3159 = vpack.c.b16 %v3000, %v2997
    %v3160 = vpack.c.b16 %v3001, %v2998
    %v3161 = vpack.c.b16 %v3005, %v3002
    %v3162 = vpack.c.b16 %v3006, %v3003
    %v3163 = vpack.c.b16 %v3007, %v3004
    %v3164 = vpack.c.b16 %v3011, %v3008
    %v3165 = vpack.c.b16 %v3012, %v3009
    %v3166 = vpack.c.b16 %v3013, %v3010
    %v3167 = vpack.c.b16 %v3017, %v3014
    %v3168 = vpack.c.b16 %v3018, %v3015
    %v3169 = vpack.c.b16 %v3019, %v3016
    %v3170 = vpack.c.b16 %v3023, %v3020
    %v3171 = vpack.c.b16 %v3024, %v3021
    %v3172 = vpack.c.b16 %v3025, %v3022
    %v3173 = vpack.c.b16 %v3029, %v3026
    %v3174 = vpack.c.b16 %v3030, %v3027
    %v3175 = vpack.c.b16 %v3031, %v3028
    %v3176 = vpack.c.b16 %v3035, %v3032
    %v3177 = vpack.c.b16 %v3036, %v3033
    %v3178 = vpack.c.b16 %v3037, %v3034
    %v3179 = vpack.c.b16 %v3041, %v3038
    %v3180 = vpack.c.b16 %v3042, %v3039
    %v3181 = vpack.c.b16 %v3043, %v3040
    %v3182 = vpack.c.b16 %v3047, %v3044
    %v3183 = vpack.c.b16 %v3048, %v3045
    %v3184 = vpack.c.b16 %v3049, %v3046
    %v3185 = vpack.c.b16 %v3053, %v3050
    %v3186 = vpack.c.b16 %v3054, %v3051
    %v3187 = vpack.c.b16 %v3055, %v3052
    %v3188 = vpack.c.b16 %v3059, %v3056
    %v3189 = vpack.c.b16 %v3060, %v3057
    %v3190 = vpack.c.b16 %v3061, %v3058
    %v3191 = vpack.c.b16 %v3065, %v3062
    %v3192 = vpack.c.b16 %v3066, %v3063
    %v3193 = vpack.c.b16 %v3067, %v3064
    %v3194 = vpack.c.b16 %v3071, %v3068
    %v3195 = vpack.c.b16 %v3072, %v3069
    %v3196 = vpack.c.b16 %v3073, %v3070
    %v3197 = vpack.c.b16 %v3077, %v3074
    %v3198 = vpack.c.b16 %v3078, %v3075
    %v3199 = vpack.c.b16 %v3079, %v3076
    %v3200 = vpack.c.b16 %v3083, %v3080
    %v3201 = vpack.c.b16 %v3084, %v3081
    %v3202 = vpack.c.b16 %v3085, %v3082
    %v3203 = vpack.c.b16 %v3089, %v3086
    %v3204 = vpack.c.b16 %v3090, %v3087
    %v3205 = vpack.c.b16 %v3091, %v3088
    %v3206 = vpack.c.b16 %v3095, %v3092
    %v3207 = vpack.c.b16 %v3096, %v3093
    %v3208 = vpack.c.b16 %v3097, %v3094
    %v3209 = vpack.c.b16 %v3101, %v3098
    %v3210 = vpack.c.b16 %v3102, %v3099
    %v3211 = vpack.c.b16 %v3103, %v3100
    %v3212 = vpack.c.b16 %v3107, %v3104
    %v3213 = vpack.c.b16 %v3108, %v3105
    %v3214 = vpack.c.b16 %v3109, %v3106
    %v3215 = vpack.c.b16 %v3113, %v3110
    %v3216 = vpack.c.b16 %v3114, %v3111
    %v3217 = vpack.c.b16 %v3115, %v3112
    %v3218 = vpack.c.b16 %v3119, %v3116
    %v3219 = vpack.c.b16 %v3120, %v3117
    %v3220 = vpack.c.b16 %v3121, %v3118
    %v3221 = vpack.c.b16 %v3125, %v3122
    %v3222 = vpack.c.b16 %v3126, %v3123
    %v3223 = vpack.c.b16 %v3127, %v3124
    %3320 = vmatprep.subr.bf16.mxu0 %v3150
    %3321 = vmatpush1.bf16.msra.mxu0 %v3149
    %3322 = vmatprep.subr.bf16.mxu0 %v3147
    %3323 = vmatpush1.bf16.msra.mxu0 %v3146
    %3324 = vmatprep.subr.bf16.mxu0 %v3144
    %3325 = vmatpush1.bf16.msra.mxu0 %v3143
    %3326 = vmatprep.subr.bf16.mxu0 %v3141
    %3327 = vmatpush1.bf16.msra.mxu0 %v3140
    %3328 = vmatprep.subr.bf16.mxu0 %v3138
    %3329 = vmatpush1.bf16.msra.mxu0 %v3137
    %3330 = vmatprep.subr.bf16.mxu0 %v3135
    %3331 = vmatpush1.bf16.msra.mxu0 %v3134
    %3332 = vmatprep.subr.bf16.mxu0 %v3132
    %3333 = vmatpush1.bf16.msra.mxu0 %v3131
    %3334 = vmatprep.subr.bf16.mxu0 %v3129
    %3335 = vmatpush1.bf16.msra.mxu0 %v3128
    %3336 = vmatprep.subr.bf16.mxu0 %v3174
    %3337 = vmatpush2.bf16.msra.mxu0 %v3173
    %3338 = vmatprep.subr.bf16.mxu0 %v3171
    %3339 = vmatpush2.bf16.msra.mxu0 %v3170
    %3340 = vmatprep.subr.bf16.mxu0 %v3168
    %3341 = vmatpush2.bf16.msra.mxu0 %v3167
    %3342 = vmatprep.subr.bf16.mxu0 %v3165
    %3343 = vmatpush2.bf16.msra.mxu0 %v3164
    %3344 = vmatprep.subr.bf16.mxu0 %v3162
    %3345 = vmatpush2.bf16.msra.mxu0 %v3161
    %3346 = vmatprep.subr.bf16.mxu0 %v3159
    %3347 = vmatpush2.bf16.msra.mxu0 %v3158
    %3348 = vmatprep.subr.bf16.mxu0 %v3156
    %3349 = vmatpush2.bf16.msra.mxu0 %v3155
    %3350 = vmatprep.subr.bf16.mxu0 %v3153
    %3351 = vmatpush2.bf16.msra.mxu0 %v3152
    %3352 = vmatprep.mubr.bf16.mxu0 %v2677
    %3353 = vmatmul.mubr.bf16.gmra.mxu0 %v2676
    %v3354 = vpop.f32.mrf.mxu0
    %v3355 = vadd.f32 0.0, %v3354
    %v3356 = vpop.f32.mrf.mxu0
    %v3357 = vadd.f32 0.0, %v3356
    %v3358 = vpop.f32.mrf.mxu0
    %v3359 = vpop.f32.mrf.mxu0
    %3360 = vdwg.mxu0
    %3361 = vmatprep.subr.bf16.mxu0 %v3198
    %3362 = vmatpush1.bf16.msra.mxu0 %v3197
    %3363 = vmatprep.subr.bf16.mxu0 %v3195
    %3364 = vmatpush1.bf16.msra.mxu0 %v3194
    %3365 = vmatprep.subr.bf16.mxu0 %v3192
    %3366 = vmatpush1.bf16.msra.mxu0 %v3191
    %3367 = vmatprep.subr.bf16.mxu0 %v3189
    %3368 = vmatpush1.bf16.msra.mxu0 %v3188
    %3369 = vmatprep.subr.bf16.mxu0 %v3186
    %3370 = vmatpush1.bf16.msra.mxu0 %v3185
    %3371 = vmatprep.subr.bf16.mxu0 %v3183
    %3372 = vmatpush1.bf16.msra.mxu0 %v3182
    %3373 = vmatprep.subr.bf16.mxu0 %v3180
    %3374 = vmatpush1.bf16.msra.mxu0 %v3179
    %3375 = vmatprep.subr.bf16.mxu0 %v3177
    %3376 = vmatpush1.bf16.msra.mxu0 %v3176
    %3377 = vmatprep.subr.bf16.mxu0 %v3222
    %3378 = vmatpush2.bf16.msra.mxu0 %v3221
    %3379 = vmatprep.subr.bf16.mxu0 %v3219
    %3380 = vmatpush2.bf16.msra.mxu0 %v3218
    %3381 = vmatprep.subr.bf16.mxu0 %v3216
    %3382 = vmatpush2.bf16.msra.mxu0 %v3215
    %3383 = vmatprep.subr.bf16.mxu0 %v3213
    %3384 = vmatpush2.bf16.msra.mxu0 %v3212
    %3385 = vmatprep.subr.bf16.mxu0 %v3210
    %3386 = vmatpush2.bf16.msra.mxu0 %v3209
    %3387 = vmatprep.subr.bf16.mxu0 %v3207
    %3388 = vmatpush2.bf16.msra.mxu0 %v3206
    %3389 = vmatprep.subr.bf16.mxu0 %v3204
    %3390 = vmatpush2.bf16.msra.mxu0 %v3203
    %3391 = vmatprep.subr.bf16.mxu0 %v3201
    %3392 = vmatpush2.bf16.msra.mxu0 %v3200
    %3393 = vmatprep.mubr.bf16.mxu0 %v2679
    %3394 = vmatmul.mubr.bf16.gmra.mxu0 %v2678
    %v3395 = vpop.f32.mrf.mxu0
    %v3396 = vadd.f32 %v3355, %v3395
    %v3397 = vpop.f32.mrf.mxu0
    %v3398 = vadd.f32 %v3357, %v3397
    %v3399 = vpop.f32.mrf.mxu0
    %v3400 = vpop.f32.mrf.mxu0
    %3401 = vdwg.mxu0
    %3402 = vmatprep.subr.bf16.mxu0 0
    %3403 = vmatpush1.bf16.msra.mxu0 %v3151
    %3404 = vmatprep.subr.bf16.mxu0 0
    %3405 = vmatpush1.bf16.msra.mxu0 %v3148
    %3406 = vmatprep.subr.bf16.mxu0 0
    %3407 = vmatpush1.bf16.msra.mxu0 %v3145
    %3408 = vmatprep.subr.bf16.mxu0 0
    %3409 = vmatpush1.bf16.msra.mxu0 %v3142
    %3410 = vmatprep.subr.bf16.mxu0 0
    %3411 = vmatpush1.bf16.msra.mxu0 %v3139
    %3412 = vmatprep.subr.bf16.mxu0 0
    %3413 = vmatpush1.bf16.msra.mxu0 %v3136
    %3414 = vmatprep.subr.bf16.mxu0 0
    %3415 = vmatpush1.bf16.msra.mxu0 %v3133
    %3416 = vmatprep.subr.bf16.mxu0 0
    %3417 = vmatpush1.bf16.msra.mxu0 %v3130
    %3418 = vmatprep.subr.bf16.mxu0 0
    %3419 = vmatpush2.bf16.msra.mxu0 %v3175
    %3420 = vmatprep.subr.bf16.mxu0 0
    %3421 = vmatpush2.bf16.msra.mxu0 %v3172
    %3422 = vmatprep.subr.bf16.mxu0 0
    %3423 = vmatpush2.bf16.msra.mxu0 %v3169
    %3424 = vmatprep.subr.bf16.mxu0 0
    %3425 = vmatpush2.bf16.msra.mxu0 %v3166
    %3426 = vmatprep.subr.bf16.mxu0 0
    %3427 = vmatpush2.bf16.msra.mxu0 %v3163
    %3428 = vmatprep.subr.bf16.mxu0 0
    %3429 = vmatpush2.bf16.msra.mxu0 %v3160
    %3430 = vmatprep.subr.bf16.mxu0 0
    %3431 = vmatpush2.bf16.msra.mxu0 %v3157
    %3432 = vmatprep.subr.bf16.mxu0 0
    %3433 = vmatpush2.bf16.msra.mxu0 %v3154
    %3434 = vmatprep.mubr.bf16.mxu0 %v2677
    %3435 = vmatmul.mubr.bf16.gmra.mxu0 %v2676
    %v3436 = vpop.f32.mrf.mxu0
    %v3437 = vadd.f32 0.0, %v3436
    %v3438 = vpop.f32.mrf.mxu0
    %v3439 = vpop.f32.mrf.mxu0
    %v3440 = vpop.f32.mrf.mxu0
    %3441 = vdwg.mxu0
    %3442 = vmatprep.subr.bf16.mxu0 0
    %3443 = vmatpush1.bf16.msra.mxu0 %v3199
    %3444 = vmatprep.subr.bf16.mxu0 0
    %3445 = vmatpush1.bf16.msra.mxu0 %v3196
    %3446 = vmatprep.subr.bf16.mxu0 0
    %3447 = vmatpush1.bf16.msra.mxu0 %v3193
    %3448 = vmatprep.subr.bf16.mxu0 0
    %3449 = vmatpush1.bf16.msra.mxu0 %v3190
    %3450 = vmatprep.subr.bf16.mxu0 0
    %3451 = vmatpush1.bf16.msra.mxu0 %v3187
    %3452 = vmatprep.subr.bf16.mxu0 0
    %3453 = vmatpush1.bf16.msra.mxu0 %v3184
    %3454 = vmatprep.subr.bf16.mxu0 0
    %3455 = vmatpush1.bf16.msra.mxu0 %v3181
    %3456 = vmatprep.subr.bf16.mxu0 0
    %3457 = vmatpush1.bf16.msra.mxu0 %v3178
    %3458 = vmatprep.subr.bf16.mxu0 0
    %3459 = vmatpush2.bf16.msra.mxu0 %v3223
    %3460 = vmatprep.subr.bf16.mxu0 0
    %3461 = vmatpush2.bf16.msra.mxu0 %v3220
    %3462 = vmatprep.subr.bf16.mxu0 0
    %3463 = vmatpush2.bf16.msra.mxu0 %v3217
    %3464 = vmatprep.subr.bf16.mxu0 0
    %3465 = vmatpush2.bf16.msra.mxu0 %v3214
    %3466 = vmatprep.subr.bf16.mxu0 0
    %3467 = vmatpush2.bf16.msra.mxu0 %v3211
    %3468 = vmatprep.subr.bf16.mxu0 0
    %3469 = vmatpush2.bf16.msra.mxu0 %v3208
    %3470 = vmatprep.subr.bf16.mxu0 0
    %3471 = vmatpush2.bf16.msra.mxu0 %v3205
    %3472 = vmatprep.subr.bf16.mxu0 0
    %3473 = vmatpush2.bf16.msra.mxu0 %v3202
    %3474 = vmatprep.mubr.bf16.mxu0 %v2679
    %3475 = vmatmul.mubr.bf16.gmra.mxu0 %v2678
    %v3476 = vpop.f32.mrf.mxu0
    %v3477 = vadd.f32 %v3437, %v3476
    %v3478 = vpop.f32.mrf.mxu0
    %v3479 = vpop.f32.mrf.mxu0
    %v3480 = vpop.f32.mrf.mxu0
    %3481 = vdwg.mxu0
    %s3482 = scalar_lea.vmem [#allocation10], 2
    %v3483 = vld [vmem:[%s3482] ss:$4 sm:$0x7]
    %s3484 = scalar_lea.vmem [#allocation10], 3
    %v3485 = vld [vmem:[%s3484] ss:$4 sm:$0x7]
    %v3486 = vsel %vm937, %v3396, 0.0
    %v3487 = vrot.slane %v3486, 4
    %v3488 = vadd.f32 %v3486, %v3487
    %v3489 = vrot.slane %v3488, 2
    %v3490 = vadd.f32 %v3488, %v3489
    %v3491 = vrot.slane %v3490, 1
    %v3492 = vadd.f32 %v3490, %v3491
    %v3493 = vsel %vm937, %v3398, 0.0
    %v3494 = vrot.slane %v3493, 4
    %v3495 = vadd.f32 %v3493, %v3494
    %v3496 = vrot.slane %v3495, 2
    %v3497 = vadd.f32 %v3495, %v3496
    %v3498 = vrot.slane %v3497, 1
    %v3499 = vadd.f32 %v3497, %v3498
    %v3500 = vsel %vm937, %v3477, 0.0
    %v3501 = vrot.slane %v3500, 4
    %v3502 = vadd.f32 %v3500, %v3501
    %v3503 = vrot.slane %v3502, 2
    %v3504 = vadd.f32 %v3502, %v3503
    %v3505 = vrot.slane %v3504, 1
    %v3506 = vadd.f32 %v3504, %v3505
    %v3507 = vmul.f32 %v3492, %v959
    %v3508 = vmul.f32 %v3499, %v959
    %v3509 = vmul.f32 %v3506, %v959
    %v3510 = vmul.f32 %v3396, %v3396
    %v3511 = vmul.f32 %v3398, %v3398
    %v3512 = vmul.f32 %v3477, %v3477
    %v3513 = vsel %vm937, %v3510, 0.0
    %v3514 = vrot.slane %v3513, 4
    %v3515 = vadd.f32 %v3513, %v3514
    %v3516 = vrot.slane %v3515, 2
    %v3517 = vadd.f32 %v3515, %v3516
    %v3518 = vrot.slane %v3517, 1
    %v3519 = vadd.f32 %v3517, %v3518
    %v3520 = vsel %vm937, %v3511, 0.0
    %v3521 = vrot.slane %v3520, 4
    %v3522 = vadd.f32 %v3520, %v3521
    %v3523 = vrot.slane %v3522, 2
    %v3524 = vadd.f32 %v3522, %v3523
    %v3525 = vrot.slane %v3524, 1
    %v3526 = vadd.f32 %v3524, %v3525
    %v3527 = vsel %vm937, %v3512, 0.0
    %v3528 = vrot.slane %v3527, 4
    %v3529 = vadd.f32 %v3527, %v3528
    %v3530 = vrot.slane %v3529, 2
    %v3531 = vadd.f32 %v3529, %v3530
    %v3532 = vrot.slane %v3531, 1
    %v3533 = vadd.f32 %v3531, %v3532
    %v3534 = vmul.f32 %v3519, %v959
    %v3535 = vmul.f32 %v3526, %v959
    %v3536 = vmul.f32 %v3533, %v959
    %v3537 = vmul.f32 %v3507, %v3507
    %v3538 = vmul.f32 %v3508, %v3508
    %v3539 = vmul.f32 %v3509, %v3509
    %v3540 = vsub.f32 %v3534, %v3537
    %v3541 = vsub.f32 %v3535, %v3538
    %v3542 = vsub.f32 %v3536, %v3539
    %v3543 = vmax.f32 %v3540, 0.0
    %v3544 = vmax.f32 %v3541, 0.0
    %v3545 = vmax.f32 %v3542, 0.0
    %v3546 = vadd.f32 %v3543, 1e-05
    %v3547 = vadd.f32 %v3544, 1e-05
    %v3548 = vadd.f32 %v3545, 1e-05
    %v3549 = vrsqrt.pop %v3546
    %v3550 = vrsqrt.pop %v3547
    %v3551 = vrsqrt.pop %v3548
    %v3555 = vcombine.low %v3549, %v3550
    %v3557 = vunpack.c.l.s4 1966171168
    %v3558 = vunpack.c.0.s8 %v3557
    %v3559 = vlaneseq
    %v3560 = vshrl.u32 %v3559, 7
    %v3561 = vsub.s32 %v3558, %v3560
    %v3562 = vrot.slane %v3555, %v3561
    %v3564 = vunpack.c.l.s4 1966171168
    %v3565 = vunpack.c.0.s8 %v3564
    %v3566 = vlaneseq
    %v3567 = vshrl.u32 %v3566, 7
    %v3568 = vsub.s32 %v3565, %v3567
    %v3569 = vrot.slane %v3551, %v3568
    %v3570 = vcombine.low %v3562, %v3569
    %v3572 = vunpack.c.l.s4 1966171168
    %v3573 = vunpack.c.0.s8 %v3572
    %v3574 = vlaneseq
    %v3575 = vshrl.u32 %v3574, 7
    %v3576 = vsub.s32 %v3573, %v3575
    %v3577 = vrot.slane %v3570, %v3576
    %v3579 = vmul.f32 %v3483, %v3577
    %v3581 = vlaneseq
    %v3582 = vshrl.u32 %v3581, 7
    %v3583 = vsub.s32 0, %v3582
    %v3584 = vrot.slane %v3579, %v3583
    %v3585 = vlaneseq
    %v3586 = vshrl.u32 %v3585, 7
    %v3587 = vsub.s32 1, %v3586
    %v3588 = vrot.slane %v3579, %v3587
    %v3589 = vlaneseq
    %v3590 = vshrl.u32 %v3589, 7
    %v3591 = vsub.s32 2, %v3590
    %v3592 = vrot.slane %v3579, %v3591
    %v3596 = vmul.f32 %v3507, %v3584
    %v3597 = vmul.f32 %v3508, %v3588
    %v3598 = vmul.f32 %v3509, %v3592
    %v3602 = vcombine.low %v3596, %v3597
    %v3604 = vunpack.c.l.s4 1966171168
    %v3605 = vunpack.c.0.s8 %v3604
    %v3606 = vlaneseq
    %v3607 = vshrl.u32 %v3606, 7
    %v3608 = vsub.s32 %v3605, %v3607
    %v3609 = vrot.slane %v3602, %v3608
    %v3611 = vunpack.c.l.s4 1966171168
    %v3612 = vunpack.c.0.s8 %v3611
    %v3613 = vlaneseq
    %v3614 = vshrl.u32 %v3613, 7
    %v3615 = vsub.s32 %v3612, %v3614
    %v3616 = vrot.slane %v3598, %v3615
    %v3617 = vcombine.low %v3609, %v3616
    %v3619 = vunpack.c.l.s4 1966171168
    %v3620 = vunpack.c.0.s8 %v3619
    %v3621 = vlaneseq
    %v3622 = vshrl.u32 %v3621, 7
    %v3623 = vsub.s32 %v3620, %v3622
    %v3624 = vrot.slane %v3617, %v3623
    %v3626 = vsub.f32 %v3485, %v3624
    %v3627 = vmul.f32 %v3396, %v3584
    %v3628 = vmul.f32 %v3398, %v3588
    %v3629 = vmul.f32 %v3477, %v3592
    %v3631 = vlaneseq
    %v3632 = vshrl.u32 %v3631, 7
    %v3633 = vsub.s32 0, %v3632
    %v3634 = vrot.slane %v3626, %v3633
    %v3635 = vlaneseq
    %v3636 = vshrl.u32 %v3635, 7
    %v3637 = vsub.s32 1, %v3636
    %v3638 = vrot.slane %v3626, %v3637
    %v3639 = vlaneseq
    %v3640 = vshrl.u32 %v3639, 7
    %v3641 = vsub.s32 2, %v3640
    %v3642 = vrot.slane %v3626, %v3641
    %v3646 = vadd.f32 %v3627, %v3634
    %v3647 = vadd.f32 %v3628, %v3638
    %v3648 = vadd.f32 %v3629, %v3642
    %v3649 = vmax.f32 %v3646, 0.0
    %v3650 = vmax.f32 %v3647, 0.0
    %v3651 = vmax.f32 %v3648, 0.0
    %v3652 = vpack.c.bf16 %v3649, %v3649
    %v3653 = vpack.c.bf16 %v3650, %v3650
    %v3654 = vpack.c.bf16 %v3651, %v3651
    %s3655 = sshll.u32 %s1110, 4
    %3656 = dma.done %s94, %s3655
    %v3657 = vld [vmem:[#allocation5] sm:$0xff]
    %v3658 = vld [vmem:[#allocation5 + $0x8] sm:$0xff]
    %v3659 = vld [vmem:[#allocation5 + $0x10] sm:$0xff]
    %v3660 = vld [vmem:[#allocation5 + $0x18] sm:$0xff]
    %v3661 = vld [vmem:[#allocation5 + $0x20] sm:$0xff]
    %v3662 = vld [vmem:[#allocation5 + $0x28] sm:$0xff]
    %v3663 = vld [vmem:[#allocation5 + $0x30] sm:$0xff]
    %v3664 = vld [vmem:[#allocation5 + $0x38] sm:$0xff]
    %v3665 = vld [vmem:[#allocation5 + $0x40] sm:$0xff]
    %v3666 = vld [vmem:[#allocation5 + $0x48] sm:$0xff]
    %v3667 = vld [vmem:[#allocation5 + $0x50] sm:$0xff]
    %v3668 = vld [vmem:[#allocation5 + $0x58] sm:$0xff]
    %v3669 = vld [vmem:[#allocation5 + $0x60] sm:$0xff]
    %v3670 = vld [vmem:[#allocation5 + $0x68] sm:$0xff]
    %v3671 = vld [vmem:[#allocation5 + $0x70] sm:$0xff]
    %v3672 = vld [vmem:[#allocation5 + $0x78] sm:$0xff]
    %v3673 = vld [vmem:[#allocation5 + $0x80] sm:$0xff]
    %v3674 = vld [vmem:[#allocation5 + $0x88] sm:$0xff]
    %v3675 = vld [vmem:[#allocation5 + $0x90] sm:$0xff]
    %v3676 = vld [vmem:[#allocation5 + $0x98] sm:$0xff]
    %v3677 = vld [vmem:[#allocation5 + $0xa0] sm:$0xff]
    %v3678 = vld [vmem:[#allocation5 + $0xa8] sm:$0xff]
    %v3679 = vld [vmem:[#allocation5 + $0xb0] sm:$0xff]
    %v3680 = vld [vmem:[#allocation5 + $0xb8] sm:$0xff]
    %v3681 = vld [vmem:[#allocation5 + $0xc0] sm:$0xff]
    %v3682 = vld [vmem:[#allocation5 + $0xc8] sm:$0xff]
    %v3683 = vld [vmem:[#allocation5 + $0xd0] sm:$0xff]
    %v3684 = vld [vmem:[#allocation5 + $0xd8] sm:$0xff]
    %v3685 = vld [vmem:[#allocation5 + $0xe0] sm:$0xff]
    %v3686 = vld [vmem:[#allocation5 + $0xe8] sm:$0xff]
    %v3687 = vld [vmem:[#allocation5 + $0xf0] sm:$0xff]
    %v3688 = vld [vmem:[#allocation5 + $0xf8] sm:$0xff]
    %v3721 = vunpack.c.l.b16 %v3657
    %v3722 = vunpack.c.h.b16 %v3657
    %v3723 = vunpack.c.l.b16 %v3658
    %v3724 = vunpack.c.h.b16 %v3658
    %v3725 = vunpack.c.l.b16 %v3659
    %v3726 = vunpack.c.h.b16 %v3659
    %v3727 = vunpack.c.l.b16 %v3660
    %v3728 = vunpack.c.h.b16 %v3660
    %v3729 = vunpack.c.l.b16 %v3661
    %v3730 = vunpack.c.h.b16 %v3661
    %v3731 = vunpack.c.l.b16 %v3662
    %v3732 = vunpack.c.h.b16 %v3662
    %v3733 = vunpack.c.l.b16 %v3663
    %v3734 = vunpack.c.h.b16 %v3663
    %v3735 = vunpack.c.l.b16 %v3664
    %v3736 = vunpack.c.h.b16 %v3664
    %v3737 = vunpack.c.l.b16 %v3665
    %v3738 = vunpack.c.h.b16 %v3665
    %v3739 = vunpack.c.l.b16 %v3666
    %v3740 = vunpack.c.h.b16 %v3666
    %v3741 = vunpack.c.l.b16 %v3667
    %v3742 = vunpack.c.h.b16 %v3667
    %v3743 = vunpack.c.l.b16 %v3668
    %v3744 = vunpack.c.h.b16 %v3668
    %v3745 = vunpack.c.l.b16 %v3669
    %v3746 = vunpack.c.h.b16 %v3669
    %v3747 = vunpack.c.l.b16 %v3670
    %v3748 = vunpack.c.h.b16 %v3670
    %v3749 = vunpack.c.l.b16 %v3671
    %v3750 = vunpack.c.h.b16 %v3671
    %v3751 = vunpack.c.l.b16 %v3672
    %v3752 = vunpack.c.h.b16 %v3672
    %v3753 = vunpack.c.l.b16 %v3673
    %v3754 = vunpack.c.h.b16 %v3673
    %v3755 = vunpack.c.l.b16 %v3674
    %v3756 = vunpack.c.h.b16 %v3674
    %v3757 = vunpack.c.l.b16 %v3675
    %v3758 = vunpack.c.h.b16 %v3675
    %v3759 = vunpack.c.l.b16 %v3676
    %v3760 = vunpack.c.h.b16 %v3676
    %v3761 = vunpack.c.l.b16 %v3677
    %v3762 = vunpack.c.h.b16 %v3677
    %v3763 = vunpack.c.l.b16 %v3678
    %v3764 = vunpack.c.h.b16 %v3678
    %v3765 = vunpack.c.l.b16 %v3679
    %v3766 = vunpack.c.h.b16 %v3679
    %v3767 = vunpack.c.l.b16 %v3680
    %v3768 = vunpack.c.h.b16 %v3680
    %v3769 = vunpack.c.l.b16 %v3681
    %v3770 = vunpack.c.h.b16 %v3681
    %v3771 = vunpack.c.l.b16 %v3682
    %v3772 = vunpack.c.h.b16 %v3682
    %v3773 = vunpack.c.l.b16 %v3683
    %v3774 = vunpack.c.h.b16 %v3683
    %v3775 = vunpack.c.l.b16 %v3684
    %v3776 = vunpack.c.h.b16 %v3684
    %v3777 = vunpack.c.l.b16 %v3685
    %v3778 = vunpack.c.h.b16 %v3685
    %v3779 = vunpack.c.l.b16 %v3686
    %v3780 = vunpack.c.h.b16 %v3686
    %v3781 = vunpack.c.l.b16 %v3687
    %v3782 = vunpack.c.h.b16 %v3687
    %v3783 = vunpack.c.l.b16 %v3688
    %v3784 = vunpack.c.h.b16 %v3688
    %v3785 = vpack.c.b16 %v3725, %v3721
    %v3786 = vpack.c.b16 %v3726, %v3722
    %v3787 = vpack.c.b16 %v3727, %v3723
    %v3788 = vpack.c.b16 %v3728, %v3724
    %v3789 = vpack.c.b16 %v3733, %v3729
    %v3790 = vpack.c.b16 %v3734, %v3730
    %v3791 = vpack.c.b16 %v3735, %v3731
    %v3792 = vpack.c.b16 %v3736, %v3732
    %v3793 = vpack.c.b16 %v3741, %v3737
    %v3794 = vpack.c.b16 %v3742, %v3738
    %v3795 = vpack.c.b16 %v3743, %v3739
    %v3796 = vpack.c.b16 %v3744, %v3740
    %v3797 = vpack.c.b16 %v3749, %v3745
    %v3798 = vpack.c.b16 %v3750, %v3746
    %v3799 = vpack.c.b16 %v3751, %v3747
    %v3800 = vpack.c.b16 %v3752, %v3748
    %v3801 = vpack.c.b16 %v3757, %v3753
    %v3802 = vpack.c.b16 %v3758, %v3754
    %v3803 = vpack.c.b16 %v3759, %v3755
    %v3804 = vpack.c.b16 %v3760, %v3756
    %v3805 = vpack.c.b16 %v3765, %v3761
    %v3806 = vpack.c.b16 %v3766, %v3762
    %v3807 = vpack.c.b16 %v3767, %v3763
    %v3808 = vpack.c.b16 %v3768, %v3764
    %v3809 = vpack.c.b16 %v3773, %v3769
    %v3810 = vpack.c.b16 %v3774, %v3770
    %v3811 = vpack.c.b16 %v3775, %v3771
    %v3812 = vpack.c.b16 %v3776, %v3772
    %v3813 = vpack.c.b16 %v3781, %v3777
    %v3814 = vpack.c.b16 %v3782, %v3778
    %v3815 = vpack.c.b16 %v3783, %v3779
    %v3816 = vpack.c.b16 %v3784, %v3780
    %3849 = vmatprep.subr.bf16.mxu0 %v3814
    %3850 = vmatpush1.bf16.msra.mxu0 %v3813
    %3851 = vmatprep.subr.bf16.mxu0 %v3810
    %3852 = vmatpush1.bf16.msra.mxu0 %v3809
    %3853 = vmatprep.subr.bf16.mxu0 %v3806
    %3854 = vmatpush1.bf16.msra.mxu0 %v3805
    %3855 = vmatprep.subr.bf16.mxu0 %v3802
    %3856 = vmatpush1.bf16.msra.mxu0 %v3801
    %3857 = vmatprep.subr.bf16.mxu0 %v3798
    %3858 = vmatpush1.bf16.msra.mxu0 %v3797
    %3859 = vmatprep.subr.bf16.mxu0 %v3794
    %3860 = vmatpush1.bf16.msra.mxu0 %v3793
    %3861 = vmatprep.subr.bf16.mxu0 %v3790
    %3862 = vmatpush1.bf16.msra.mxu0 %v3789
    %3863 = vmatprep.subr.bf16.mxu0 %v3786
    %3864 = vmatpush1.bf16.msra.mxu0 %v3785
    %3865 = vmatprep.subr.bf16.mxu0 0
    %3866 = vmatpush2.bf16.msra.mxu0 0
    %3867 = vmatprep.subr.bf16.mxu0 0
    %3868 = vmatpush2.bf16.msra.mxu0 0
    %3869 = vmatprep.subr.bf16.mxu0 0
    %3870 = vmatpush2.bf16.msra.mxu0 0
    %3871 = vmatprep.subr.bf16.mxu0 0
    %3872 = vmatpush2.bf16.msra.mxu0 0
    %3873 = vmatprep.subr.bf16.mxu0 0
    %3874 = vmatpush2.bf16.msra.mxu0 0
    %3875 = vmatprep.subr.bf16.mxu0 0
    %3876 = vmatpush2.bf16.msra.mxu0 0
    %3877 = vmatprep.subr.bf16.mxu0 0
    %3878 = vmatpush2.bf16.msra.mxu0 0
    %3879 = vmatprep.subr.bf16.mxu0 0
    %3880 = vmatpush2.bf16.msra.mxu0 0
    %3881 = vmatprep.mubr.bf16.mxu0 0
    %3882 = vmatmul.mubr.bf16.gmra.mxu0 %v3652
    %v3883 = vpop.f32.mrf.mxu0
    %v3884 = vadd.f32 0.0, %v3883
    %v3885 = vpop.f32.mrf.mxu0
    %v3886 = vadd.f32 0.0, %v3885
    %v3887 = vpop.f32.mrf.mxu0
    %v3888 = vpop.f32.mrf.mxu0
    %3889 = vdwg.mxu0
    %3890 = vmatprep.subr.bf16.mxu0 %v3816
    %3891 = vmatpush1.bf16.msra.mxu0 %v3815
    %3892 = vmatprep.subr.bf16.mxu0 %v3812
    %3893 = vmatpush1.bf16.msra.mxu0 %v3811
    %3894 = vmatprep.subr.bf16.mxu0 %v3808
    %3895 = vmatpush1.bf16.msra.mxu0 %v3807
    %3896 = vmatprep.subr.bf16.mxu0 %v3804
    %3897 = vmatpush1.bf16.msra.mxu0 %v3803
    %3898 = vmatprep.subr.bf16.mxu0 %v3800
    %3899 = vmatpush1.bf16.msra.mxu0 %v3799
    %3900 = vmatprep.subr.bf16.mxu0 %v3796
    %3901 = vmatpush1.bf16.msra.mxu0 %v3795
    %3902 = vmatprep.subr.bf16.mxu0 %v3792
    %3903 = vmatpush1.bf16.msra.mxu0 %v3791
    %3904 = vmatprep.subr.bf16.mxu0 %v3788
    %3905 = vmatpush1.bf16.msra.mxu0 %v3787
    %3906 = vmatprep.subr.bf16.mxu0 0
    %3907 = vmatpush2.bf16.msra.mxu0 0
    %3908 = vmatprep.subr.bf16.mxu0 0
    %3909 = vmatpush2.bf16.msra.mxu0 0
    %3910 = vmatprep.subr.bf16.mxu0 0
    %3911 = vmatpush2.bf16.msra.mxu0 0
    %3912 = vmatprep.subr.bf16.mxu0 0
    %3913 = vmatpush2.bf16.msra.mxu0 0
    %3914 = vmatprep.subr.bf16.mxu0 0
    %3915 = vmatpush2.bf16.msra.mxu0 0
    %3916 = vmatprep.subr.bf16.mxu0 0
    %3917 = vmatpush2.bf16.msra.mxu0 0
    %3918 = vmatprep.subr.bf16.mxu0 0
    %3919 = vmatpush2.bf16.msra.mxu0 0
    %3920 = vmatprep.subr.bf16.mxu0 0
    %3921 = vmatpush2.bf16.msra.mxu0 0
    %3922 = vmatprep.mubr.bf16.mxu0 0
    %3923 = vmatmul.mubr.bf16.gmra.mxu0 %v3652
    %v3924 = vpop.f32.mrf.mxu0
    %v3925 = vadd.f32 0.0, %v3924
    %v3926 = vpop.f32.mrf.mxu0
    %v3927 = vadd.f32 0.0, %v3926
    %v3928 = vpop.f32.mrf.mxu0
    %v3929 = vpop.f32.mrf.mxu0
    %3930 = vdwg.mxu0
    %s3931 = scalar_lea.vmem [#allocation12], 6
    %v3932 = vld [vmem:[%s3931] ss:$8 sm:$0xf]
    %s3933 = scalar_lea.vmem [#allocation12], 33
    %v3934 = vld [vmem:[%s3933] ss:$8 sm:$0xf]
    %v3935 = vsel %vm937, %v3884, 0.0
    %v3936 = vrot.slane %v3935, 4
    %v3937 = vadd.f32 %v3935, %v3936
    %v3938 = vrot.slane %v3937, 2
    %v3939 = vadd.f32 %v3937, %v3938
    %v3940 = vrot.slane %v3939, 1
    %v3941 = vadd.f32 %v3939, %v3940
    %v3942 = vsel %vm937, %v3886, 0.0
    %v3943 = vrot.slane %v3942, 4
    %v3944 = vadd.f32 %v3942, %v3943
    %v3945 = vrot.slane %v3944, 2
    %v3946 = vadd.f32 %v3944, %v3945
    %v3947 = vrot.slane %v3946, 1
    %v3948 = vadd.f32 %v3946, %v3947
    %v3949 = vsel %vm937, %v3925, 0.0
    %v3950 = vrot.slane %v3949, 4
    %v3951 = vadd.f32 %v3949, %v3950
    %v3952 = vrot.slane %v3951, 2
    %v3953 = vadd.f32 %v3951, %v3952
    %v3954 = vrot.slane %v3953, 1
    %v3955 = vadd.f32 %v3953, %v3954
    %v3956 = vsel %vm937, %v3927, 0.0
    %v3957 = vrot.slane %v3956, 4
    %v3958 = vadd.f32 %v3956, %v3957
    %v3959 = vrot.slane %v3958, 2
    %v3960 = vadd.f32 %v3958, %v3959
    %v3961 = vrot.slane %v3960, 1
    %v3962 = vadd.f32 %v3960, %v3961
    %v3963 = vmul.f32 %v3941, %v959
    %v3964 = vmul.f32 %v3948, %v959
    %v3965 = vmul.f32 %v3955, %v959
    %v3966 = vmul.f32 %v3962, %v959
    %v3967 = vmul.f32 %v3884, %v3884
    %v3968 = vmul.f32 %v3886, %v3886
    %v3969 = vmul.f32 %v3925, %v3925
    %v3970 = vmul.f32 %v3927, %v3927
    %v3971 = vsel %vm937, %v3967, 0.0
    %v3972 = vrot.slane %v3971, 4
    %v3973 = vadd.f32 %v3971, %v3972
    %v3974 = vrot.slane %v3973, 2
    %v3975 = vadd.f32 %v3973, %v3974
    %v3976 = vrot.slane %v3975, 1
    %v3977 = vadd.f32 %v3975, %v3976
    %v3978 = vsel %vm937, %v3968, 0.0
    %v3979 = vrot.slane %v3978, 4
    %v3980 = vadd.f32 %v3978, %v3979
    %v3981 = vrot.slane %v3980, 2
    %v3982 = vadd.f32 %v3980, %v3981
    %v3983 = vrot.slane %v3982, 1
    %v3984 = vadd.f32 %v3982, %v3983
    %v3985 = vsel %vm937, %v3969, 0.0
    %v3986 = vrot.slane %v3985, 4
    %v3987 = vadd.f32 %v3985, %v3986
    %v3988 = vrot.slane %v3987, 2
    %v3989 = vadd.f32 %v3987, %v3988
    %v3990 = vrot.slane %v3989, 1
    %v3991 = vadd.f32 %v3989, %v3990
    %v3992 = vsel %vm937, %v3970, 0.0
    %v3993 = vrot.slane %v3992, 4
    %v3994 = vadd.f32 %v3992, %v3993
    %v3995 = vrot.slane %v3994, 2
    %v3996 = vadd.f32 %v3994, %v3995
    %v3997 = vrot.slane %v3996, 1
    %v3998 = vadd.f32 %v3996, %v3997
    %v3999 = vmul.f32 %v3977, %v959
    %v4000 = vmul.f32 %v3984, %v959
    %v4001 = vmul.f32 %v3991, %v959
    %v4002 = vmul.f32 %v3998, %v959
    %v4003 = vmul.f32 %v3963, %v3963
    %v4004 = vmul.f32 %v3964, %v3964
    %v4005 = vmul.f32 %v3965, %v3965
    %v4006 = vmul.f32 %v3966, %v3966
    %v4007 = vsub.f32 %v3999, %v4003
    %v4008 = vsub.f32 %v4000, %v4004
    %v4009 = vsub.f32 %v4001, %v4005
    %v4010 = vsub.f32 %v4002, %v4006
    %v4011 = vmax.f32 %v4007, 0.0
    %v4012 = vmax.f32 %v4008, 0.0
    %v4013 = vmax.f32 %v4009, 0.0
    %v4014 = vmax.f32 %v4010, 0.0
    %v4015 = vadd.f32 %v4011, 1e-05
    %v4016 = vadd.f32 %v4012, 1e-05
    %v4017 = vadd.f32 %v4013, 1e-05
    %v4018 = vadd.f32 %v4014, 1e-05
    %v4019 = vrsqrt.pop %v4015
    %v4020 = vrsqrt.pop %v4016
    %v4021 = vrsqrt.pop %v4017
    %v4022 = vrsqrt.pop %v4018
    %v4027 = vcombine.low %v4019, %v4020
    %v4028 = vcombine.low %v4021, %v4022
    %v4030 = vunpack.c.l.s4 1966171168
    %v4031 = vunpack.c.0.s8 %v4030
    %v4032 = vlaneseq
    %v4033 = vshrl.u32 %v4032, 7
    %v4034 = vsub.s32 %v4031, %v4033
    %v4035 = vrot.slane %v4027, %v4034
    %v4037 = vunpack.c.l.s4 1966171168
    %v4038 = vunpack.c.0.s8 %v4037
    %v4039 = vlaneseq
    %v4040 = vshrl.u32 %v4039, 7
    %v4041 = vsub.s32 %v4038, %v4040
    %v4042 = vrot.slane %v4028, %v4041
    %v4043 = vcombine.low %v4035, %v4042
    %v4045 = vunpack.c.l.s4 1966171168
    %v4046 = vunpack.c.0.s8 %v4045
    %v4047 = vlaneseq
    %v4048 = vshrl.u32 %v4047, 7
    %v4049 = vsub.s32 %v4046, %v4048
    %v4050 = vrot.slane %v4043, %v4049
    %v4052 = vmul.f32 %v3932, %v4050
    %v4054 = vlaneseq
    %v4055 = vshrl.u32 %v4054, 7
    %v4056 = vsub.s32 0, %v4055
    %v4057 = vrot.slane %v4052, %v4056
    %v4058 = vlaneseq
    %v4059 = vshrl.u32 %v4058, 7
    %v4060 = vsub.s32 1, %v4059
    %v4061 = vrot.slane %v4052, %v4060
    %v4062 = vlaneseq
    %v4063 = vshrl.u32 %v4062, 7
    %v4064 = vsub.s32 2, %v4063
    %v4065 = vrot.slane %v4052, %v4064
    %v4066 = vlaneseq
    %v4067 = vshrl.u32 %v4066, 7
    %v4068 = vsub.s32 3, %v4067
    %v4069 = vrot.slane %v4052, %v4068
    %v4074 = vmul.f32 %v3963, %v4057
    %v4075 = vmul.f32 %v3964, %v4061
    %v4076 = vmul.f32 %v3965, %v4065
    %v4077 = vmul.f32 %v3966, %v4069
    %v4082 = vcombine.low %v4074, %v4075
    %v4083 = vcombine.low %v4076, %v4077
    %v4085 = vunpack.c.l.s4 1966171168
    %v4086 = vunpack.c.0.s8 %v4085
    %v4087 = vlaneseq
    %v4088 = vshrl.u32 %v4087, 7
    %v4089 = vsub.s32 %v4086, %v4088
    %v4090 = vrot.slane %v4082, %v4089
    %v4092 = vunpack.c.l.s4 1966171168
    %v4093 = vunpack.c.0.s8 %v4092
    %v4094 = vlaneseq
    %v4095 = vshrl.u32 %v4094, 7
    %v4096 = vsub.s32 %v4093, %v4095
    %v4097 = vrot.slane %v4083, %v4096
    %v4098 = vcombine.low %v4090, %v4097
    %v4100 = vunpack.c.l.s4 1966171168
    %v4101 = vunpack.c.0.s8 %v4100
    %v4102 = vlaneseq
    %v4103 = vshrl.u32 %v4102, 7
    %v4104 = vsub.s32 %v4101, %v4103
    %v4105 = vrot.slane %v4098, %v4104
    %v4107 = vsub.f32 %v3934, %v4105
    %v4108 = vmul.f32 %v3884, %v4057
    %v4109 = vmul.f32 %v3886, %v4061
    %v4110 = vmul.f32 %v3925, %v4065
    %v4111 = vmul.f32 %v3927, %v4069
    %v4113 = vlaneseq
    %v4114 = vshrl.u32 %v4113, 7
    %v4115 = vsub.s32 0, %v4114
    %v4116 = vrot.slane %v4107, %v4115
    %v4117 = vlaneseq
    %v4118 = vshrl.u32 %v4117, 7
    %v4119 = vsub.s32 1, %v4118
    %v4120 = vrot.slane %v4107, %v4119
    %v4121 = vlaneseq
    %v4122 = vshrl.u32 %v4121, 7
    %v4123 = vsub.s32 2, %v4122
    %v4124 = vrot.slane %v4107, %v4123
    %v4125 = vlaneseq
    %v4126 = vshrl.u32 %v4125, 7
    %v4127 = vsub.s32 3, %v4126
    %v4128 = vrot.slane %v4107, %v4127
    %v4133 = vadd.f32 %v4108, %v4116
    %v4134 = vadd.f32 %v4109, %v4120
    %v4135 = vadd.f32 %v4110, %v4124
    %v4136 = vadd.f32 %v4111, %v4128
    %v4137 = vxor.u32 %v4133, 2147483648
    %v4138 = vxor.u32 %v4134, 2147483648
    %v4139 = vxor.u32 %v4135, 2147483648
    %v4140 = vxor.u32 %v4136, 2147483648
    %v4141 = vmul.f32 %v4137, 1.442695
    %v4142 = vpow.pop %v4141
    %v4143 = vmul.f32 %v4138, 1.442695
    %v4144 = vpow.pop %v4143
    %v4145 = vmul.f32 %v4139, 1.442695
    %v4146 = vpow.pop %v4145
    %v4147 = vmul.f32 %v4140, 1.442695
    %v4148 = vpow.pop %v4147
    %v4149 = vadd.f32 %v4142, 1.0
    %v4150 = vadd.f32 %v4144, 1.0
    %v4151 = vadd.f32 %v4146, 1.0
    %v4152 = vadd.f32 %v4148, 1.0
    %v4153 = vrcp.pop %v4149
    %v4154 = vmul.f32 1.0, %v4153
    %v4155 = vrcp.pop %v4150
    %v4156 = vmul.f32 1.0, %v4155
    %v4157 = vrcp.pop %v4151
    %v4158 = vmul.f32 1.0, %v4157
    %v4159 = vrcp.pop %v4152
    %v4160 = vmul.f32 1.0, %v4159
    %v4161 = vld [vmem:[#allocation7] sm:$0xff]
    %v4162 = vld [vmem:[#allocation7 + $0x8] sm:$0xff]
    %v4165 = vcombine.high %v4161, %v4161
    %v4166 = vcombine.high %v4162, %v4162
    %v4169 = vmul.f32 %v4154, %v4161
    %v4170 = vmul.f32 %v4156, %v4165
    %v4171 = vmul.f32 %v4158, %v4162
    %v4172 = vmul.f32 %v4160, %v4166
    %v4173 = vadd.f32 %v4169, 0.0
    %v4174 = vadd.f32 %v4170, 0.0
    %v4175 = vadd.f32 %v4171, 0.0
    %v4176 = vadd.f32 %v4172, 0.0
    %s4177 = scalar_lea.vmem [#allocation5], 256
    %v4178 = vld [vmem:[%s4177] sm:$0xff]
    %v4179 = vld [vmem:[%s4177 + $0x8] sm:$0xff]
    %v4180 = vld [vmem:[%s4177 + $0x10] sm:$0xff]
    %v4181 = vld [vmem:[%s4177 + $0x18] sm:$0xff]
    %v4182 = vld [vmem:[%s4177 + $0x20] sm:$0xff]
    %v4183 = vld [vmem:[%s4177 + $0x28] sm:$0xff]
    %v4184 = vld [vmem:[%s4177 + $0x30] sm:$0xff]
    %v4185 = vld [vmem:[%s4177 + $0x38] sm:$0xff]
    %v4186 = vld [vmem:[%s4177 + $0x40] sm:$0xff]
    %v4187 = vld [vmem:[%s4177 + $0x48] sm:$0xff]
    %v4188 = vld [vmem:[%s4177 + $0x50] sm:$0xff]
    %v4189 = vld [vmem:[%s4177 + $0x58] sm:$0xff]
    %v4190 = vld [vmem:[%s4177 + $0x60] sm:$0xff]
    %v4191 = vld [vmem:[%s4177 + $0x68] sm:$0xff]
    %v4192 = vld [vmem:[%s4177 + $0x70] sm:$0xff]
    %v4193 = vld [vmem:[%s4177 + $0x78] sm:$0xff]
    %v4194 = vld [vmem:[%s4177 + $0x80] sm:$0xff]
    %v4195 = vld [vmem:[%s4177 + $0x88] sm:$0xff]
    %v4196 = vld [vmem:[%s4177 + $0x90] sm:$0xff]
    %v4197 = vld [vmem:[%s4177 + $0x98] sm:$0xff]
    %v4198 = vld [vmem:[%s4177 + $0xa0] sm:$0xff]
    %v4199 = vld [vmem:[%s4177 + $0xa8] sm:$0xff]
    %v4200 = vld [vmem:[%s4177 + $0xb0] sm:$0xff]
    %v4201 = vld [vmem:[%s4177 + $0xb8] sm:$0xff]
    %v4202 = vld [vmem:[%s4177 + $0xc0] sm:$0xff]
    %v4203 = vld [vmem:[%s4177 + $0xc8] sm:$0xff]
    %v4204 = vld [vmem:[%s4177 + $0xd0] sm:$0xff]
    %v4205 = vld [vmem:[%s4177 + $0xd8] sm:$0xff]
    %v4206 = vld [vmem:[%s4177 + $0xe0] sm:$0xff]
    %v4207 = vld [vmem:[%s4177 + $0xe8] sm:$0xff]
    %v4208 = vld [vmem:[%s4177 + $0xf0] sm:$0xff]
    %v4209 = vld [vmem:[%s4177 + $0xf8] sm:$0xff]
    %v4242 = vunpack.c.l.b16 %v4178
    %v4243 = vunpack.c.h.b16 %v4178
    %v4244 = vunpack.c.l.b16 %v4179
    %v4245 = vunpack.c.h.b16 %v4179
    %v4246 = vunpack.c.l.b16 %v4180
    %v4247 = vunpack.c.h.b16 %v4180
    %v4248 = vunpack.c.l.b16 %v4181
    %v4249 = vunpack.c.h.b16 %v4181
    %v4250 = vunpack.c.l.b16 %v4182
    %v4251 = vunpack.c.h.b16 %v4182
    %v4252 = vunpack.c.l.b16 %v4183
    %v4253 = vunpack.c.h.b16 %v4183
    %v4254 = vunpack.c.l.b16 %v4184
    %v4255 = vunpack.c.h.b16 %v4184
    %v4256 = vunpack.c.l.b16 %v4185
    %v4257 = vunpack.c.h.b16 %v4185
    %v4258 = vunpack.c.l.b16 %v4186
    %v4259 = vunpack.c.h.b16 %v4186
    %v4260 = vunpack.c.l.b16 %v4187
    %v4261 = vunpack.c.h.b16 %v4187
    %v4262 = vunpack.c.l.b16 %v4188
    %v4263 = vunpack.c.h.b16 %v4188
    %v4264 = vunpack.c.l.b16 %v4189
    %v4265 = vunpack.c.h.b16 %v4189
    %v4266 = vunpack.c.l.b16 %v4190
    %v4267 = vunpack.c.h.b16 %v4190
    %v4268 = vunpack.c.l.b16 %v4191
    %v4269 = vunpack.c.h.b16 %v4191
    %v4270 = vunpack.c.l.b16 %v4192
    %v4271 = vunpack.c.h.b16 %v4192
    %v4272 = vunpack.c.l.b16 %v4193
    %v4273 = vunpack.c.h.b16 %v4193
    %v4274 = vunpack.c.l.b16 %v4194
    %v4275 = vunpack.c.h.b16 %v4194
    %v4276 = vunpack.c.l.b16 %v4195
    %v4277 = vunpack.c.h.b16 %v4195
    %v4278 = vunpack.c.l.b16 %v4196
    %v4279 = vunpack.c.h.b16 %v4196
    %v4280 = vunpack.c.l.b16 %v4197
    %v4281 = vunpack.c.h.b16 %v4197
    %v4282 = vunpack.c.l.b16 %v4198
    %v4283 = vunpack.c.h.b16 %v4198
    %v4284 = vunpack.c.l.b16 %v4199
    %v4285 = vunpack.c.h.b16 %v4199
    %v4286 = vunpack.c.l.b16 %v4200
    %v4287 = vunpack.c.h.b16 %v4200
    %v4288 = vunpack.c.l.b16 %v4201
    %v4289 = vunpack.c.h.b16 %v4201
    %v4290 = vunpack.c.l.b16 %v4202
    %v4291 = vunpack.c.h.b16 %v4202
    %v4292 = vunpack.c.l.b16 %v4203
    %v4293 = vunpack.c.h.b16 %v4203
    %v4294 = vunpack.c.l.b16 %v4204
    %v4295 = vunpack.c.h.b16 %v4204
    %v4296 = vunpack.c.l.b16 %v4205
    %v4297 = vunpack.c.h.b16 %v4205
    %v4298 = vunpack.c.l.b16 %v4206
    %v4299 = vunpack.c.h.b16 %v4206
    %v4300 = vunpack.c.l.b16 %v4207
    %v4301 = vunpack.c.h.b16 %v4207
    %v4302 = vunpack.c.l.b16 %v4208
    %v4303 = vunpack.c.h.b16 %v4208
    %v4304 = vunpack.c.l.b16 %v4209
    %v4305 = vunpack.c.h.b16 %v4209
    %v4306 = vpack.c.b16 %v4246, %v4242
    %v4307 = vpack.c.b16 %v4247, %v4243
    %v4308 = vpack.c.b16 %v4248, %v4244
    %v4309 = vpack.c.b16 %v4249, %v4245
    %v4310 = vpack.c.b16 %v4254, %v4250
    %v4311 = vpack.c.b16 %v4255, %v4251
    %v4312 = vpack.c.b16 %v4256, %v4252
    %v4313 = vpack.c.b16 %v4257, %v4253
    %v4314 = vpack.c.b16 %v4262, %v4258
    %v4315 = vpack.c.b16 %v4263, %v4259
    %v4316 = vpack.c.b16 %v4264, %v4260
    %v4317 = vpack.c.b16 %v4265, %v4261
    %v4318 = vpack.c.b16 %v4270, %v4266
    %v4319 = vpack.c.b16 %v4271, %v4267
    %v4320 = vpack.c.b16 %v4272, %v4268
    %v4321 = vpack.c.b16 %v4273, %v4269
    %v4322 = vpack.c.b16 %v4278, %v4274
    %v4323 = vpack.c.b16 %v4279, %v4275
    %v4324 = vpack.c.b16 %v4280, %v4276
    %v4325 = vpack.c.b16 %v4281, %v4277
    %v4326 = vpack.c.b16 %v4286, %v4282
    %v4327 = vpack.c.b16 %v4287, %v4283
    %v4328 = vpack.c.b16 %v4288, %v4284
    %v4329 = vpack.c.b16 %v4289, %v4285
    %v4330 = vpack.c.b16 %v4294, %v4290
    %v4331 = vpack.c.b16 %v4295, %v4291
    %v4332 = vpack.c.b16 %v4296, %v4292
    %v4333 = vpack.c.b16 %v4297, %v4293
    %v4334 = vpack.c.b16 %v4302, %v4298
    %v4335 = vpack.c.b16 %v4303, %v4299
    %v4336 = vpack.c.b16 %v4304, %v4300
    %v4337 = vpack.c.b16 %v4305, %v4301
    %4370 = vmatprep.subr.bf16.mxu0 %v4335
    %4371 = vmatpush1.bf16.msra.mxu0 %v4334
    %4372 = vmatprep.subr.bf16.mxu0 %v4331
    %4373 = vmatpush1.bf16.msra.mxu0 %v4330
    %4374 = vmatprep.subr.bf16.mxu0 %v4327
    %4375 = vmatpush1.bf16.msra.mxu0 %v4326
    %4376 = vmatprep.subr.bf16.mxu0 %v4323
    %4377 = vmatpush1.bf16.msra.mxu0 %v4322
    %4378 = vmatprep.subr.bf16.mxu0 %v4319
    %4379 = vmatpush1.bf16.msra.mxu0 %v4318
    %4380 = vmatprep.subr.bf16.mxu0 %v4315
    %4381 = vmatpush1.bf16.msra.mxu0 %v4314
    %4382 = vmatprep.subr.bf16.mxu0 %v4311
    %4383 = vmatpush1.bf16.msra.mxu0 %v4310
    %4384 = vmatprep.subr.bf16.mxu0 %v4307
    %4385 = vmatpush1.bf16.msra.mxu0 %v4306
    %4386 = vmatprep.subr.bf16.mxu0 0
    %4387 = vmatpush2.bf16.msra.mxu0 0
    %4388 = vmatprep.subr.bf16.mxu0 0
    %4389 = vmatpush2.bf16.msra.mxu0 0
    %4390 = vmatprep.subr.bf16.mxu0 0
    %4391 = vmatpush2.bf16.msra.mxu0 0
    %4392 = vmatprep.subr.bf16.mxu0 0
    %4393 = vmatpush2.bf16.msra.mxu0 0
    %4394 = vmatprep.subr.bf16.mxu0 0
    %4395 = vmatpush2.bf16.msra.mxu0 0
    %4396 = vmatprep.subr.bf16.mxu0 0
    %4397 = vmatpush2.bf16.msra.mxu0 0
    %4398 = vmatprep.subr.bf16.mxu0 0
    %4399 = vmatpush2.bf16.msra.mxu0 0
    %4400 = vmatprep.subr.bf16.mxu0 0
    %4401 = vmatpush2.bf16.msra.mxu0 0
    %4402 = vmatprep.mubr.bf16.mxu0 0
    %4403 = vmatmul.mubr.bf16.gmra.mxu0 %v3653
    %v4404 = vpop.f32.mrf.mxu0
    %v4405 = vadd.f32 0.0, %v4404
    %v4406 = vpop.f32.mrf.mxu0
    %v4407 = vadd.f32 0.0, %v4406
    %v4408 = vpop.f32.mrf.mxu0
    %v4409 = vpop.f32.mrf.mxu0
    %4410 = vdwg.mxu0
    %4411 = vmatprep.subr.bf16.mxu0 %v4337
    %4412 = vmatpush1.bf16.msra.mxu0 %v4336
    %4413 = vmatprep.subr.bf16.mxu0 %v4333
    %4414 = vmatpush1.bf16.msra.mxu0 %v4332
    %4415 = vmatprep.subr.bf16.mxu0 %v4329
    %4416 = vmatpush1.bf16.msra.mxu0 %v4328
    %4417 = vmatprep.subr.bf16.mxu0 %v4325
    %4418 = vmatpush1.bf16.msra.mxu0 %v4324
    %4419 = vmatprep.subr.bf16.mxu0 %v4321
    %4420 = vmatpush1.bf16.msra.mxu0 %v4320
    %4421 = vmatprep.subr.bf16.mxu0 %v4317
    %4422 = vmatpush1.bf16.msra.mxu0 %v4316
    %4423 = vmatprep.subr.bf16.mxu0 %v4313
    %4424 = vmatpush1.bf16.msra.mxu0 %v4312
    %4425 = vmatprep.subr.bf16.mxu0 %v4309
    %4426 = vmatpush1.bf16.msra.mxu0 %v4308
    %4427 = vmatprep.subr.bf16.mxu0 0
    %4428 = vmatpush2.bf16.msra.mxu0 0
    %4429 = vmatprep.subr.bf16.mxu0 0
    %4430 = vmatpush2.bf16.msra.mxu0 0
    %4431 = vmatprep.subr.bf16.mxu0 0
    %4432 = vmatpush2.bf16.msra.mxu0 0
    %4433 = vmatprep.subr.bf16.mxu0 0
    %4434 = vmatpush2.bf16.msra.mxu0 0
    %4435 = vmatprep.subr.bf16.mxu0 0
    %4436 = vmatpush2.bf16.msra.mxu0 0
    %4437 = vmatprep.subr.bf16.mxu0 0
    %4438 = vmatpush2.bf16.msra.mxu0 0
    %4439 = vmatprep.subr.bf16.mxu0 0
    %4440 = vmatpush2.bf16.msra.mxu0 0
    %4441 = vmatprep.subr.bf16.mxu0 0
    %4442 = vmatpush2.bf16.msra.mxu0 0
    %4443 = vmatprep.mubr.bf16.mxu0 0
    %4444 = vmatmul.mubr.bf16.gmra.mxu0 %v3653
    %v4445 = vpop.f32.mrf.mxu0
    %v4446 = vadd.f32 0.0, %v4445
    %v4447 = vpop.f32.mrf.mxu0
    %v4448 = vadd.f32 0.0, %v4447
    %v4449 = vpop.f32.mrf.mxu0
    %v4450 = vpop.f32.mrf.mxu0
    %4451 = vdwg.mxu0
    %s4452 = scalar_lea.vmem [#allocation12], 7
    %v4453 = vld [vmem:[%s4452] ss:$8 sm:$0xf]
    %s4454 = scalar_lea.vmem [#allocation12], 34
    %v4455 = vld [vmem:[%s4454] ss:$8 sm:$0xf]
    %v4456 = vsel %vm937, %v4405, 0.0
    %v4457 = vrot.slane %v4456, 4
    %v4458 = vadd.f32 %v4456, %v4457
    %v4459 = vrot.slane %v4458, 2
    %v4460 = vadd.f32 %v4458, %v4459
    %v4461 = vrot.slane %v4460, 1
    %v4462 = vadd.f32 %v4460, %v4461
    %v4463 = vsel %vm937, %v4407, 0.0
    %v4464 = vrot.slane %v4463, 4
    %v4465 = vadd.f32 %v4463, %v4464
    %v4466 = vrot.slane %v4465, 2
    %v4467 = vadd.f32 %v4465, %v4466
    %v4468 = vrot.slane %v4467, 1
    %v4469 = vadd.f32 %v4467, %v4468
    %v4470 = vsel %vm937, %v4446, 0.0
    %v4471 = vrot.slane %v4470, 4
    %v4472 = vadd.f32 %v4470, %v4471
    %v4473 = vrot.slane %v4472, 2
    %v4474 = vadd.f32 %v4472, %v4473
    %v4475 = vrot.slane %v4474, 1
    %v4476 = vadd.f32 %v4474, %v4475
    %v4477 = vsel %vm937, %v4448, 0.0
    %v4478 = vrot.slane %v4477, 4
    %v4479 = vadd.f32 %v4477, %v4478
    %v4480 = vrot.slane %v4479, 2
    %v4481 = vadd.f32 %v4479, %v4480
    %v4482 = vrot.slane %v4481, 1
    %v4483 = vadd.f32 %v4481, %v4482
    %v4484 = vmul.f32 %v4462, %v959
    %v4485 = vmul.f32 %v4469, %v959
    %v4486 = vmul.f32 %v4476, %v959
    %v4487 = vmul.f32 %v4483, %v959
    %v4488 = vmul.f32 %v4405, %v4405
    %v4489 = vmul.f32 %v4407, %v4407
    %v4490 = vmul.f32 %v4446, %v4446
    %v4491 = vmul.f32 %v4448, %v4448
    %v4492 = vsel %vm937, %v4488, 0.0
    %v4493 = vrot.slane %v4492, 4
    %v4494 = vadd.f32 %v4492, %v4493
    %v4495 = vrot.slane %v4494, 2
    %v4496 = vadd.f32 %v4494, %v4495
    %v4497 = vrot.slane %v4496, 1
    %v4498 = vadd.f32 %v4496, %v4497
    %v4499 = vsel %vm937, %v4489, 0.0
    %v4500 = vrot.slane %v4499, 4
    %v4501 = vadd.f32 %v4499, %v4500
    %v4502 = vrot.slane %v4501, 2
    %v4503 = vadd.f32 %v4501, %v4502
    %v4504 = vrot.slane %v4503, 1
    %v4505 = vadd.f32 %v4503, %v4504
    %v4506 = vsel %vm937, %v4490, 0.0
    %v4507 = vrot.slane %v4506, 4
    %v4508 = vadd.f32 %v4506, %v4507
    %v4509 = vrot.slane %v4508, 2
    %v4510 = vadd.f32 %v4508, %v4509
    %v4511 = vrot.slane %v4510, 1
    %v4512 = vadd.f32 %v4510, %v4511
    %v4513 = vsel %vm937, %v4491, 0.0
    %v4514 = vrot.slane %v4513, 4
    %v4515 = vadd.f32 %v4513, %v4514
    %v4516 = vrot.slane %v4515, 2
    %v4517 = vadd.f32 %v4515, %v4516
    %v4518 = vrot.slane %v4517, 1
    %v4519 = vadd.f32 %v4517, %v4518
    %v4520 = vmul.f32 %v4498, %v959
    %v4521 = vmul.f32 %v4505, %v959
    %v4522 = vmul.f32 %v4512, %v959
    %v4523 = vmul.f32 %v4519, %v959
    %v4524 = vmul.f32 %v4484, %v4484
    %v4525 = vmul.f32 %v4485, %v4485
    %v4526 = vmul.f32 %v4486, %v4486
    %v4527 = vmul.f32 %v4487, %v4487
    %v4528 = vsub.f32 %v4520, %v4524
    %v4529 = vsub.f32 %v4521, %v4525
    %v4530 = vsub.f32 %v4522, %v4526
    %v4531 = vsub.f32 %v4523, %v4527
    %v4532 = vmax.f32 %v4528, 0.0
    %v4533 = vmax.f32 %v4529, 0.0
    %v4534 = vmax.f32 %v4530, 0.0
    %v4535 = vmax.f32 %v4531, 0.0
    %v4536 = vadd.f32 %v4532, 1e-05
    %v4537 = vadd.f32 %v4533, 1e-05
    %v4538 = vadd.f32 %v4534, 1e-05
    %v4539 = vadd.f32 %v4535, 1e-05
    %v4540 = vrsqrt.pop %v4536
    %v4541 = vrsqrt.pop %v4537
    %v4542 = vrsqrt.pop %v4538
    %v4543 = vrsqrt.pop %v4539
    %v4548 = vcombine.low %v4540, %v4541
    %v4549 = vcombine.low %v4542, %v4543
    %v4551 = vunpack.c.l.s4 1966171168
    %v4552 = vunpack.c.0.s8 %v4551
    %v4553 = vlaneseq
    %v4554 = vshrl.u32 %v4553, 7
    %v4555 = vsub.s32 %v4552, %v4554
    %v4556 = vrot.slane %v4548, %v4555
    %v4558 = vunpack.c.l.s4 1966171168
    %v4559 = vunpack.c.0.s8 %v4558
    %v4560 = vlaneseq
    %v4561 = vshrl.u32 %v4560, 7
    %v4562 = vsub.s32 %v4559, %v4561
    %v4563 = vrot.slane %v4549, %v4562
    %v4564 = vcombine.low %v4556, %v4563
    %v4566 = vunpack.c.l.s4 1966171168
    %v4567 = vunpack.c.0.s8 %v4566
    %v4568 = vlaneseq
    %v4569 = vshrl.u32 %v4568, 7
    %v4570 = vsub.s32 %v4567, %v4569
    %v4571 = vrot.slane %v4564, %v4570
    %v4573 = vmul.f32 %v4453, %v4571
    %v4575 = vlaneseq
    %v4576 = vshrl.u32 %v4575, 7
    %v4577 = vsub.s32 0, %v4576
    %v4578 = vrot.slane %v4573, %v4577
    %v4579 = vlaneseq
    %v4580 = vshrl.u32 %v4579, 7
    %v4581 = vsub.s32 1, %v4580
    %v4582 = vrot.slane %v4573, %v4581
    %v4583 = vlaneseq
    %v4584 = vshrl.u32 %v4583, 7
    %v4585 = vsub.s32 2, %v4584
    %v4586 = vrot.slane %v4573, %v4585
    %v4587 = vlaneseq
    %v4588 = vshrl.u32 %v4587, 7
    %v4589 = vsub.s32 3, %v4588
    %v4590 = vrot.slane %v4573, %v4589
    %v4595 = vmul.f32 %v4484, %v4578
    %v4596 = vmul.f32 %v4485, %v4582
    %v4597 = vmul.f32 %v4486, %v4586
    %v4598 = vmul.f32 %v4487, %v4590
    %v4603 = vcombine.low %v4595, %v4596
    %v4604 = vcombine.low %v4597, %v4598
    %v4606 = vunpack.c.l.s4 1966171168
    %v4607 = vunpack.c.0.s8 %v4606
    %v4608 = vlaneseq
    %v4609 = vshrl.u32 %v4608, 7
    %v4610 = vsub.s32 %v4607, %v4609
    %v4611 = vrot.slane %v4603, %v4610
    %v4613 = vunpack.c.l.s4 1966171168
    %v4614 = vunpack.c.0.s8 %v4613
    %v4615 = vlaneseq
    %v4616 = vshrl.u32 %v4615, 7
    %v4617 = vsub.s32 %v4614, %v4616
    %v4618 = vrot.slane %v4604, %v4617
    %v4619 = vcombine.low %v4611, %v4618
    %v4621 = vunpack.c.l.s4 1966171168
    %v4622 = vunpack.c.0.s8 %v4621
    %v4623 = vlaneseq
    %v4624 = vshrl.u32 %v4623, 7
    %v4625 = vsub.s32 %v4622, %v4624
    %v4626 = vrot.slane %v4619, %v4625
    %v4628 = vsub.f32 %v4455, %v4626
    %v4629 = vmul.f32 %v4405, %v4578
    %v4630 = vmul.f32 %v4407, %v4582
    %v4631 = vmul.f32 %v4446, %v4586
    %v4632 = vmul.f32 %v4448, %v4590
    %v4634 = vlaneseq
    %v4635 = vshrl.u32 %v4634, 7
    %v4636 = vsub.s32 0, %v4635
    %v4637 = vrot.slane %v4628, %v4636
    %v4638 = vlaneseq
    %v4639 = vshrl.u32 %v4638, 7
    %v4640 = vsub.s32 1, %v4639
    %v4641 = vrot.slane %v4628, %v4640
    %v4642 = vlaneseq
    %v4643 = vshrl.u32 %v4642, 7
    %v4644 = vsub.s32 2, %v4643
    %v4645 = vrot.slane %v4628, %v4644
    %v4646 = vlaneseq
    %v4647 = vshrl.u32 %v4646, 7
    %v4648 = vsub.s32 3, %v4647
    %v4649 = vrot.slane %v4628, %v4648
    %v4654 = vadd.f32 %v4629, %v4637
    %v4655 = vadd.f32 %v4630, %v4641
    %v4656 = vadd.f32 %v4631, %v4645
    %v4657 = vadd.f32 %v4632, %v4649
    %v4658 = vxor.u32 %v4654, 2147483648
    %v4659 = vxor.u32 %v4655, 2147483648
    %v4660 = vxor.u32 %v4656, 2147483648
    %v4661 = vxor.u32 %v4657, 2147483648
    %v4662 = vmul.f32 %v4658, 1.442695
    %v4663 = vpow.pop %v4662
    %v4664 = vmul.f32 %v4659, 1.442695
    %v4665 = vpow.pop %v4664
    %v4666 = vmul.f32 %v4660, 1.442695
    %v4667 = vpow.pop %v4666
    %v4668 = vmul.f32 %v4661, 1.442695
    %v4669 = vpow.pop %v4668
    %v4670 = vadd.f32 %v4663, 1.0
    %v4671 = vadd.f32 %v4665, 1.0
    %v4672 = vadd.f32 %v4667, 1.0
    %v4673 = vadd.f32 %v4669, 1.0
    %v4674 = vrcp.pop %v4670
    %v4675 = vmul.f32 1.0, %v4674
    %v4676 = vrcp.pop %v4671
    %v4677 = vmul.f32 1.0, %v4676
    %v4678 = vrcp.pop %v4672
    %v4679 = vmul.f32 1.0, %v4678
    %v4680 = vrcp.pop %v4673
    %v4681 = vmul.f32 1.0, %v4680
    %v4682 = vld [vmem:[%s108] sm:$0xff]
    %v4683 = vld [vmem:[%s108 + $0x8] sm:$0xff]
    %v4686 = vcombine.high %v4682, %v4682
    %v4687 = vcombine.high %v4683, %v4683
    %v4690 = vmul.f32 %v4675, %v4682
    %v4691 = vmul.f32 %v4677, %v4686
    %v4692 = vmul.f32 %v4679, %v4683
    %v4693 = vmul.f32 %v4681, %v4687
    %v4694 = vadd.f32 %v4173, %v4690
    %v4695 = vadd.f32 %v4174, %v4691
    %v4696 = vadd.f32 %v4175, %v4692
    %v4697 = vadd.f32 %v4176, %v4693
    %s4698 = scalar_lea.vmem [#allocation5], 512
    %v4699 = vld [vmem:[%s4698] sm:$0xff]
    %v4700 = vld [vmem:[%s4698 + $0x8] sm:$0xff]
    %v4701 = vld [vmem:[%s4698 + $0x10] sm:$0xff]
    %v4702 = vld [vmem:[%s4698 + $0x18] sm:$0xff]
    %v4703 = vld [vmem:[%s4698 + $0x20] sm:$0xff]
    %v4704 = vld [vmem:[%s4698 + $0x28] sm:$0xff]
    %v4705 = vld [vmem:[%s4698 + $0x30] sm:$0xff]
    %v4706 = vld [vmem:[%s4698 + $0x38] sm:$0xff]
    %v4707 = vld [vmem:[%s4698 + $0x40] sm:$0xff]
    %v4708 = vld [vmem:[%s4698 + $0x48] sm:$0xff]
    %v4709 = vld [vmem:[%s4698 + $0x50] sm:$0xff]
    %v4710 = vld [vmem:[%s4698 + $0x58] sm:$0xff]
    %v4711 = vld [vmem:[%s4698 + $0x60] sm:$0xff]
    %v4712 = vld [vmem:[%s4698 + $0x68] sm:$0xff]
    %v4713 = vld [vmem:[%s4698 + $0x70] sm:$0xff]
    %v4714 = vld [vmem:[%s4698 + $0x78] sm:$0xff]
    %v4715 = vld [vmem:[%s4698 + $0x80] sm:$0xff]
    %v4716 = vld [vmem:[%s4698 + $0x88] sm:$0xff]
    %v4717 = vld [vmem:[%s4698 + $0x90] sm:$0xff]
    %v4718 = vld [vmem:[%s4698 + $0x98] sm:$0xff]
    %v4719 = vld [vmem:[%s4698 + $0xa0] sm:$0xff]
    %v4720 = vld [vmem:[%s4698 + $0xa8] sm:$0xff]
    %v4721 = vld [vmem:[%s4698 + $0xb0] sm:$0xff]
    %v4722 = vld [vmem:[%s4698 + $0xb8] sm:$0xff]
    %v4723 = vld [vmem:[%s4698 + $0xc0] sm:$0xff]
    %v4724 = vld [vmem:[%s4698 + $0xc8] sm:$0xff]
    %v4725 = vld [vmem:[%s4698 + $0xd0] sm:$0xff]
    %v4726 = vld [vmem:[%s4698 + $0xd8] sm:$0xff]
    %v4727 = vld [vmem:[%s4698 + $0xe0] sm:$0xff]
    %v4728 = vld [vmem:[%s4698 + $0xe8] sm:$0xff]
    %v4729 = vld [vmem:[%s4698 + $0xf0] sm:$0xff]
    %v4730 = vld [vmem:[%s4698 + $0xf8] sm:$0xff]
    %v4763 = vunpack.c.l.b16 %v4699
    %v4764 = vunpack.c.h.b16 %v4699
    %v4765 = vunpack.c.l.b16 %v4700
    %v4766 = vunpack.c.h.b16 %v4700
    %v4767 = vunpack.c.l.b16 %v4701
    %v4768 = vunpack.c.h.b16 %v4701
    %v4769 = vunpack.c.l.b16 %v4702
    %v4770 = vunpack.c.h.b16 %v4702
    %v4771 = vunpack.c.l.b16 %v4703
    %v4772 = vunpack.c.h.b16 %v4703
    %v4773 = vunpack.c.l.b16 %v4704
    %v4774 = vunpack.c.h.b16 %v4704
    %v4775 = vunpack.c.l.b16 %v4705
    %v4776 = vunpack.c.h.b16 %v4705
    %v4777 = vunpack.c.l.b16 %v4706
    %v4778 = vunpack.c.h.b16 %v4706
    %v4779 = vunpack.c.l.b16 %v4707
    %v4780 = vunpack.c.h.b16 %v4707
    %v4781 = vunpack.c.l.b16 %v4708
    %v4782 = vunpack.c.h.b16 %v4708
    %v4783 = vunpack.c.l.b16 %v4709
    %v4784 = vunpack.c.h.b16 %v4709
    %v4785 = vunpack.c.l.b16 %v4710
    %v4786 = vunpack.c.h.b16 %v4710
    %v4787 = vunpack.c.l.b16 %v4711
    %v4788 = vunpack.c.h.b16 %v4711
    %v4789 = vunpack.c.l.b16 %v4712
    %v4790 = vunpack.c.h.b16 %v4712
    %v4791 = vunpack.c.l.b16 %v4713
    %v4792 = vunpack.c.h.b16 %v4713
    %v4793 = vunpack.c.l.b16 %v4714
    %v4794 = vunpack.c.h.b16 %v4714
    %v4795 = vunpack.c.l.b16 %v4715
    %v4796 = vunpack.c.h.b16 %v4715
    %v4797 = vunpack.c.l.b16 %v4716
    %v4798 = vunpack.c.h.b16 %v4716
    %v4799 = vunpack.c.l.b16 %v4717
    %v4800 = vunpack.c.h.b16 %v4717
    %v4801 = vunpack.c.l.b16 %v4718
    %v4802 = vunpack.c.h.b16 %v4718
    %v4803 = vunpack.c.l.b16 %v4719
    %v4804 = vunpack.c.h.b16 %v4719
    %v4805 = vunpack.c.l.b16 %v4720
    %v4806 = vunpack.c.h.b16 %v4720
    %v4807 = vunpack.c.l.b16 %v4721
    %v4808 = vunpack.c.h.b16 %v4721
    %v4809 = vunpack.c.l.b16 %v4722
    %v4810 = vunpack.c.h.b16 %v4722
    %v4811 = vunpack.c.l.b16 %v4723
    %v4812 = vunpack.c.h.b16 %v4723
    %v4813 = vunpack.c.l.b16 %v4724
    %v4814 = vunpack.c.h.b16 %v4724
    %v4815 = vunpack.c.l.b16 %v4725
    %v4816 = vunpack.c.h.b16 %v4725
    %v4817 = vunpack.c.l.b16 %v4726
    %v4818 = vunpack.c.h.b16 %v4726
    %v4819 = vunpack.c.l.b16 %v4727
    %v4820 = vunpack.c.h.b16 %v4727
    %v4821 = vunpack.c.l.b16 %v4728
    %v4822 = vunpack.c.h.b16 %v4728
    %v4823 = vunpack.c.l.b16 %v4729
    %v4824 = vunpack.c.h.b16 %v4729
    %v4825 = vunpack.c.l.b16 %v4730
    %v4826 = vunpack.c.h.b16 %v4730
    %v4827 = vpack.c.b16 %v4767, %v4763
    %v4828 = vpack.c.b16 %v4768, %v4764
    %v4829 = vpack.c.b16 %v4769, %v4765
    %v4830 = vpack.c.b16 %v4770, %v4766
    %v4831 = vpack.c.b16 %v4775, %v4771
    %v4832 = vpack.c.b16 %v4776, %v4772
    %v4833 = vpack.c.b16 %v4777, %v4773
    %v4834 = vpack.c.b16 %v4778, %v4774
    %v4835 = vpack.c.b16 %v4783, %v4779
    %v4836 = vpack.c.b16 %v4784, %v4780
    %v4837 = vpack.c.b16 %v4785, %v4781
    %v4838 = vpack.c.b16 %v4786, %v4782
    %v4839 = vpack.c.b16 %v4791, %v4787
    %v4840 = vpack.c.b16 %v4792, %v4788
    %v4841 = vpack.c.b16 %v4793, %v4789
    %v4842 = vpack.c.b16 %v4794, %v4790
    %v4843 = vpack.c.b16 %v4799, %v4795
    %v4844 = vpack.c.b16 %v4800, %v4796
    %v4845 = vpack.c.b16 %v4801, %v4797
    %v4846 = vpack.c.b16 %v4802, %v4798
    %v4847 = vpack.c.b16 %v4807, %v4803
    %v4848 = vpack.c.b16 %v4808, %v4804
    %v4849 = vpack.c.b16 %v4809, %v4805
    %v4850 = vpack.c.b16 %v4810, %v4806
    %v4851 = vpack.c.b16 %v4815, %v4811
    %v4852 = vpack.c.b16 %v4816, %v4812
    %v4853 = vpack.c.b16 %v4817, %v4813
    %v4854 = vpack.c.b16 %v4818, %v4814
    %v4855 = vpack.c.b16 %v4823, %v4819
    %v4856 = vpack.c.b16 %v4824, %v4820
    %v4857 = vpack.c.b16 %v4825, %v4821
    %v4858 = vpack.c.b16 %v4826, %v4822
    %4891 = vmatprep.subr.bf16.mxu0 %v4856
    %4892 = vmatpush1.bf16.msra.mxu0 %v4855
    %4893 = vmatprep.subr.bf16.mxu0 %v4852
    %4894 = vmatpush1.bf16.msra.mxu0 %v4851
    %4895 = vmatprep.subr.bf16.mxu0 %v4848
    %4896 = vmatpush1.bf16.msra.mxu0 %v4847
    %4897 = vmatprep.subr.bf16.mxu0 %v4844
    %4898 = vmatpush1.bf16.msra.mxu0 %v4843
    %4899 = vmatprep.subr.bf16.mxu0 %v4840
    %4900 = vmatpush1.bf16.msra.mxu0 %v4839
    %4901 = vmatprep.subr.bf16.mxu0 %v4836
    %4902 = vmatpush1.bf16.msra.mxu0 %v4835
    %4903 = vmatprep.subr.bf16.mxu0 %v4832
    %4904 = vmatpush1.bf16.msra.mxu0 %v4831
    %4905 = vmatprep.subr.bf16.mxu0 %v4828
    %4906 = vmatpush1.bf16.msra.mxu0 %v4827
    %4907 = vmatprep.subr.bf16.mxu0 0
    %4908 = vmatpush2.bf16.msra.mxu0 0
    %4909 = vmatprep.subr.bf16.mxu0 0
    %4910 = vmatpush2.bf16.msra.mxu0 0
    %4911 = vmatprep.subr.bf16.mxu0 0
    %4912 = vmatpush2.bf16.msra.mxu0 0
    %4913 = vmatprep.subr.bf16.mxu0 0
    %4914 = vmatpush2.bf16.msra.mxu0 0
    %4915 = vmatprep.subr.bf16.mxu0 0
    %4916 = vmatpush2.bf16.msra.mxu0 0
    %4917 = vmatprep.subr.bf16.mxu0 0
    %4918 = vmatpush2.bf16.msra.mxu0 0
    %4919 = vmatprep.subr.bf16.mxu0 0
    %4920 = vmatpush2.bf16.msra.mxu0 0
    %4921 = vmatprep.subr.bf16.mxu0 0
    %4922 = vmatpush2.bf16.msra.mxu0 0
    %4923 = vmatprep.mubr.bf16.mxu0 0
    %4924 = vmatmul.mubr.bf16.gmra.mxu0 %v3654
    %v4925 = vpop.f32.mrf.mxu0
    %v4926 = vadd.f32 0.0, %v4925
    %v4927 = vpop.f32.mrf.mxu0
    %v4928 = vadd.f32 0.0, %v4927
    %v4929 = vpop.f32.mrf.mxu0
    %v4930 = vpop.f32.mrf.mxu0
    %4931 = vdwg.mxu0
    %4932 = vmatprep.subr.bf16.mxu0 %v4858
    %4933 = vmatpush1.bf16.msra.mxu0 %v4857
    %4934 = vmatprep.subr.bf16.mxu0 %v4854
    %4935 = vmatpush1.bf16.msra.mxu0 %v4853
    %4936 = vmatprep.subr.bf16.mxu0 %v4850
    %4937 = vmatpush1.bf16.msra.mxu0 %v4849
    %4938 = vmatprep.subr.bf16.mxu0 %v4846
    %4939 = vmatpush1.bf16.msra.mxu0 %v4845
    %4940 = vmatprep.subr.bf16.mxu0 %v4842
    %4941 = vmatpush1.bf16.msra.mxu0 %v4841
    %4942 = vmatprep.subr.bf16.mxu0 %v4838
    %4943 = vmatpush1.bf16.msra.mxu0 %v4837
    %4944 = vmatprep.subr.bf16.mxu0 %v4834
    %4945 = vmatpush1.bf16.msra.mxu0 %v4833
    %4946 = vmatprep.subr.bf16.mxu0 %v4830
    %4947 = vmatpush1.bf16.msra.mxu0 %v4829
    %4948 = vmatprep.subr.bf16.mxu0 0
    %4949 = vmatpush2.bf16.msra.mxu0 0
    %4950 = vmatprep.subr.bf16.mxu0 0
    %4951 = vmatpush2.bf16.msra.mxu0 0
    %4952 = vmatprep.subr.bf16.mxu0 0
    %4953 = vmatpush2.bf16.msra.mxu0 0
    %4954 = vmatprep.subr.bf16.mxu0 0
    %4955 = vmatpush2.bf16.msra.mxu0 0
    %4956 = vmatprep.subr.bf16.mxu0 0
    %4957 = vmatpush2.bf16.msra.mxu0 0
    %4958 = vmatprep.subr.bf16.mxu0 0
    %4959 = vmatpush2.bf16.msra.mxu0 0
    %4960 = vmatprep.subr.bf16.mxu0 0
    %4961 = vmatpush2.bf16.msra.mxu0 0
    %4962 = vmatprep.subr.bf16.mxu0 0
    %4963 = vmatpush2.bf16.msra.mxu0 0
    %4964 = vmatprep.mubr.bf16.mxu0 0
    %4965 = vmatmul.mubr.bf16.gmra.mxu0 %v3654
    %v4966 = vpop.f32.mrf.mxu0
    %v4967 = vadd.f32 0.0, %v4966
    %v4968 = vpop.f32.mrf.mxu0
    %v4969 = vadd.f32 0.0, %v4968
    %v4970 = vpop.f32.mrf.mxu0
    %v4971 = vpop.f32.mrf.mxu0
    %4972 = vdwg.mxu0
    %s4973 = scalar_lea.vmem [#allocation12], 32
    %v4974 = vld [vmem:[%s4973] ss:$8 sm:$0xf]
    %s4975 = scalar_lea.vmem [#allocation12], 35
    %v4976 = vld [vmem:[%s4975] ss:$8 sm:$0xf]
    %v4977 = vsel %vm937, %v4926, 0.0
    %v4978 = vrot.slane %v4977, 4
    %v4979 = vadd.f32 %v4977, %v4978
    %v4980 = vrot.slane %v4979, 2
    %v4981 = vadd.f32 %v4979, %v4980
    %v4982 = vrot.slane %v4981, 1
    %v4983 = vadd.f32 %v4981, %v4982
    %v4984 = vsel %vm937, %v4928, 0.0
    %v4985 = vrot.slane %v4984, 4
    %v4986 = vadd.f32 %v4984, %v4985
    %v4987 = vrot.slane %v4986, 2
    %v4988 = vadd.f32 %v4986, %v4987
    %v4989 = vrot.slane %v4988, 1
    %v4990 = vadd.f32 %v4988, %v4989
    %v4991 = vsel %vm937, %v4967, 0.0
    %v4992 = vrot.slane %v4991, 4
    %v4993 = vadd.f32 %v4991, %v4992
    %v4994 = vrot.slane %v4993, 2
    %v4995 = vadd.f32 %v4993, %v4994
    %v4996 = vrot.slane %v4995, 1
    %v4997 = vadd.f32 %v4995, %v4996
    %v4998 = vsel %vm937, %v4969, 0.0
    %v4999 = vrot.slane %v4998, 4
    %v5000 = vadd.f32 %v4998, %v4999
    %v5001 = vrot.slane %v5000, 2
    %v5002 = vadd.f32 %v5000, %v5001
    %v5003 = vrot.slane %v5002, 1
    %v5004 = vadd.f32 %v5002, %v5003
    %v5005 = vmul.f32 %v4983, %v959
    %v5006 = vmul.f32 %v4990, %v959
    %v5007 = vmul.f32 %v4997, %v959
    %v5008 = vmul.f32 %v5004, %v959
    %v5009 = vmul.f32 %v4926, %v4926
    %v5010 = vmul.f32 %v4928, %v4928
    %v5011 = vmul.f32 %v4967, %v4967
    %v5012 = vmul.f32 %v4969, %v4969
    %v5013 = vsel %vm937, %v5009, 0.0
    %v5014 = vrot.slane %v5013, 4
    %v5015 = vadd.f32 %v5013, %v5014
    %v5016 = vrot.slane %v5015, 2
    %v5017 = vadd.f32 %v5015, %v5016
    %v5018 = vrot.slane %v5017, 1
    %v5019 = vadd.f32 %v5017, %v5018
    %v5020 = vsel %vm937, %v5010, 0.0
    %v5021 = vrot.slane %v5020, 4
    %v5022 = vadd.f32 %v5020, %v5021
    %v5023 = vrot.slane %v5022, 2
    %v5024 = vadd.f32 %v5022, %v5023
    %v5025 = vrot.slane %v5024, 1
    %v5026 = vadd.f32 %v5024, %v5025
    %v5027 = vsel %vm937, %v5011, 0.0
    %v5028 = vrot.slane %v5027, 4
    %v5029 = vadd.f32 %v5027, %v5028
    %v5030 = vrot.slane %v5029, 2
    %v5031 = vadd.f32 %v5029, %v5030
    %v5032 = vrot.slane %v5031, 1
    %v5033 = vadd.f32 %v5031, %v5032
    %v5034 = vsel %vm937, %v5012, 0.0
    %v5035 = vrot.slane %v5034, 4
    %v5036 = vadd.f32 %v5034, %v5035
    %v5037 = vrot.slane %v5036, 2
    %v5038 = vadd.f32 %v5036, %v5037
    %v5039 = vrot.slane %v5038, 1
    %v5040 = vadd.f32 %v5038, %v5039
    %v5041 = vmul.f32 %v5019, %v959
    %v5042 = vmul.f32 %v5026, %v959
    %v5043 = vmul.f32 %v5033, %v959
    %v5044 = vmul.f32 %v5040, %v959
    %v5045 = vmul.f32 %v5005, %v5005
    %v5046 = vmul.f32 %v5006, %v5006
    %v5047 = vmul.f32 %v5007, %v5007
    %v5048 = vmul.f32 %v5008, %v5008
    %v5049 = vsub.f32 %v5041, %v5045
    %v5050 = vsub.f32 %v5042, %v5046
    %v5051 = vsub.f32 %v5043, %v5047
    %v5052 = vsub.f32 %v5044, %v5048
    %v5053 = vmax.f32 %v5049, 0.0
    %v5054 = vmax.f32 %v5050, 0.0
    %v5055 = vmax.f32 %v5051, 0.0
    %v5056 = vmax.f32 %v5052, 0.0
    %v5057 = vadd.f32 %v5053, 1e-05
    %v5058 = vadd.f32 %v5054, 1e-05
    %v5059 = vadd.f32 %v5055, 1e-05
    %v5060 = vadd.f32 %v5056, 1e-05
    %v5061 = vrsqrt.pop %v5057
    %v5062 = vrsqrt.pop %v5058
    %v5063 = vrsqrt.pop %v5059
    %v5064 = vrsqrt.pop %v5060
    %v5069 = vcombine.low %v5061, %v5062
    %v5070 = vcombine.low %v5063, %v5064
    %v5072 = vunpack.c.l.s4 1966171168
    %v5073 = vunpack.c.0.s8 %v5072
    %v5074 = vlaneseq
    %v5075 = vshrl.u32 %v5074, 7
    %v5076 = vsub.s32 %v5073, %v5075
    %v5077 = vrot.slane %v5069, %v5076
    %v5079 = vunpack.c.l.s4 1966171168
    %v5080 = vunpack.c.0.s8 %v5079
    %v5081 = vlaneseq
    %v5082 = vshrl.u32 %v5081, 7
    %v5083 = vsub.s32 %v5080, %v5082
    %v5084 = vrot.slane %v5070, %v5083
    %v5085 = vcombine.low %v5077, %v5084
    %v5087 = vunpack.c.l.s4 1966171168
    %v5088 = vunpack.c.0.s8 %v5087
    %v5089 = vlaneseq
    %v5090 = vshrl.u32 %v5089, 7
    %v5091 = vsub.s32 %v5088, %v5090
    %v5092 = vrot.slane %v5085, %v5091
    %v5094 = vmul.f32 %v4974, %v5092
    %v5096 = vlaneseq
    %v5097 = vshrl.u32 %v5096, 7
    %v5098 = vsub.s32 0, %v5097
    %v5099 = vrot.slane %v5094, %v5098
    %v5100 = vlaneseq
    %v5101 = vshrl.u32 %v5100, 7
    %v5102 = vsub.s32 1, %v5101
    %v5103 = vrot.slane %v5094, %v5102
    %v5104 = vlaneseq
    %v5105 = vshrl.u32 %v5104, 7
    %v5106 = vsub.s32 2, %v5105
    %v5107 = vrot.slane %v5094, %v5106
    %v5108 = vlaneseq
    %v5109 = vshrl.u32 %v5108, 7
    %v5110 = vsub.s32 3, %v5109
    %v5111 = vrot.slane %v5094, %v5110
    %v5116 = vmul.f32 %v5005, %v5099
    %v5117 = vmul.f32 %v5006, %v5103
    %v5118 = vmul.f32 %v5007, %v5107
    %v5119 = vmul.f32 %v5008, %v5111
    %v5124 = vcombine.low %v5116, %v5117
    %v5125 = vcombine.low %v5118, %v5119
    %v5127 = vunpack.c.l.s4 1966171168
    %v5128 = vunpack.c.0.s8 %v5127
    %v5129 = vlaneseq
    %v5130 = vshrl.u32 %v5129, 7
    %v5131 = vsub.s32 %v5128, %v5130
    %v5132 = vrot.slane %v5124, %v5131
    %v5134 = vunpack.c.l.s4 1966171168
    %v5135 = vunpack.c.0.s8 %v5134
    %v5136 = vlaneseq
    %v5137 = vshrl.u32 %v5136, 7
    %v5138 = vsub.s32 %v5135, %v5137
    %v5139 = vrot.slane %v5125, %v5138
    %v5140 = vcombine.low %v5132, %v5139
    %v5142 = vunpack.c.l.s4 1966171168
    %v5143 = vunpack.c.0.s8 %v5142
    %v5144 = vlaneseq
    %v5145 = vshrl.u32 %v5144, 7
    %v5146 = vsub.s32 %v5143, %v5145
    %v5147 = vrot.slane %v5140, %v5146
    %v5149 = vsub.f32 %v4976, %v5147
    %v5150 = vmul.f32 %v4926, %v5099
    %v5151 = vmul.f32 %v4928, %v5103
    %v5152 = vmul.f32 %v4967, %v5107
    %v5153 = vmul.f32 %v4969, %v5111
    %v5155 = vlaneseq
    %v5156 = vshrl.u32 %v5155, 7
    %v5157 = vsub.s32 0, %v5156
    %v5158 = vrot.slane %v5149, %v5157
    %v5159 = vlaneseq
    %v5160 = vshrl.u32 %v5159, 7
    %v5161 = vsub.s32 1, %v5160
    %v5162 = vrot.slane %v5149, %v5161
    %v5163 = vlaneseq
    %v5164 = vshrl.u32 %v5163, 7
    %v5165 = vsub.s32 2, %v5164
    %v5166 = vrot.slane %v5149, %v5165
    %v5167 = vlaneseq
    %v5168 = vshrl.u32 %v5167, 7
    %v5169 = vsub.s32 3, %v5168
    %v5170 = vrot.slane %v5149, %v5169
    %v5175 = vadd.f32 %v5150, %v5158
    %v5176 = vadd.f32 %v5151, %v5162
    %v5177 = vadd.f32 %v5152, %v5166
    %v5178 = vadd.f32 %v5153, %v5170
    %v5179 = vxor.u32 %v5175, 2147483648
    %v5180 = vxor.u32 %v5176, 2147483648
    %v5181 = vxor.u32 %v5177, 2147483648
    %v5182 = vxor.u32 %v5178, 2147483648
    %v5183 = vmul.f32 %v5179, 1.442695
    %v5184 = vpow.pop %v5183
    %v5185 = vmul.f32 %v5180, 1.442695
    %v5186 = vpow.pop %v5185
    %v5187 = vmul.f32 %v5181, 1.442695
    %v5188 = vpow.pop %v5187
    %v5189 = vmul.f32 %v5182, 1.442695
    %v5190 = vpow.pop %v5189
    %v5191 = vadd.f32 %v5184, 1.0
    %v5192 = vadd.f32 %v5186, 1.0
    %v5193 = vadd.f32 %v5188, 1.0
    %v5194 = vadd.f32 %v5190, 1.0
    %v5195 = vrcp.pop %v5191
    %v5196 = vmul.f32 1.0, %v5195
    %v5197 = vrcp.pop %v5192
    %v5198 = vmul.f32 1.0, %v5197
    %v5199 = vrcp.pop %v5193
    %v5200 = vmul.f32 1.0, %v5199
    %v5201 = vrcp.pop %v5194
    %v5202 = vmul.f32 1.0, %v5201
    %v5203 = vld [vmem:[%s113] sm:$0xff]
    %v5204 = vld [vmem:[%s113 + $0x8] sm:$0xff]
    %v5207 = vcombine.high %v5203, %v5203
    %v5208 = vcombine.high %v5204, %v5204
    %v5211 = vmul.f32 %v5196, %v5203
    %v5212 = vmul.f32 %v5198, %v5207
    %v5213 = vmul.f32 %v5200, %v5204
    %v5214 = vmul.f32 %v5202, %v5208
    %v5215 = vadd.f32 %v4694, %v5211
    %v5216 = vadd.f32 %v4695, %v5212
    %v5217 = vadd.f32 %v4696, %v5213
    %v5218 = vadd.f32 %v4697, %v5214
    %v5223 = vcombine.low %v5215, %v5216
    %v5224 = vcombine.low %v5217, %v5218
    %5227 = vst [vmem:[#allocation13] sm:$0xff] %v5223
    %5228 = vst [vmem:[#allocation13 + $0x8] sm:$0xff] %v5224
    // Predicated region
    $region42: #{tpu_custom_call.1} parent=1 // pred_check
      _
    $region43: #{tpu_custom_call.1} parent=1 // pred_check_branch
      %5230 = sbr.rel (0) target = $region45
    $region44: #{tpu_custom_call.1} parent=1 // pred_region
      %s5232 = ssub.s32 256, 256
      %5233 = vsyncadd [#allocation9], %s5232
      %s5235 = sshll.u32 [#allocation13], 4
      %s5236 = int_to_ptr.vmem [resolvable:$true] %s5235
      %5238 = dma.vmem_to_hbm [thread:$0]  %s5236, 256, %s7, [#allocation9]
    $region45: #{tpu_custom_call.1} parent=1 // pred_fallthru
      _
    // Predicated region
    $region46: #{tpu_custom_call.1} parent=1 // pred_check
      _
    $region47: #{tpu_custom_call.1} parent=1 // pred_check_branch
      %5240 = sbr.rel (0) target = $region49
    $region48: #{tpu_custom_call.1} parent=1 // pred_region
      %5241 = dma.done [#allocation9], 256
    $region49: #{tpu_custom_call.1} parent=1 // pred_fallthru
      _
    %5242 = vsyncpa [#allocation8], 1
    %5243 = vsyncpa [#allocation11], 1
    %5244 = vsyncpa [#allocation9], 1
  %5245 = vsyncmov [#allocation6]
  %s5246 = vpop.sfrf %5245
  %p5247 = scmp.eq.s32.totalorder %s5246, 0
  %p5248 = pneg %p5247
  %5250 = shalt.err (%p5248)
  %s5251 = scalar_lea.sflag [#allocation6], 1
  %5252 = vsyncmov %s5251
  %s5253 = vpop.sfrf %5252
  %p5254 = scmp.eq.s32.totalorder %s5253, 0
  %p5255 = pneg %p5254
  %5257 = shalt.err (%p5255)
  %s5258 = scalar_lea.sflag [#allocation6], 2
  %5259 = vsyncmov %s5258
  %s5260 = vpop.sfrf %5259
  %p5261 = scmp.eq.s32.totalorder %s5260, 0
  %p5262 = pneg %p5261
  %5264 = shalt.err (%p5262)
  %s5265 = scalar_lea.sflag [#allocation6], 3
  %5266 = vsyncmov %s5265
  %s5267 = vpop.sfrf %5266
  %p5268 = scmp.eq.s32.totalorder %s5267, 0
  %p5269 = pneg %p5268
  %5271 = shalt.err (%p5269)

</llo_original>
